<compile_context>
chip_gen: v6e
topology: v6e:2x2x1
jax: 0.10.0
libtpu: 0.0.40
codegen_flags: <defaults>
</compile_context>

<pallas_src>
import functools

import jax
import jax.numpy as jnp
from jax.experimental import pallas as pl
from jax.experimental.pallas import tpu as pltpu


_MAX_FUSED_VOCAB = 1024          # above this the one-hot gather / resident table stop paying off
_VMEM_BUDGET = 36 * 1024 * 1024  # per-step working-set target (fits v7x's 64 MiB VMEM)
_VMEM_LIMIT = 48 * 1024 * 1024   # raised from 32 MiB (v5e/v6e have 128 MiB; v7x cap ~48 MiB)
_MAX_TILE_B = 512                # top of the review-suggested 128-512 sweep range


def _round_up(x, m):
    return ((x + m - 1) // m) * m


def _pick_tile_b(batch, per_row_bytes):
    """Largest multiple-of-16 batch tile under the VMEM budget (cap _MAX_TILE_B),
    shrunk (floor 16) to keep >= 2 grid steps when the batch allows, so the
    'parallel' grid axis can feed both TensorCores on v7x."""
    cap = max(16, _VMEM_BUDGET // max(per_row_bytes, 1))
    tile = min(_MAX_TILE_B, cap, _round_up(batch, 16))
    tile = max(16, (tile // 16) * 16)
    while tile > 16 and pl.cdiv(_round_up(batch, 16), tile) < 2:
        tile = max(16, ((tile // 2) // 16) * 16)
    return tile


def _fc_head(pooled_parts, fcw_ref, fcb_ref):
    # Single K = n*F FC matmul: one lane concat + one bf16 cast + one MXU push/drain
    # (replaces the previous per-branch K=F matmuls).
    cat = jnp.concatenate(pooled_parts, axis=-1)                        # [tb, n*F]
    out = jnp.dot(cat.astype(jnp.bfloat16), fcw_ref[...],
                  preferred_element_type=jnp.float32)                   # [tb, Opad]
    return out + fcb_ref[...]


def make_fused_kernel(filter_sizes, n_filters):
    """Kernel with the embedding gather fused in (token ids -> logits)."""
    filter_sizes = tuple(filter_sizes)
    F = n_filters

    def kernel(ids_ref, tproj_ref, ball_ref, fcw_ref, fcb_ref, out_ref):
        tb, S = ids_ref.shape
        vocab_pad, c_pad = tproj_ref.shape

        # --- Fused embedding gather.  tproj = emb_table @ W_all was pre-projected in
        # the wrapper, so selecting row ids[b, s] yields every conv-tap product for
        # that token at once.  Selection is done as one-hot(token) @ tproj on the MXU
        # (K = vocab_pad), built per time step so ids never need a lane->sublane
        # relayout: column s is sliced (width 1) and lane-broadcast against the vocab
        # iota.  Rows of `onehot` / `y` are time-major: row = s*tb + b.
        ids = ids_ref[...]                                              # [tb, S] int32
        iota_v = jax.lax.broadcasted_iota(jnp.int32, (tb, vocab_pad), 1)
        onehot = jnp.concatenate(
            [(ids[:, s:s + 1] == iota_v).astype(jnp.bfloat16) for s in range(S)],
            axis=0)                                                     # [S*tb, Vpad]
        y = jnp.dot(onehot, tproj_ref[...],
                    preferred_element_type=jnp.float32)                 # [S*tb, Cpad]

        # --- Conv1d over time = shifted adds of tap products (VPU).  Time-major rows
        # make each tap a single aligned sublane slice; max-over-time reduces over the
        # leading axis after a tile-aligned split.
        pooled_parts = []
        col = 0
        for i, fs in enumerate(filter_sizes):
            L = S - fs + 1
            conv = y[0:L * tb, col:col + F]
            for k in range(1, fs):
                c0 = col + k * F
                conv = conv + y[k * tb:(k + L) * tb, c0:c0 + F]
            col += fs * F
            pooled = jnp.max(conv.reshape(L, tb, F), axis=0)            # [tb, F]
            # +bias / ReLU commute with the max (bias constant over time, ReLU monotone).
            pooled_parts.append(
                jnp.maximum(pooled + ball_ref[:, i * F:(i + 1) * F], 0.0))

        out_ref[...] = _fc_head(pooled_parts, fcw_ref, fcb_ref)

    return kernel


def make_gathered_kernel(filter_sizes, n_filters):
    """Fallback kernel: embeddings gathered by XLA, streamed as [tb, S, E] bf16."""
    filter_sizes = tuple(filter_sizes)
    F = n_filters

    def kernel(emb_ref, wall_ref, ball_ref, fcw_ref, fcb_ref, out_ref):
        tb, S, E = emb_ref.shape
        c_pad = wall_ref.shape[1]

        # One lane-dense MXU pass: every tap of every conv branch at once.
        x2d = emb_ref[...].reshape(tb * S, E)                           # bf16 [tb*S, E]
        y = jnp.dot(x2d, wall_ref[...],
                    preferred_element_type=jnp.float32)                 # f32 [tb*S, Cpad]
        y = y.reshape(tb, S, c_pad)

        pooled_parts = []
        col = 0
        for i, fs in enumerate(filter_sizes):
            L = S - fs + 1
            conv = y[:, 0:L, col:col + F]
            for k in range(1, fs):
                c0 = col + k * F
                conv = conv + y[:, k:k + L, c0:c0 + F]
            col += fs * F
            pooled = jnp.max(conv, axis=1)                              # [tb, F]
            pooled_parts.append(
                jnp.maximum(pooled + ball_ref[:, i * F:(i + 1) * F], 0.0))

        out_ref[...] = _fc_head(pooled_parts, fcw_ref, fcb_ref)

    return kernel


@functools.partial(jax.jit, static_argnames=("filter_sizes", "fuse_gather"))
def _cnn1d_forward_impl(text, params, *, filter_sizes, fuse_gather):
    filter_sizes = tuple(filter_sizes)
    emb_table = params["embedding"]                                     # [V, E] f32
    V, E = emb_table.shape
    B, S = text.shape
    n = len(filter_sizes)
    F = params["conv0_b"].shape[-1]
    output_dim = params["fc_b"].shape[-1]

    if S < max(filter_sizes):
        raise ValueError(f"seq_len={S} must be >= max filter size {max(filter_sizes)}")

    # ---- pack weights: all taps of all branches into one lane-dense matrix.
    # Cpad stays at round_up(sum_i fs_i*F, 128): K already underfills the MXU, so N
    # passes set the MXU time -- do NOT pad each tap group to 128 lanes.
    taps = []
    for i, fs in enumerate(filter_sizes):
        w = params[f"conv{i}_w"]                                        # [fs, E, F]
        for k in range(fs):
            taps.append(w[k])
    w_all = jnp.concatenate(taps, axis=1)                               # [E, C]
    c_pad = _round_up(w_all.shape[1], 128)
    w_all = jnp.pad(w_all, ((0, 0), (0, c_pad - w_all.shape[1])))       # f32 [E, Cpad]

    b_all = jnp.concatenate([params[f"conv{i}_b"] for i in range(n)], axis=1)  # [1, n*F]

    o_pad = _round_up(output_dim, 128)                                  # lane-dense (unmasked) store
    fc_w = jnp.pad(params["fc_w"],
                   ((0, 0), (0, o_pad - output_dim))).astype(jnp.bfloat16)     # [n*F, Opad]
    fc_b = jnp.pad(params["fc_b"],
                   ((0, 0), (0, o_pad - output_dim))).astype(jnp.float32)      # [1, Opad]

    compiler_params = pltpu.CompilerParams(
        dimension_semantics=("parallel",),
        vmem_limit_bytes=_VMEM_LIMIT,
    )

    if fuse_gather:
        vocab_pad = _round_up(V, 128)
        # Pre-project the embedding table through every conv tap once (tiny one-off
        # matmul in f32); the kernel then only streams int32 token ids from HBM.
        table_proj = jnp.dot(emb_table, w_all,
                             precision=jax.lax.Precision.HIGHEST,
                             preferred_element_type=jnp.float32)        # [V, Cpad]
        table_proj = jnp.pad(table_proj,
                             ((0, vocab_pad - V), (0, 0))).astype(jnp.bfloat16)

        per_row = (2 * 128 * 4            # ids tile (lane-padded to 128), double-buffered
                   + S * vocab_pad * 2    # bf16 one-hot
                   + S * c_pad * 4        # f32 tap products y
                   + 6 * S * F * 4        # conv / pooling temporaries + slack
                   + 2 * o_pad * 4)       # output tile, double-buffered
        tile_b = _pick_tile_b(B, per_row)
        b_pad = _round_up(B, tile_b)
        ids = text.astype(jnp.int32)
        if b_pad != B:
            ids = jnp.pad(ids, ((0, b_pad - B), (0, 0)))                # pad rows sliced off below

        out = pl.pallas_call(
            make_fused_kernel(filter_sizes, F),
            out_shape=jax.ShapeDtypeStruct((b_pad, o_pad), jnp.float32),
            grid=(b_pad // tile_b,),
            in_specs=[
                pl.BlockSpec((tile_b, S), lambda i: (i, 0)),            # token ids (batch-tiled)
                pl.BlockSpec(table_proj.shape, lambda i: (0, 0)),       # resident weights
                pl.BlockSpec(b_all.shape, lambda i: (0, 0)),
                pl.BlockSpec(fc_w.shape, lambda i: (0, 0)),
                pl.BlockSpec(fc_b.shape, lambda i: (0, 0)),
            ],
            out_specs=pl.BlockSpec((tile_b, o_pad), lambda i: (i, 0)),
            compiler_params=compiler_params,
        )(ids, table_proj, b_all, fc_w, fc_b)
    else:
        # Large-vocab fallback: gather in XLA, stream [B, S, E] bf16 through the kernel.
        # TODO(synk): for very large vocabs, fuse the gather via per-row DMA from an
        # HBM-resident table (memory_space=pl.ANY + scalar-prefetched ids) instead of
        # materializing [B, S, E] in HBM.
        embedded = jnp.take(emb_table, text, axis=0).astype(jnp.bfloat16)      # [B, S, E]
        w_all_bf = w_all.astype(jnp.bfloat16)

        per_row = (2 * S * 128 * 2        # bf16 emb tile (E lane-padded), double-buffered
                   + S * c_pad * 4
                   + 6 * S * F * 4
                   + 2 * o_pad * 4)
        tile_b = _pick_tile_b(B, per_row)
        b_pad = _round_up(B, tile_b)
        if b_pad != B:
            embedded = jnp.pad(embedded, ((0, b_pad - B), (0, 0), (0, 0)))

        out = pl.pallas_call(
            make_gathered_kernel(filter_sizes, F),
            out_shape=jax.ShapeDtypeStruct((b_pad, o_pad), jnp.float32),
            grid=(b_pad // tile_b,),
            in_specs=[
                pl.BlockSpec((tile_b, S, E), lambda i: (i, 0, 0)),
                pl.BlockSpec(w_all_bf.shape, lambda i: (0, 0)),
                pl.BlockSpec(b_all.shape, lambda i: (0, 0)),
                pl.BlockSpec(fc_w.shape, lambda i: (0, 0)),
                pl.BlockSpec(fc_b.shape, lambda i: (0, 0)),
            ],
            out_specs=pl.BlockSpec((tile_b, o_pad), lambda i: (i, 0)),
            compiler_params=compiler_params,
        )(embedded, w_all_bf, b_all, fc_w, fc_b)

    return out[:B, :output_dim]


def cnn1d_forward(text, params, *, filter_sizes):
    """text: [B, S] int32 token ids. Returns [B, output_dim] float32 logits."""
    vocab_pad = _round_up(params["embedding"].shape[0], 128)
    if vocab_pad <= _MAX_FUSED_VOCAB:
        try:
            out = _cnn1d_forward_impl(text, params,
                                      filter_sizes=tuple(filter_sizes),
                                      fuse_gather=True)
            return jax.block_until_ready(out)
        except Exception:
            # Robustness net: if the fused-gather path fails to lower on this
            # toolchain, fall back to the previously validated XLA-gather path.
            pass
    return _cnn1d_forward_impl(text, params, filter_sizes=tuple(filter_sizes),
                               fuse_gather=False)


def init_params(key, vocab_size, embedding_dim, n_filters, filter_sizes,
                output_dim, pad_idx):
    keys = jax.random.split(key, 2 + 2 * len(filter_sizes) + 2)
    params = {}

    # Embedding ~ N(0,1), padding row zeroed (matches nn.Embedding(padding_idx=...)).
    emb = jax.random.normal(keys[0], (vocab_size, embedding_dim), jnp.float32)
    emb = emb.at[pad_idx].set(0.0)
    params["embedding"] = emb

    # Conv1d weights: PyTorch shape [F, E, fs]; re-layout to [fs, E, F] for the kernel.
    for i, fs in enumerate(filter_sizes):
        bound = (1.0 / (embedding_dim * fs)) ** 0.5
        w = jax.random.uniform(keys[1 + 2 * i], (n_filters, embedding_dim, fs),
                               jnp.float32, -bound, bound)
        b = jax.random.uniform(keys[2 + 2 * i], (n_filters,),
                               jnp.float32, -bound, bound)
        params[f"conv{i}_w"] = jnp.transpose(w, (2, 1, 0))              # [fs, E, F]
        params[f"conv{i}_b"] = b.reshape(1, n_filters)                  # [1, F]

    # Linear: PyTorch weight is [O, n*F]; store transposed [n*F, O].
    fan_in = len(filter_sizes) * n_filters
    bound = (1.0 / fan_in) ** 0.5
    fc_w = jax.random.uniform(keys[-2], (output_dim, fan_in), jnp.float32, -bound, bound)
    fc_b = jax.random.uniform(keys[-1], (output_dim,), jnp.float32, -bound, bound)
    params["fc_w"] = fc_w.T                                             # [n*F, O]
    params["fc_b"] = fc_b.reshape(1, output_dim)                        # [1, O]
    return params


def reference_forward(text, params, *, filter_sizes):
    """Pure-JAX f32 reference (same math as the PyTorch module, no Pallas)."""
    emb = jnp.take(params["embedding"], text, axis=0)                   # [B, S, E] f32
    B, S, _ = emb.shape
    pooled = []
    for i, fs in enumerate(filter_sizes):
        w = params[f"conv{i}_w"]                                        # [fs, E, F]
        b = params[f"conv{i}_b"]                                        # [1, F]
        L = S - fs + 1
        acc = jnp.zeros((B, L, w.shape[2]), jnp.float32)
        for k in range(fs):
            acc = acc + jnp.einsum("ble,ef->blf", emb[:, k:k + L, :], w[k])
        acc = jax.nn.relu(acc + b)
        pooled.append(jnp.max(acc, axis=1))
    cat = jnp.concatenate(pooled, axis=-1)
    return cat @ params["fc_w"] + params["fc_b"]


if __name__ == "__main__":
    vocab_size = 50
    embedding_dim = 32
    n_filters = 16
    filter_sizes = (3, 4, 5)
    output_dim = 4
    dropout = 0.5          # inference: identity
    pad_idx = 0
    batch = 48             # 3 grid steps of tile_b=16 -> exercises pipelining / parallel grid
    seq_len = 16

    key = jax.random.PRNGKey(0)
    pkey, tkey = jax.random.split(key)
    params = init_params(pkey, vocab_size, embedding_dim, n_filters,
                         filter_sizes, output_dim, pad_idx)
    text = jax.random.randint(tkey, (batch, seq_len), 0, vocab_size, jnp.int32)

    out = cnn1d_forward(text, params, filter_sizes=filter_sizes)
    out = jax.block_until_ready(out)

    ref = reference_forward(text, params, filter_sizes=filter_sizes)
    assert out.shape == (batch, output_dim)
    # bf16 matmul operands (f32 accumulation) vs the pure-f32 reference.
    assert jnp.allclose(out, ref, atol=5e-2, rtol=5e-2), \
        float(jnp.max(jnp.abs(out - ref)))

    print("KERNEL_OK")
</pallas_src>

<mosaic_0001>
module attributes {stable_mosaic.version = 11 : i64} {
  func.func @kernel(%arg0: i32, %arg1: memref<16x16xi32, #tpu.memory_space<vmem>>, %arg2: memref<128x256xbf16, #tpu.memory_space<vmem>>, %arg3: memref<1x48xf32, #tpu.memory_space<vmem>>, %arg4: memref<48x128xbf16, #tpu.memory_space<vmem>>, %arg5: memref<1x128xf32, #tpu.memory_space<vmem>>, %arg6: memref<16x128xf32, #tpu.memory_space<vmem>>) attributes {dimension_semantics = [#tpu.dimension_semantics<parallel>], iteration_bounds = array<i64: 3>, scalar_prefetch = 0 : i64, scratch_operands = 0 : i64, tpu.core_type = #tpu.core_type<tc>, window_params = [{transform_indices = @transform_0, window_bounds = array<i64: 16, 16>}, {pipeline_mode = #tpu.pipeline_mode<synchronous>, transform_indices = @transform_1, window_bounds = array<i64: 128, 256>}, {pipeline_mode = #tpu.pipeline_mode<synchronous>, transform_indices = @transform_2, window_bounds = array<i64: 1, 48>}, {pipeline_mode = #tpu.pipeline_mode<synchronous>, transform_indices = @transform_3, window_bounds = array<i64: 48, 128>}, {pipeline_mode = #tpu.pipeline_mode<synchronous>, transform_indices = @transform_4, window_bounds = array<i64: 1, 128>}, {transform_indices = @transform_5, window_bounds = array<i64: 16, 128>}]} {
    %c0 = arith.constant 0 : index
    %c0_0 = arith.constant 0 : index
    %0 = vector.load %arg1[%c0, %c0_0] : memref<16x16xi32, #tpu.memory_space<vmem>>, vector<16x16xi32>
    %1 = tpu.iota {dimensions = array<i32: 1>} : vector<16x128xi32>
    %2 = vector.extract_strided_slice %0 {offsets = [0, 0], sizes = [16, 1], strides = [1, 1]} : vector<16x16xi32> to vector<16x1xi32>
    %3 = vector.broadcast %2 : vector<16x1xi32> to vector<16x128xi32>
    %4 = arith.cmpi eq, %3, %1 : vector<16x128xi32>
    %5 = arith.extui %4 : vector<16x128xi1> to vector<16x128xi32>
    %6 = arith.sitofp %5 : vector<16x128xi32> to vector<16x128xf32>
    %7 = arith.truncf %6 : vector<16x128xf32> to vector<16x128xbf16>
    %8 = vector.extract_strided_slice %0 {offsets = [0, 1], sizes = [16, 1], strides = [1, 1]} : vector<16x16xi32> to vector<16x1xi32>
    %9 = vector.broadcast %8 : vector<16x1xi32> to vector<16x128xi32>
    %10 = arith.cmpi eq, %9, %1 : vector<16x128xi32>
    %11 = arith.extui %10 : vector<16x128xi1> to vector<16x128xi32>
    %12 = arith.sitofp %11 : vector<16x128xi32> to vector<16x128xf32>
    %13 = arith.truncf %12 : vector<16x128xf32> to vector<16x128xbf16>
    %14 = vector.extract_strided_slice %0 {offsets = [0, 2], sizes = [16, 1], strides = [1, 1]} : vector<16x16xi32> to vector<16x1xi32>
    %15 = vector.broadcast %14 : vector<16x1xi32> to vector<16x128xi32>
    %16 = arith.cmpi eq, %15, %1 : vector<16x128xi32>
    %17 = arith.extui %16 : vector<16x128xi1> to vector<16x128xi32>
    %18 = arith.sitofp %17 : vector<16x128xi32> to vector<16x128xf32>
    %19 = arith.truncf %18 : vector<16x128xf32> to vector<16x128xbf16>
    %20 = vector.extract_strided_slice %0 {offsets = [0, 3], sizes = [16, 1], strides = [1, 1]} : vector<16x16xi32> to vector<16x1xi32>
    %21 = vector.broadcast %20 : vector<16x1xi32> to vector<16x128xi32>
    %22 = arith.cmpi eq, %21, %1 : vector<16x128xi32>
    %23 = arith.extui %22 : vector<16x128xi1> to vector<16x128xi32>
    %24 = arith.sitofp %23 : vector<16x128xi32> to vector<16x128xf32>
    %25 = arith.truncf %24 : vector<16x128xf32> to vector<16x128xbf16>
    %26 = vector.extract_strided_slice %0 {offsets = [0, 4], sizes = [16, 1], strides = [1, 1]} : vector<16x16xi32> to vector<16x1xi32>
    %27 = vector.broadcast %26 : vector<16x1xi32> to vector<16x128xi32>
    %28 = arith.cmpi eq, %27, %1 : vector<16x128xi32>
    %29 = arith.extui %28 : vector<16x128xi1> to vector<16x128xi32>
    %30 = arith.sitofp %29 : vector<16x128xi32> to vector<16x128xf32>
    %31 = arith.truncf %30 : vector<16x128xf32> to vector<16x128xbf16>
    %32 = vector.extract_strided_slice %0 {offsets = [0, 5], sizes = [16, 1], strides = [1, 1]} : vector<16x16xi32> to vector<16x1xi32>
    %33 = vector.broadcast %32 : vector<16x1xi32> to vector<16x128xi32>
    %34 = arith.cmpi eq, %33, %1 : vector<16x128xi32>
    %35 = arith.extui %34 : vector<16x128xi1> to vector<16x128xi32>
    %36 = arith.sitofp %35 : vector<16x128xi32> to vector<16x128xf32>
    %37 = arith.truncf %36 : vector<16x128xf32> to vector<16x128xbf16>
    %38 = vector.extract_strided_slice %0 {offsets = [0, 6], sizes = [16, 1], strides = [1, 1]} : vector<16x16xi32> to vector<16x1xi32>
    %39 = vector.broadcast %38 : vector<16x1xi32> to vector<16x128xi32>
    %40 = arith.cmpi eq, %39, %1 : vector<16x128xi32>
    %41 = arith.extui %40 : vector<16x128xi1> to vector<16x128xi32>
    %42 = arith.sitofp %41 : vector<16x128xi32> to vector<16x128xf32>
    %43 = arith.truncf %42 : vector<16x128xf32> to vector<16x128xbf16>
    %44 = vector.extract_strided_slice %0 {offsets = [0, 7], sizes = [16, 1], strides = [1, 1]} : vector<16x16xi32> to vector<16x1xi32>
    %45 = vector.broadcast %44 : vector<16x1xi32> to vector<16x128xi32>
    %46 = arith.cmpi eq, %45, %1 : vector<16x128xi32>
    %47 = arith.extui %46 : vector<16x128xi1> to vector<16x128xi32>
    %48 = arith.sitofp %47 : vector<16x128xi32> to vector<16x128xf32>
    %49 = arith.truncf %48 : vector<16x128xf32> to vector<16x128xbf16>
    %50 = vector.extract_strided_slice %0 {offsets = [0, 8], sizes = [16, 1], strides = [1, 1]} : vector<16x16xi32> to vector<16x1xi32>
    %51 = vector.broadcast %50 : vector<16x1xi32> to vector<16x128xi32>
    %52 = arith.cmpi eq, %51, %1 : vector<16x128xi32>
    %53 = arith.extui %52 : vector<16x128xi1> to vector<16x128xi32>
    %54 = arith.sitofp %53 : vector<16x128xi32> to vector<16x128xf32>
    %55 = arith.truncf %54 : vector<16x128xf32> to vector<16x128xbf16>
    %56 = vector.extract_strided_slice %0 {offsets = [0, 9], sizes = [16, 1], strides = [1, 1]} : vector<16x16xi32> to vector<16x1xi32>
    %57 = vector.broadcast %56 : vector<16x1xi32> to vector<16x128xi32>
    %58 = arith.cmpi eq, %57, %1 : vector<16x128xi32>
    %59 = arith.extui %58 : vector<16x128xi1> to vector<16x128xi32>
    %60 = arith.sitofp %59 : vector<16x128xi32> to vector<16x128xf32>
    %61 = arith.truncf %60 : vector<16x128xf32> to vector<16x128xbf16>
    %62 = vector.extract_strided_slice %0 {offsets = [0, 10], sizes = [16, 1], strides = [1, 1]} : vector<16x16xi32> to vector<16x1xi32>
    %63 = vector.broadcast %62 : vector<16x1xi32> to vector<16x128xi32>
    %64 = arith.cmpi eq, %63, %1 : vector<16x128xi32>
    %65 = arith.extui %64 : vector<16x128xi1> to vector<16x128xi32>
    %66 = arith.sitofp %65 : vector<16x128xi32> to vector<16x128xf32>
    %67 = arith.truncf %66 : vector<16x128xf32> to vector<16x128xbf16>
    %68 = vector.extract_strided_slice %0 {offsets = [0, 11], sizes = [16, 1], strides = [1, 1]} : vector<16x16xi32> to vector<16x1xi32>
    %69 = vector.broadcast %68 : vector<16x1xi32> to vector<16x128xi32>
    %70 = arith.cmpi eq, %69, %1 : vector<16x128xi32>
    %71 = arith.extui %70 : vector<16x128xi1> to vector<16x128xi32>
    %72 = arith.sitofp %71 : vector<16x128xi32> to vector<16x128xf32>
    %73 = arith.truncf %72 : vector<16x128xf32> to vector<16x128xbf16>
    %74 = vector.extract_strided_slice %0 {offsets = [0, 12], sizes = [16, 1], strides = [1, 1]} : vector<16x16xi32> to vector<16x1xi32>
    %75 = vector.broadcast %74 : vector<16x1xi32> to vector<16x128xi32>
    %76 = arith.cmpi eq, %75, %1 : vector<16x128xi32>
    %77 = arith.extui %76 : vector<16x128xi1> to vector<16x128xi32>
    %78 = arith.sitofp %77 : vector<16x128xi32> to vector<16x128xf32>
    %79 = arith.truncf %78 : vector<16x128xf32> to vector<16x128xbf16>
    %80 = vector.extract_strided_slice %0 {offsets = [0, 13], sizes = [16, 1], strides = [1, 1]} : vector<16x16xi32> to vector<16x1xi32>
    %81 = vector.broadcast %80 : vector<16x1xi32> to vector<16x128xi32>
    %82 = arith.cmpi eq, %81, %1 : vector<16x128xi32>
    %83 = arith.extui %82 : vector<16x128xi1> to vector<16x128xi32>
    %84 = arith.sitofp %83 : vector<16x128xi32> to vector<16x128xf32>
    %85 = arith.truncf %84 : vector<16x128xf32> to vector<16x128xbf16>
    %86 = vector.extract_strided_slice %0 {offsets = [0, 14], sizes = [16, 1], strides = [1, 1]} : vector<16x16xi32> to vector<16x1xi32>
    %87 = vector.broadcast %86 : vector<16x1xi32> to vector<16x128xi32>
    %88 = arith.cmpi eq, %87, %1 : vector<16x128xi32>
    %89 = arith.extui %88 : vector<16x128xi1> to vector<16x128xi32>
    %90 = arith.sitofp %89 : vector<16x128xi32> to vector<16x128xf32>
    %91 = arith.truncf %90 : vector<16x128xf32> to vector<16x128xbf16>
    %92 = vector.extract_strided_slice %0 {offsets = [0, 15], sizes = [16, 1], strides = [1, 1]} : vector<16x16xi32> to vector<16x1xi32>
    %93 = vector.broadcast %92 : vector<16x1xi32> to vector<16x128xi32>
    %94 = arith.cmpi eq, %93, %1 : vector<16x128xi32>
    %95 = arith.extui %94 : vector<16x128xi1> to vector<16x128xi32>
    %96 = arith.sitofp %95 : vector<16x128xi32> to vector<16x128xf32>
    %97 = arith.truncf %96 : vector<16x128xf32> to vector<16x128xbf16>
    %98 = tpu.concatenate %7, %13, %19, %25, %31, %37, %43, %49, %55, %61, %67, %73, %79, %85, %91, %97 in 0 : vector<16x128xbf16>, vector<16x128xbf16>, vector<16x128xbf16>, vector<16x128xbf16>, vector<16x128xbf16>, vector<16x128xbf16>, vector<16x128xbf16>, vector<16x128xbf16>, vector<16x128xbf16>, vector<16x128xbf16>, vector<16x128xbf16>, vector<16x128xbf16>, vector<16x128xbf16>, vector<16x128xbf16>, vector<16x128xbf16>, vector<16x128xbf16> -> vector<256x128xbf16>
    %c0_1 = arith.constant 0 : index
    %c0_2 = arith.constant 0 : index
    %99 = vector.load %arg2[%c0_1, %c0_2] : memref<128x256xbf16, #tpu.memory_space<vmem>>, vector<128x256xbf16>
    %cst = arith.constant dense<0.000000e+00> : vector<256x256xf32>
    %100 = tpu.matmul %98, %99, %cst {dimension_numbers = #tpu.dot_dimension_numbers<[1], [0], [0], [1], [0, 0, 1, 1], [], []>} : vector<256x128xbf16>, vector<128x256xbf16>, vector<256x256xf32> -> vector<256x256xf32>
    %101 = vector.extract_strided_slice %100 {offsets = [0, 0], sizes = [224, 16], strides = [1, 1]} : vector<256x256xf32> to vector<224x16xf32>
    %102 = vector.extract_strided_slice %100 {offsets = [16, 16], sizes = [224, 16], strides = [1, 1]} : vector<256x256xf32> to vector<224x16xf32>
    %103 = arith.addf %101, %102 : vector<224x16xf32>
    %104 = vector.extract_strided_slice %100 {offsets = [32, 32], sizes = [224, 16], strides = [1, 1]} : vector<256x256xf32> to vector<224x16xf32>
    %105 = arith.addf %103, %104 : vector<224x16xf32>
    %106 = vector.shape_cast %105 : vector<224x16xf32> to vector<14x16x16xf32>
    %cst_3 = arith.constant dense<0xFF800000> : vector<16x16xf32>
    %107 = vector.multi_reduction <maximumf>, %106, %cst_3 [0] : vector<14x16x16xf32> to vector<16x16xf32>
    %c0_4 = arith.constant 0 : index
    %c0_5 = arith.constant 0 : index
    %108 = vector.load %arg3[%c0_4, %c0_5] : memref<1x48xf32, #tpu.memory_space<vmem>>, vector<1x16xf32>
    %109 = vector.broadcast %108 : vector<1x16xf32> to vector<16x16xf32>
    %110 = arith.addf %107, %109 : vector<16x16xf32>
    %cst_6 = arith.constant 0.000000e+00 : f32
    %111 = vector.broadcast %cst_6 : f32 to vector<16x16xf32>
    %112 = arith.maximumf %110, %111 : vector<16x16xf32>
    %113 = vector.extract_strided_slice %100 {offsets = [0, 48], sizes = [208, 16], strides = [1, 1]} : vector<256x256xf32> to vector<208x16xf32>
    %114 = vector.extract_strided_slice %100 {offsets = [16, 64], sizes = [208, 16], strides = [1, 1]} : vector<256x256xf32> to vector<208x16xf32>
    %115 = arith.addf %113, %114 : vector<208x16xf32>
    %116 = vector.extract_strided_slice %100 {offsets = [32, 80], sizes = [208, 16], strides = [1, 1]} : vector<256x256xf32> to vector<208x16xf32>
    %117 = arith.addf %115, %116 : vector<208x16xf32>
    %118 = vector.extract_strided_slice %100 {offsets = [48, 96], sizes = [208, 16], strides = [1, 1]} : vector<256x256xf32> to vector<208x16xf32>
    %119 = arith.addf %117, %118 : vector<208x16xf32>
    %120 = vector.shape_cast %119 : vector<208x16xf32> to vector<13x16x16xf32>
    %cst_7 = arith.constant dense<0xFF800000> : vector<16x16xf32>
    %121 = vector.multi_reduction <maximumf>, %120, %cst_7 [0] : vector<13x16x16xf32> to vector<16x16xf32>
    %c0_8 = arith.constant 0 : index
    %c16 = arith.constant 16 : index
    %122 = vector.load %arg3[%c0_8, %c16] : memref<1x48xf32, #tpu.memory_space<vmem>>, vector<1x16xf32>
    %123 = vector.broadcast %122 : vector<1x16xf32> to vector<16x16xf32>
    %124 = arith.addf %121, %123 : vector<16x16xf32>
    %cst_9 = arith.constant 0.000000e+00 : f32
    %125 = vector.broadcast %cst_9 : f32 to vector<16x16xf32>
    %126 = arith.maximumf %124, %125 : vector<16x16xf32>
    %127 = vector.extract_strided_slice %100 {offsets = [0, 112], sizes = [192, 16], strides = [1, 1]} : vector<256x256xf32> to vector<192x16xf32>
    %128 = vector.extract_strided_slice %100 {offsets = [16, 128], sizes = [192, 16], strides = [1, 1]} : vector<256x256xf32> to vector<192x16xf32>
    %129 = arith.addf %127, %128 : vector<192x16xf32>
    %130 = vector.extract_strided_slice %100 {offsets = [32, 144], sizes = [192, 16], strides = [1, 1]} : vector<256x256xf32> to vector<192x16xf32>
    %131 = arith.addf %129, %130 : vector<192x16xf32>
    %132 = vector.extract_strided_slice %100 {offsets = [48, 160], sizes = [192, 16], strides = [1, 1]} : vector<256x256xf32> to vector<192x16xf32>
    %133 = arith.addf %131, %132 : vector<192x16xf32>
    %134 = vector.extract_strided_slice %100 {offsets = [64, 176], sizes = [192, 16], strides = [1, 1]} : vector<256x256xf32> to vector<192x16xf32>
    %135 = arith.addf %133, %134 : vector<192x16xf32>
    %136 = vector.shape_cast %135 : vector<192x16xf32> to vector<12x16x16xf32>
    %cst_10 = arith.constant dense<0xFF800000> : vector<16x16xf32>
    %137 = vector.multi_reduction <maximumf>, %136, %cst_10 [0] : vector<12x16x16xf32> to vector<16x16xf32>
    %c0_11 = arith.constant 0 : index
    %c32 = arith.constant 32 : index
    %138 = vector.load %arg3[%c0_11, %c32] : memref<1x48xf32, #tpu.memory_space<vmem>>, vector<1x16xf32>
    %139 = vector.broadcast %138 : vector<1x16xf32> to vector<16x16xf32>
    %140 = arith.addf %137, %139 : vector<16x16xf32>
    %cst_12 = arith.constant 0.000000e+00 : f32
    %141 = vector.broadcast %cst_12 : f32 to vector<16x16xf32>
    %142 = arith.maximumf %140, %141 : vector<16x16xf32>
    %143 = tpu.concatenate %112, %126, %142 in 1 : vector<16x16xf32>, vector<16x16xf32>, vector<16x16xf32> -> vector<16x48xf32>
    %144 = arith.truncf %143 : vector<16x48xf32> to vector<16x48xbf16>
    %c0_13 = arith.constant 0 : index
    %c0_14 = arith.constant 0 : index
    %145 = vector.load %arg4[%c0_13, %c0_14] : memref<48x128xbf16, #tpu.memory_space<vmem>>, vector<48x128xbf16>
    %cst_15 = arith.constant dense<0.000000e+00> : vector<16x128xf32>
    %146 = tpu.matmul %144, %145, %cst_15 {dimension_numbers = #tpu.dot_dimension_numbers<[1], [0], [0], [1], [0, 0, 1, 1], [], []>} : vector<16x48xbf16>, vector<48x128xbf16>, vector<16x128xf32> -> vector<16x128xf32>
    %c0_16 = arith.constant 0 : index
    %c0_17 = arith.constant 0 : index
    %147 = vector.load %arg5[%c0_16, %c0_17] : memref<1x128xf32, #tpu.memory_space<vmem>>, vector<1x128xf32>
    %148 = vector.broadcast %147 : vector<1x128xf32> to vector<16x128xf32>
    %149 = arith.addf %146, %148 : vector<16x128xf32>
    %c0_18 = arith.constant 0 : index
    %c0_19 = arith.constant 0 : index
    %150 = vector.load %arg6[%c0_18, %c0_19] : memref<16x128xf32, #tpu.memory_space<vmem>>, vector<16x128xf32>
    tpu.vector_store %arg6[%c0_18, %c0_19], %149 {strides = array<i32>} : memref<16x128xf32, #tpu.memory_space<vmem>>, vector<16x128xf32>,
    return
  }
  func.func @transform_0(%arg0: i32) -> (i32, i32) {
    %c0_i32 = arith.constant 0 : i32
    %c0_i32_0 = arith.constant 0 : i32
    return %arg0, %c0_i32 : i32, i32
  }
  func.func @transform_1(%arg0: i32) -> (i32, i32) {
    %c0_i32 = arith.constant 0 : i32
    %c0_i32_0 = arith.constant 0 : i32
    %c0_i32_1 = arith.constant 0 : i32
    return %c0_i32, %c0_i32_0 : i32, i32
  }
  func.func @transform_2(%arg0: i32) -> (i32, i32) {
    %c0_i32 = arith.constant 0 : i32
    %c0_i32_0 = arith.constant 0 : i32
    %c0_i32_1 = arith.constant 0 : i32
    return %c0_i32, %c0_i32_0 : i32, i32
  }
  func.func @transform_3(%arg0: i32) -> (i32, i32) {
    %c0_i32 = arith.constant 0 : i32
    %c0_i32_0 = arith.constant 0 : i32
    %c0_i32_1 = arith.constant 0 : i32
    return %c0_i32, %c0_i32_0 : i32, i32
  }
  func.func @transform_4(%arg0: i32) -> (i32, i32) {
    %c0_i32 = arith.constant 0 : i32
    %c0_i32_0 = arith.constant 0 : i32
    %c0_i32_1 = arith.constant 0 : i32
    return %c0_i32, %c0_i32_0 : i32, i32
  }
  func.func @transform_5(%arg0: i32) -> (i32, i32) {
    %c0_i32 = arith.constant 0 : i32
    %c0_i32_0 = arith.constant 0 : i32
    return %arg0, %c0_i32 : i32, i32
  }
}

module attributes {stable_mosaic.version = 11 : i64} {
  func.func @kernel(%arg0: i32, %arg1: memref<16x16x32xbf16, #tpu.memory_space<vmem>>, %arg2: memref<32x256xbf16, #tpu.memory_space<vmem>>, %arg3: memref<1x48xf32, #tpu.memory_space<vmem>>, %arg4: memref<48x128xbf16, #tpu.memory_space<vmem>>, %arg5: memref<1x128xf32, #tpu.memory_space<vmem>>, %arg6: memref<16x128xf32, #tpu.memory_space<vmem>>) attributes {dimension_semantics = [#tpu.dimension_semantics<parallel>], iteration_bounds = array<i64: 3>, scalar_prefetch = 0 : i64, scratch_operands = 0 : i64, tpu.core_type = #tpu.core_type<tc>, window_params = [{transform_indices = @transform_0, window_bounds = array<i64: 16, 16, 32>}, {pipeline_mode = #tpu.pipeline_mode<synchronous>, transform_indices = @transform_1, window_bounds = array<i64: 32, 256>}, {pipeline_mode = #tpu.pipeline_mode<synchronous>, transform_indices = @transform_2, window_bounds = array<i64: 1, 48>}, {pipeline_mode = #tpu.pipeline_mode<synchronous>, transform_indices = @transform_3, window_bounds = array<i64: 48, 128>}, {pipeline_mode = #tpu.pipeline_mode<synchronous>, transform_indices = @transform_4, window_bounds = array<i64: 1, 128>}, {transform_indices = @transform_5, window_bounds = array<i64: 16, 128>}]} {
    %c0 = arith.constant 0 : index
    %c0_0 = arith.constant 0 : index
    %c0_1 = arith.constant 0 : index
    %0 = vector.load %arg1[%c0, %c0_0, %c0_1] : memref<16x16x32xbf16, #tpu.memory_space<vmem>>, vector<16x16x32xbf16>
    %1 = vector.shape_cast %0 : vector<16x16x32xbf16> to vector<256x32xbf16>
    %c0_2 = arith.constant 0 : index
    %c0_3 = arith.constant 0 : index
    %2 = vector.load %arg2[%c0_2, %c0_3] : memref<32x256xbf16, #tpu.memory_space<vmem>>, vector<32x256xbf16>
    %cst = arith.constant dense<0.000000e+00> : vector<256x256xf32>
    %3 = tpu.matmul %1, %2, %cst {dimension_numbers = #tpu.dot_dimension_numbers<[1], [0], [0], [1], [0, 0, 1, 1], [], []>} : vector<256x32xbf16>, vector<32x256xbf16>, vector<256x256xf32> -> vector<256x256xf32>
    %4 = vector.shape_cast %3 : vector<256x256xf32> to vector<16x16x256xf32>
    %5 = vector.extract_strided_slice %4 {offsets = [0, 0, 0], sizes = [16, 14, 16], strides = [1, 1, 1]} : vector<16x16x256xf32> to vector<16x14x16xf32>
    %6 = vector.extract_strided_slice %4 {offsets = [0, 1, 16], sizes = [16, 14, 16], strides = [1, 1, 1]} : vector<16x16x256xf32> to vector<16x14x16xf32>
    %7 = arith.addf %5, %6 : vector<16x14x16xf32>
    %8 = vector.extract_strided_slice %4 {offsets = [0, 2, 32], sizes = [16, 14, 16], strides = [1, 1, 1]} : vector<16x16x256xf32> to vector<16x14x16xf32>
    %9 = arith.addf %7, %8 : vector<16x14x16xf32>
    %cst_4 = arith.constant dense<0xFF800000> : vector<16x16xf32>
    %10 = vector.multi_reduction <maximumf>, %9, %cst_4 [1] : vector<16x14x16xf32> to vector<16x16xf32>
    %c0_5 = arith.constant 0 : index
    %c0_6 = arith.constant 0 : index
    %11 = vector.load %arg3[%c0_5, %c0_6] : memref<1x48xf32, #tpu.memory_space<vmem>>, vector<1x16xf32>
    %12 = vector.broadcast %11 : vector<1x16xf32> to vector<16x16xf32>
    %13 = arith.addf %10, %12 : vector<16x16xf32>
    %cst_7 = arith.constant 0.000000e+00 : f32
    %14 = vector.broadcast %cst_7 : f32 to vector<16x16xf32>
    %15 = arith.maximumf %13, %14 : vector<16x16xf32>
    %16 = vector.extract_strided_slice %4 {offsets = [0, 0, 48], sizes = [16, 13, 16], strides = [1, 1, 1]} : vector<16x16x256xf32> to vector<16x13x16xf32>
    %17 = vector.extract_strided_slice %4 {offsets = [0, 1, 64], sizes = [16, 13, 16], strides = [1, 1, 1]} : vector<16x16x256xf32> to vector<16x13x16xf32>
    %18 = arith.addf %16, %17 : vector<16x13x16xf32>
    %19 = vector.extract_strided_slice %4 {offsets = [0, 2, 80], sizes = [16, 13, 16], strides = [1, 1, 1]} : vector<16x16x256xf32> to vector<16x13x16xf32>
    %20 = arith.addf %18, %19 : vector<16x13x16xf32>
    %21 = vector.extract_strided_slice %4 {offsets = [0, 3, 96], sizes = [16, 13, 16], strides = [1, 1, 1]} : vector<16x16x256xf32> to vector<16x13x16xf32>
    %22 = arith.addf %20, %21 : vector<16x13x16xf32>
    %cst_8 = arith.constant dense<0xFF800000> : vector<16x16xf32>
    %23 = vector.multi_reduction <maximumf>, %22, %cst_8 [1] : vector<16x13x16xf32> to vector<16x16xf32>
    %c0_9 = arith.constant 0 : index
    %c16 = arith.constant 16 : index
    %24 = vector.load %arg3[%c0_9, %c16] : memref<1x48xf32, #tpu.memory_space<vmem>>, vector<1x16xf32>
    %25 = vector.broadcast %24 : vector<1x16xf32> to vector<16x16xf32>
    %26 = arith.addf %23, %25 : vector<16x16xf32>
    %cst_10 = arith.constant 0.000000e+00 : f32
    %27 = vector.broadcast %cst_10 : f32 to vector<16x16xf32>
    %28 = arith.maximumf %26, %27 : vector<16x16xf32>
    %29 = vector.extract_strided_slice %4 {offsets = [0, 0, 112], sizes = [16, 12, 16], strides = [1, 1, 1]} : vector<16x16x256xf32> to vector<16x12x16xf32>
    %30 = vector.extract_strided_slice %4 {offsets = [0, 1, 128], sizes = [16, 12, 16], strides = [1, 1, 1]} : vector<16x16x256xf32> to vector<16x12x16xf32>
    %31 = arith.addf %29, %30 : vector<16x12x16xf32>
    %32 = vector.extract_strided_slice %4 {offsets = [0, 2, 144], sizes = [16, 12, 16], strides = [1, 1, 1]} : vector<16x16x256xf32> to vector<16x12x16xf32>
    %33 = arith.addf %31, %32 : vector<16x12x16xf32>
    %34 = vector.extract_strided_slice %4 {offsets = [0, 3, 160], sizes = [16, 12, 16], strides = [1, 1, 1]} : vector<16x16x256xf32> to vector<16x12x16xf32>
    %35 = arith.addf %33, %34 : vector<16x12x16xf32>
    %36 = vector.extract_strided_slice %4 {offsets = [0, 4, 176], sizes = [16, 12, 16], strides = [1, 1, 1]} : vector<16x16x256xf32> to vector<16x12x16xf32>
    %37 = arith.addf %35, %36 : vector<16x12x16xf32>
    %cst_11 = arith.constant dense<0xFF800000> : vector<16x16xf32>
    %38 = vector.multi_reduction <maximumf>, %37, %cst_11 [1] : vector<16x12x16xf32> to vector<16x16xf32>
    %c0_12 = arith.constant 0 : index
    %c32 = arith.constant 32 : index
    %39 = vector.load %arg3[%c0_12, %c32] : memref<1x48xf32, #tpu.memory_space<vmem>>, vector<1x16xf32>
    %40 = vector.broadcast %39 : vector<1x16xf32> to vector<16x16xf32>
    %41 = arith.addf %38, %40 : vector<16x16xf32>
    %cst_13 = arith.constant 0.000000e+00 : f32
    %42 = vector.broadcast %cst_13 : f32 to vector<16x16xf32>
    %43 = arith.maximumf %41, %42 : vector<16x16xf32>
    %44 = tpu.concatenate %15, %28, %43 in 1 : vector<16x16xf32>, vector<16x16xf32>, vector<16x16xf32> -> vector<16x48xf32>
    %45 = arith.truncf %44 : vector<16x48xf32> to vector<16x48xbf16>
    %c0_14 = arith.constant 0 : index
    %c0_15 = arith.constant 0 : index
    %46 = vector.load %arg4[%c0_14, %c0_15] : memref<48x128xbf16, #tpu.memory_space<vmem>>, vector<48x128xbf16>
    %cst_16 = arith.constant dense<0.000000e+00> : vector<16x128xf32>
    %47 = tpu.matmul %45, %46, %cst_16 {dimension_numbers = #tpu.dot_dimension_numbers<[1], [0], [0], [1], [0, 0, 1, 1], [], []>} : vector<16x48xbf16>, vector<48x128xbf16>, vector<16x128xf32> -> vector<16x128xf32>
    %c0_17 = arith.constant 0 : index
    %c0_18 = arith.constant 0 : index
    %48 = vector.load %arg5[%c0_17, %c0_18] : memref<1x128xf32, #tpu.memory_space<vmem>>, vector<1x128xf32>
    %49 = vector.broadcast %48 : vector<1x128xf32> to vector<16x128xf32>
    %50 = arith.addf %47, %49 : vector<16x128xf32>
    %c0_19 = arith.constant 0 : index
    %c0_20 = arith.constant 0 : index
    %51 = vector.load %arg6[%c0_19, %c0_20] : memref<16x128xf32, #tpu.memory_space<vmem>>, vector<16x128xf32>
    tpu.vector_store %arg6[%c0_19, %c0_20], %50 {strides = array<i32>} : memref<16x128xf32, #tpu.memory_space<vmem>>, vector<16x128xf32>,
    return
  }
  func.func @transform_0(%arg0: i32) -> (i32, i32, i32) {
    %c0_i32 = arith.constant 0 : i32
    %c0_i32_0 = arith.constant 0 : i32
    %c0_i32_1 = arith.constant 0 : i32
    return %arg0, %c0_i32, %c0_i32_0 : i32, i32, i32
  }
  func.func @transform_1(%arg0: i32) -> (i32, i32) {
    %c0_i32 = arith.constant 0 : i32
    %c0_i32_0 = arith.constant 0 : i32
    %c0_i32_1 = arith.constant 0 : i32
    return %c0_i32, %c0_i32_0 : i32, i32
  }
  func.func @transform_2(%arg0: i32) -> (i32, i32) {
    %c0_i32 = arith.constant 0 : i32
    %c0_i32_0 = arith.constant 0 : i32
    %c0_i32_1 = arith.constant 0 : i32
    return %c0_i32, %c0_i32_0 : i32, i32
  }
  func.func @transform_3(%arg0: i32) -> (i32, i32) {
    %c0_i32 = arith.constant 0 : i32
    %c0_i32_0 = arith.constant 0 : i32
    %c0_i32_1 = arith.constant 0 : i32
    return %c0_i32, %c0_i32_0 : i32, i32
  }
  func.func @transform_4(%arg0: i32) -> (i32, i32) {
    %c0_i32 = arith.constant 0 : i32
    %c0_i32_0 = arith.constant 0 : i32
    %c0_i32_1 = arith.constant 0 : i32
    return %c0_i32, %c0_i32_0 : i32, i32
  }
  func.func @transform_5(%arg0: i32) -> (i32, i32) {
    %c0_i32 = arith.constant 0 : i32
    %c0_i32_0 = arith.constant 0 : i32
    return %arg0, %c0_i32 : i32, i32
  }
}

</mosaic_0001>

<llo_original>
// kernel: _cnn1d_forward_impl.1
$region0: #{_cnn1d_forward_impl.1}
  #allocation0 [shape = 'u32[]', space=smem, size = 0x4, offset = 0x4, fixed_abs, tag = 'smem constant byte address 0x4 - core index']
  #allocation1 [shape = 'u32[144,128]{1,0:T(1,128)}', space=vmem, size = 0x12000, scoped, tag = 'internal scratch']
  %s0 = inlined_call_operand.vmem [shape: s32[48,16], index: 0, kind: input, shape index: {}]
  %s1 = inlined_call_operand.vmem [shape: bf16[128,256], index: 1, kind: input, shape index: {}]
  %s2 = inlined_call_operand.vmem [shape: f32[1,48], index: 2, kind: input, shape index: {}]
  %s3 = inlined_call_operand.vmem [shape: bf16[48,128], index: 3, kind: input, shape index: {}]
  %s4 = inlined_call_operand.vmem [shape: f32[1,128], index: 4, kind: input, shape index: {}]
  %s5 = inlined_call_operand.vmem [shape: f32[48,128], index: 5, kind: output, shape index: {}]
  %s6 = sld [smem:[#allocation0]]
  $region53: #{_cnn1d_forward_impl.1} parent=0
    _
  %s8 = ssub.s32 1, %s6
  %s9 = scalar_select 0, %s8, %s6
  loop: start=0, step=1, limit=5
  $region2: #{_cnn1d_forward_impl.1} parent=0 // loop_pre_header
    _
  $region3: #{_cnn1d_forward_impl.1} parent=0 // loop_header
    %s11 = sphi 0, %s15
    %p12 = scmp.ge.s32.totalorder %s11, 5
    %s21 = sphi 0, %s23
    %s24 = sphi 0, %s21
    %s25 = sphi 0, %s24
    %s41 = sphi 0, %s25
    %s45 = sphi 0, %s45
    %s47 = sphi 0, %s45
    %s48 = sphi 0, %s47
    %s62 = sphi 0, %s48
    %s66 = sphi 0, %s66
    %s68 = sphi 0, %s66
    %s69 = sphi 0, %s68
    %s83 = sphi 0, %s69
    %s87 = sphi 0, %s87
    %s89 = sphi 0, %s87
    %s90 = sphi 0, %s89
    %s104 = sphi 0, %s90
    %s108 = sphi 0, %s108
    %s110 = sphi 0, %s108
    %s111 = sphi 0, %s110
    %s125 = sphi 0, %s111
    %s131 = sphi 0, %s133
    %s134 = sphi 0, %s131
    %s135 = sphi 0, %s134
    %s151 = sphi 0, %s135
  $region4: #{_cnn1d_forward_impl.1} parent=0 // loop_header_branch
    %14 = sbr.rel (%p12) target = $region8
  $region5: #{_cnn1d_forward_impl.1} parent=0 // loop_body
    %s16 = ssub.s32 %s11, 1
    %s17 = ssub.s32 %s11, 2
    %s18 = sadd.s32 %s11, 1
    %s19 = ssub.s32 %s11, %s18
    %p20 = scmp.eq.s32.totalorder %s19, 0
    %s22 = sadd.s32 %s21, 1
    %s23 = scalar_select %p20, %s21, %s22
    %p26 = pneg %p20
    %p27 = scmp.eq.s32.totalorder %s11, 2
    %p28 = por %p26, %p27
    %p29 = scmp.ne.s32.totalorder %s21, %s24
    %p30 = scmp.eq.s32.totalorder %s11, 0
    %p31 = por %p29, %p30
    %p32 = scmp.ne.s32.totalorder %s21, %s24
    %p33 = scmp.eq.s32.totalorder %s16, 2
    %p34 = por %p32, %p33
    %p35 = scmp.ne.s32.totalorder %s24, %s25
    %p36 = scmp.eq.s32.totalorder %s16, 0
    %p37 = por %p35, %p36
    %p38 = scmp.ne.s32.totalorder %s24, %s25
    %p39 = scmp.eq.s32.totalorder %s17, 2
    %p40 = por %p38, %p39
    %p42 = scmp.ne.s32.totalorder %s25, %s41
    %p43 = scmp.eq.s32.totalorder %s17, 0
    %p44 = por %p42, %p43
    %s46 = sadd.s32 %s45, 1
    %p49 = scmp.eq.s32.totalorder %s11, 2
    %p50 = scmp.ne.s32.totalorder %s45, %s47
    %p51 = scmp.eq.s32.totalorder %s11, 0
    %p52 = por %p50, %p51
    %p53 = scmp.ne.s32.totalorder %s45, %s47
    %p54 = scmp.eq.s32.totalorder %s16, 2
    %p55 = por %p53, %p54
    %p56 = scmp.ne.s32.totalorder %s47, %s48
    %p57 = scmp.eq.s32.totalorder %s16, 0
    %p58 = por %p56, %p57
    %p59 = scmp.ne.s32.totalorder %s47, %s48
    %p60 = scmp.eq.s32.totalorder %s17, 2
    %p61 = por %p59, %p60
    %p63 = scmp.ne.s32.totalorder %s48, %s62
    %p64 = scmp.eq.s32.totalorder %s17, 0
    %p65 = por %p63, %p64
    %s67 = sadd.s32 %s66, 1
    %p70 = scmp.eq.s32.totalorder %s11, 2
    %p71 = scmp.ne.s32.totalorder %s66, %s68
    %p72 = scmp.eq.s32.totalorder %s11, 0
    %p73 = por %p71, %p72
    %p74 = scmp.ne.s32.totalorder %s66, %s68
    %p75 = scmp.eq.s32.totalorder %s16, 2
    %p76 = por %p74, %p75
    %p77 = scmp.ne.s32.totalorder %s68, %s69
    %p78 = scmp.eq.s32.totalorder %s16, 0
    %p79 = por %p77, %p78
    %p80 = scmp.ne.s32.totalorder %s68, %s69
    %p81 = scmp.eq.s32.totalorder %s17, 2
    %p82 = por %p80, %p81
    %p84 = scmp.ne.s32.totalorder %s69, %s83
    %p85 = scmp.eq.s32.totalorder %s17, 0
    %p86 = por %p84, %p85
    %s88 = sadd.s32 %s87, 1
    %p91 = scmp.eq.s32.totalorder %s11, 2
    %p92 = scmp.ne.s32.totalorder %s87, %s89
    %p93 = scmp.eq.s32.totalorder %s11, 0
    %p94 = por %p92, %p93
    %p95 = scmp.ne.s32.totalorder %s87, %s89
    %p96 = scmp.eq.s32.totalorder %s16, 2
    %p97 = por %p95, %p96
    %p98 = scmp.ne.s32.totalorder %s89, %s90
    %p99 = scmp.eq.s32.totalorder %s16, 0
    %p100 = por %p98, %p99
    %p101 = scmp.ne.s32.totalorder %s89, %s90
    %p102 = scmp.eq.s32.totalorder %s17, 2
    %p103 = por %p101, %p102
    %p105 = scmp.ne.s32.totalorder %s90, %s104
    %p106 = scmp.eq.s32.totalorder %s17, 0
    %p107 = por %p105, %p106
    %s109 = sadd.s32 %s108, 1
    %p112 = scmp.eq.s32.totalorder %s11, 2
    %p113 = scmp.ne.s32.totalorder %s108, %s110
    %p114 = scmp.eq.s32.totalorder %s11, 0
    %p115 = por %p113, %p114
    %p116 = scmp.ne.s32.totalorder %s108, %s110
    %p117 = scmp.eq.s32.totalorder %s16, 2
    %p118 = por %p116, %p117
    %p119 = scmp.ne.s32.totalorder %s110, %s111
    %p120 = scmp.eq.s32.totalorder %s16, 0
    %p121 = por %p119, %p120
    %p122 = scmp.ne.s32.totalorder %s110, %s111
    %p123 = scmp.eq.s32.totalorder %s17, 2
    %p124 = por %p122, %p123
    %p126 = scmp.ne.s32.totalorder %s111, %s125
    %p127 = scmp.eq.s32.totalorder %s17, 0
    %p128 = por %p126, %p127
    %s129 = ssub.s32 %s11, %s18
    %p130 = scmp.eq.s32.totalorder %s129, 0
    %s132 = sadd.s32 %s131, 1
    %s133 = scalar_select %p130, %s131, %s132
    %p136 = pneg %p130
    %p137 = scmp.eq.s32.totalorder %s11, 2
    %p138 = por %p136, %p137
    %p139 = scmp.ne.s32.totalorder %s131, %s134
    %p140 = scmp.eq.s32.totalorder %s11, 0
    %p141 = por %p139, %p140
    %p142 = scmp.ne.s32.totalorder %s131, %s134
    %p143 = scmp.eq.s32.totalorder %s16, 2
    %p144 = por %p142, %p143
    %p145 = scmp.ne.s32.totalorder %s134, %s135
    %p146 = scmp.eq.s32.totalorder %s16, 0
    %p147 = por %p145, %p146
    %p148 = scmp.ne.s32.totalorder %s134, %s135
    %p149 = scmp.eq.s32.totalorder %s17, 2
    %p150 = por %p148, %p149
    %p152 = scmp.ne.s32.totalorder %s135, %s151
    %p153 = scmp.eq.s32.totalorder %s17, 0
    %p154 = por %p152, %p153
    %p155 = scmp.le.s32.totalorder 1, %s11
    %p156 = scmp.lt.s32.totalorder %s11, 4
    %p157 = pnand %p155, %p156
    %p158 = pneg %p157
    // Predicated region
    $region9: #{_cnn1d_forward_impl.1} parent=5 // pred_check
      _
    $region10: #{_cnn1d_forward_impl.1} parent=5 // pred_check_branch
      %160 = sbr.rel (%p157) target = $region12
    $region11: #{_cnn1d_forward_impl.1} parent=5 // pred_region
      %s161 = ssub.s32 %s11, 1
      // Predicated region
      $region13: #{_cnn1d_forward_impl.1} parent=11 // pred_check
        %p162 = pneg %p58
      $region14: #{_cnn1d_forward_impl.1} parent=11 // pred_check_branch
        %164 = sbr.rel (%p162) target = $region16
      $region15: #{_cnn1d_forward_impl.1} parent=11 // pred_region
        _
      $region16: #{_cnn1d_forward_impl.1} parent=11 // pred_fallthru
        _
      // Predicated region
      $region17: #{_cnn1d_forward_impl.1} parent=11 // pred_check
        %p165 = pneg %p79
      $region18: #{_cnn1d_forward_impl.1} parent=11 // pred_check_branch
        %167 = sbr.rel (%p165) target = $region20
      $region19: #{_cnn1d_forward_impl.1} parent=11 // pred_region
        _
      $region20: #{_cnn1d_forward_impl.1} parent=11 // pred_fallthru
        _
      // Predicated region
      $region21: #{_cnn1d_forward_impl.1} parent=11 // pred_check
        %p168 = pneg %p100
      $region22: #{_cnn1d_forward_impl.1} parent=11 // pred_check_branch
        %170 = sbr.rel (%p168) target = $region24
      $region23: #{_cnn1d_forward_impl.1} parent=11 // pred_region
        _
      $region24: #{_cnn1d_forward_impl.1} parent=11 // pred_fallthru
        _
      // Predicated region
      $region25: #{_cnn1d_forward_impl.1} parent=11 // pred_check
        %p171 = pneg %p121
      $region26: #{_cnn1d_forward_impl.1} parent=11 // pred_check_branch
        %173 = sbr.rel (%p171) target = $region28
      $region27: #{_cnn1d_forward_impl.1} parent=11 // pred_region
        _
      $region28: #{_cnn1d_forward_impl.1} parent=11 // pred_fallthru
        _
    $region12: #{_cnn1d_forward_impl.1} parent=5 // pred_fallthru
      _
    %p174 = scmp.lt.s32.totalorder %s11, 3
    // Predicated region
    $region29: #{_cnn1d_forward_impl.1} parent=5 // pred_check
      %p175 = pneg %p174
    $region30: #{_cnn1d_forward_impl.1} parent=5 // pred_check_branch
      %177 = sbr.rel (%p175) target = $region32
    $region31: #{_cnn1d_forward_impl.1} parent=5 // pred_region
      // Predicated region
      $region33: #{_cnn1d_forward_impl.1} parent=31 // pred_check
        %p178 = pneg %p31
      $region34: #{_cnn1d_forward_impl.1} parent=31 // pred_check_branch
        %180 = sbr.rel (%p178) target = $region36
      $region35: #{_cnn1d_forward_impl.1} parent=31 // pred_region
        %s181 = smul.u32 2, %s11
        %p182 = scmp.lt.s32.totalorder %s181, 5
        %s183 = scalar_select %p182, %s181, 5
        %s184 = smul.addr %s183, 8
        %s185 = scalar_lea.vmem %s0, %s184
        %s186 = smul.u32 2, %s11
      $region36: #{_cnn1d_forward_impl.1} parent=31 // pred_fallthru
        _
    $region32: #{_cnn1d_forward_impl.1} parent=5 // pred_fallthru
      _
    %p187 = scmp.le.s32.totalorder 1, %s11
    %p188 = scmp.lt.s32.totalorder %s11, 4
    %p189 = pnand %p187, %p188
    %p190 = pneg %p189
    // Predicated region
    $region37: #{_cnn1d_forward_impl.1} parent=5 // pred_check
      _
    $region38: #{_cnn1d_forward_impl.1} parent=5 // pred_check_branch
      %192 = sbr.rel (%p189) target = $region40
    $region39: #{_cnn1d_forward_impl.1} parent=5 // pred_region
      %s193 = ssub.s32 %s11, 1
      %s194 = smul.u32 2, %s16
      %p195 = scmp.lt.s32.totalorder %s194, 5
      %s196 = scalar_select %p195, %s194, 5
      %s197 = smul.addr %s196, 8
      %s198 = scalar_lea.vmem %s0, %s197
      %p199 = pneg %p37
      %p200 = pneg %p34
      %p201 = pneg %p58
      %p202 = pneg %p55
      %p203 = pneg %p79
      %p204 = pneg %p76
      %p205 = pneg %p100
      %p206 = pneg %p97
      %p207 = pneg %p121
      %p208 = pneg %p118
      %p209 = pneg %p147
      %p210 = pneg %p144
      %s211 = smul.u32 2, %s16
      %p212 = scmp.lt.s32.totalorder %s211, 5
      %s213 = scalar_select %p212, %s211, 5
      %s214 = smul.addr %s213, 8
      %s215 = scalar_lea.vmem %s5, %s214
      %s216 = smul.u32 2, %s16
      %p217 = scmp.lt.s32.totalorder %s216, 5
      %s218 = scalar_select %p217, %s216, 5
      %s219 = smul.addr %s218, 8
      %s220 = scalar_lea.vmem %s0, %s219
      %s221 = smul.u32 2, %s16
      %s222 = smul.u32 2, %s16
      %p223 = scmp.lt.s32.totalorder %s222, 5
      %s224 = scalar_select %p223, %s222, 5
      %s225 = smul.addr %s224, 8
      %s226 = scalar_lea.vmem %s5, %s225
      %s227 = smul.u32 2, %s16
      %v229 = vld [vmem:[%s220] sm:$0xff]
      %v230 = vld [vmem:[%s220 + $0x8] sm:$0xff]
      %v231 = vlaneseq
      %v232 = vand.u32 %v231, 127
      %233 = vset.pattern.permute.xlu0 0
      %234 = vperm.xlu0 %233, %v229
      %v235 = vpop.permute.xlu0 %234
      %236 = vset.pattern.permute.xlu0 0
      %237 = vperm.xlu0 %236, %v230
      %v238 = vpop.permute.xlu0 %237
      %vm239 = vcmp.eq.s32.totalorder %v235, %v232
      %vm240 = vcmp.eq.s32.totalorder %v238, %v232
      %v241 = vsel %vm239, 1, 0
      %v242 = vsel %vm240, 1, 0
      %v243 = vcvt.s32.f32 %v241
      %v244 = vcvt.s32.f32 %v242
      %v245 = vpack.c.bf16 %v244, %v243
      %246 = vset.pattern.permute.xlu0 1
      %247 = vperm.xlu0 %246, %v229
      %v248 = vpop.permute.xlu0 %247
      %249 = vset.pattern.permute.xlu0 1
      %250 = vperm.xlu0 %249, %v230
      %v251 = vpop.permute.xlu0 %250
      %vm252 = vcmp.eq.s32.totalorder %v248, %v232
      %vm253 = vcmp.eq.s32.totalorder %v251, %v232
      %v254 = vsel %vm252, 1, 0
      %v255 = vsel %vm253, 1, 0
      %v256 = vcvt.s32.f32 %v254
      %v257 = vcvt.s32.f32 %v255
      %v258 = vpack.c.bf16 %v257, %v256
      %259 = vset.pattern.permute.xlu0 2
      %260 = vperm.xlu0 %259, %v229
      %v261 = vpop.permute.xlu0 %260
      %262 = vset.pattern.permute.xlu0 2
      %263 = vperm.xlu0 %262, %v230
      %v264 = vpop.permute.xlu0 %263
      %vm265 = vcmp.eq.s32.totalorder %v261, %v232
      %vm266 = vcmp.eq.s32.totalorder %v264, %v232
      %v267 = vsel %vm265, 1, 0
      %v268 = vsel %vm266, 1, 0
      %v269 = vcvt.s32.f32 %v267
      %v270 = vcvt.s32.f32 %v268
      %v271 = vpack.c.bf16 %v270, %v269
      %272 = vset.pattern.permute.xlu0 3
      %273 = vperm.xlu0 %272, %v229
      %v274 = vpop.permute.xlu0 %273
      %275 = vset.pattern.permute.xlu0 3
      %276 = vperm.xlu0 %275, %v230
      %v277 = vpop.permute.xlu0 %276
      %vm278 = vcmp.eq.s32.totalorder %v274, %v232
      %vm279 = vcmp.eq.s32.totalorder %v277, %v232
      %v280 = vsel %vm278, 1, 0
      %v281 = vsel %vm279, 1, 0
      %v282 = vcvt.s32.f32 %v280
      %v283 = vcvt.s32.f32 %v281
      %v284 = vpack.c.bf16 %v283, %v282
      %285 = vset.pattern.permute.xlu0 4
      %286 = vperm.xlu0 %285, %v229
      %v287 = vpop.permute.xlu0 %286
      %288 = vset.pattern.permute.xlu0 4
      %289 = vperm.xlu0 %288, %v230
      %v290 = vpop.permute.xlu0 %289
      %vm291 = vcmp.eq.s32.totalorder %v287, %v232
      %vm292 = vcmp.eq.s32.totalorder %v290, %v232
      %v293 = vsel %vm291, 1, 0
      %v294 = vsel %vm292, 1, 0
      %v295 = vcvt.s32.f32 %v293
      %v296 = vcvt.s32.f32 %v294
      %v297 = vpack.c.bf16 %v296, %v295
      %298 = vset.pattern.permute.xlu0 5
      %299 = vperm.xlu0 %298, %v229
      %v300 = vpop.permute.xlu0 %299
      %301 = vset.pattern.permute.xlu0 5
      %302 = vperm.xlu0 %301, %v230
      %v303 = vpop.permute.xlu0 %302
      %vm304 = vcmp.eq.s32.totalorder %v300, %v232
      %vm305 = vcmp.eq.s32.totalorder %v303, %v232
      %v306 = vsel %vm304, 1, 0
      %v307 = vsel %vm305, 1, 0
      %v308 = vcvt.s32.f32 %v306
      %v309 = vcvt.s32.f32 %v307
      %v310 = vpack.c.bf16 %v309, %v308
      %311 = vset.pattern.permute.xlu0 6
      %312 = vperm.xlu0 %311, %v229
      %v313 = vpop.permute.xlu0 %312
      %314 = vset.pattern.permute.xlu0 6
      %315 = vperm.xlu0 %314, %v230
      %v316 = vpop.permute.xlu0 %315
      %vm317 = vcmp.eq.s32.totalorder %v313, %v232
      %vm318 = vcmp.eq.s32.totalorder %v316, %v232
      %v319 = vsel %vm317, 1, 0
      %v320 = vsel %vm318, 1, 0
      %v321 = vcvt.s32.f32 %v319
      %v322 = vcvt.s32.f32 %v320
      %v323 = vpack.c.bf16 %v322, %v321
      %324 = vset.pattern.permute.xlu0 7
      %325 = vperm.xlu0 %324, %v229
      %v326 = vpop.permute.xlu0 %325
      %327 = vset.pattern.permute.xlu0 7
      %328 = vperm.xlu0 %327, %v230
      %v329 = vpop.permute.xlu0 %328
      %vm330 = vcmp.eq.s32.totalorder %v326, %v232
      %vm331 = vcmp.eq.s32.totalorder %v329, %v232
      %v332 = vsel %vm330, 1, 0
      %v333 = vsel %vm331, 1, 0
      %v334 = vcvt.s32.f32 %v332
      %v335 = vcvt.s32.f32 %v333
      %v336 = vpack.c.bf16 %v335, %v334
      %337 = vset.pattern.permute.xlu0 8
      %338 = vperm.xlu0 %337, %v229
      %v339 = vpop.permute.xlu0 %338
      %340 = vset.pattern.permute.xlu0 8
      %341 = vperm.xlu0 %340, %v230
      %v342 = vpop.permute.xlu0 %341
      %vm343 = vcmp.eq.s32.totalorder %v339, %v232
      %vm344 = vcmp.eq.s32.totalorder %v342, %v232
      %v345 = vsel %vm343, 1, 0
      %v346 = vsel %vm344, 1, 0
      %v347 = vcvt.s32.f32 %v345
      %v348 = vcvt.s32.f32 %v346
      %v349 = vpack.c.bf16 %v348, %v347
      %350 = vset.pattern.permute.xlu0 9
      %351 = vperm.xlu0 %350, %v229
      %v352 = vpop.permute.xlu0 %351
      %353 = vset.pattern.permute.xlu0 9
      %354 = vperm.xlu0 %353, %v230
      %v355 = vpop.permute.xlu0 %354
      %vm356 = vcmp.eq.s32.totalorder %v352, %v232
      %vm357 = vcmp.eq.s32.totalorder %v355, %v232
      %v358 = vsel %vm356, 1, 0
      %v359 = vsel %vm357, 1, 0
      %v360 = vcvt.s32.f32 %v358
      %v361 = vcvt.s32.f32 %v359
      %v362 = vpack.c.bf16 %v361, %v360
      %363 = vset.pattern.permute.xlu0 10
      %364 = vperm.xlu0 %363, %v229
      %v365 = vpop.permute.xlu0 %364
      %366 = vset.pattern.permute.xlu0 10
      %367 = vperm.xlu0 %366, %v230
      %v368 = vpop.permute.xlu0 %367
      %vm369 = vcmp.eq.s32.totalorder %v365, %v232
      %vm370 = vcmp.eq.s32.totalorder %v368, %v232
      %v371 = vsel %vm369, 1, 0
      %v372 = vsel %vm370, 1, 0
      %v373 = vcvt.s32.f32 %v371
      %v374 = vcvt.s32.f32 %v372
      %v375 = vpack.c.bf16 %v374, %v373
      %376 = vset.pattern.permute.xlu0 11
      %377 = vperm.xlu0 %376, %v229
      %v378 = vpop.permute.xlu0 %377
      %379 = vset.pattern.permute.xlu0 11
      %380 = vperm.xlu0 %379, %v230
      %v381 = vpop.permute.xlu0 %380
      %vm382 = vcmp.eq.s32.totalorder %v378, %v232
      %vm383 = vcmp.eq.s32.totalorder %v381, %v232
      %v384 = vsel %vm382, 1, 0
      %v385 = vsel %vm383, 1, 0
      %v386 = vcvt.s32.f32 %v384
      %v387 = vcvt.s32.f32 %v385
      %v388 = vpack.c.bf16 %v387, %v386
      %389 = vset.pattern.permute.xlu0 12
      %390 = vperm.xlu0 %389, %v229
      %v391 = vpop.permute.xlu0 %390
      %392 = vset.pattern.permute.xlu0 12
      %393 = vperm.xlu0 %392, %v230
      %v394 = vpop.permute.xlu0 %393
      %vm395 = vcmp.eq.s32.totalorder %v391, %v232
      %vm396 = vcmp.eq.s32.totalorder %v394, %v232
      %v397 = vsel %vm395, 1, 0
      %v398 = vsel %vm396, 1, 0
      %v399 = vcvt.s32.f32 %v397
      %v400 = vcvt.s32.f32 %v398
      %v401 = vpack.c.bf16 %v400, %v399
      %402 = vset.pattern.permute.xlu0 13
      %403 = vperm.xlu0 %402, %v229
      %v404 = vpop.permute.xlu0 %403
      %405 = vset.pattern.permute.xlu0 13
      %406 = vperm.xlu0 %405, %v230
      %v407 = vpop.permute.xlu0 %406
      %vm408 = vcmp.eq.s32.totalorder %v404, %v232
      %vm409 = vcmp.eq.s32.totalorder %v407, %v232
      %v410 = vsel %vm408, 1, 0
      %v411 = vsel %vm409, 1, 0
      %v412 = vcvt.s32.f32 %v410
      %v413 = vcvt.s32.f32 %v411
      %v414 = vpack.c.bf16 %v413, %v412
      %415 = vset.pattern.permute.xlu0 14
      %416 = vperm.xlu0 %415, %v229
      %v417 = vpop.permute.xlu0 %416
      %418 = vset.pattern.permute.xlu0 14
      %419 = vperm.xlu0 %418, %v230
      %v420 = vpop.permute.xlu0 %419
      %vm421 = vcmp.eq.s32.totalorder %v417, %v232
      %vm422 = vcmp.eq.s32.totalorder %v420, %v232
      %v423 = vsel %vm421, 1, 0
      %v424 = vsel %vm422, 1, 0
      %v425 = vcvt.s32.f32 %v423
      %v426 = vcvt.s32.f32 %v424
      %v427 = vpack.c.bf16 %v426, %v425
      %428 = vset.pattern.permute.xlu0 15
      %429 = vperm.xlu0 %428, %v229
      %v430 = vpop.permute.xlu0 %429
      %431 = vset.pattern.permute.xlu0 15
      %432 = vperm.xlu0 %431, %v230
      %v433 = vpop.permute.xlu0 %432
      %vm434 = vcmp.eq.s32.totalorder %v430, %v232
      %vm435 = vcmp.eq.s32.totalorder %v433, %v232
      %v436 = vsel %vm434, 1, 0
      %v437 = vsel %vm435, 1, 0
      %v438 = vcvt.s32.f32 %v436
      %v439 = vcvt.s32.f32 %v437
      %v440 = vpack.c.bf16 %v439, %v438
      %v441 = vld [vmem:[%s1] sm:$0xff]
      %v442 = vld [vmem:[%s1 + $0x8] sm:$0xff]
      %v443 = vld [vmem:[%s1 + $0x10] sm:$0xff]
      %v444 = vld [vmem:[%s1 + $0x18] sm:$0xff]
      %v445 = vld [vmem:[%s1 + $0x20] sm:$0xff]
      %v446 = vld [vmem:[%s1 + $0x28] sm:$0xff]
      %v447 = vld [vmem:[%s1 + $0x30] sm:$0xff]
      %v448 = vld [vmem:[%s1 + $0x38] sm:$0xff]
      %v449 = vld [vmem:[%s1 + $0x40] sm:$0xff]
      %v450 = vld [vmem:[%s1 + $0x48] sm:$0xff]
      %v451 = vld [vmem:[%s1 + $0x50] sm:$0xff]
      %v452 = vld [vmem:[%s1 + $0x58] sm:$0xff]
      %v453 = vld [vmem:[%s1 + $0x60] sm:$0xff]
      %v454 = vld [vmem:[%s1 + $0x68] sm:$0xff]
      %v455 = vld [vmem:[%s1 + $0x70] sm:$0xff]
      %v456 = vld [vmem:[%s1 + $0x78] sm:$0xff]
      %v473 = vunpack.c.l.b16 %v441
      %v474 = vunpack.c.h.b16 %v441
      %v475 = vunpack.c.l.b16 %v442
      %v476 = vunpack.c.h.b16 %v442
      %v477 = vunpack.c.l.b16 %v443
      %v478 = vunpack.c.h.b16 %v443
      %v479 = vunpack.c.l.b16 %v444
      %v480 = vunpack.c.h.b16 %v444
      %v481 = vunpack.c.l.b16 %v445
      %v482 = vunpack.c.h.b16 %v445
      %v483 = vunpack.c.l.b16 %v446
      %v484 = vunpack.c.h.b16 %v446
      %v485 = vunpack.c.l.b16 %v447
      %v486 = vunpack.c.h.b16 %v447
      %v487 = vunpack.c.l.b16 %v448
      %v488 = vunpack.c.h.b16 %v448
      %v489 = vunpack.c.l.b16 %v449
      %v490 = vunpack.c.h.b16 %v449
      %v491 = vunpack.c.l.b16 %v450
      %v492 = vunpack.c.h.b16 %v450
      %v493 = vunpack.c.l.b16 %v451
      %v494 = vunpack.c.h.b16 %v451
      %v495 = vunpack.c.l.b16 %v452
      %v496 = vunpack.c.h.b16 %v452
      %v497 = vunpack.c.l.b16 %v453
      %v498 = vunpack.c.h.b16 %v453
      %v499 = vunpack.c.l.b16 %v454
      %v500 = vunpack.c.h.b16 %v454
      %v501 = vunpack.c.l.b16 %v455
      %v502 = vunpack.c.h.b16 %v455
      %v503 = vunpack.c.l.b16 %v456
      %v504 = vunpack.c.h.b16 %v456
      %v505 = vpack.c.b16 %v475, %v473
      %v506 = vpack.c.b16 %v476, %v474
      %v507 = vpack.c.b16 %v479, %v477
      %v508 = vpack.c.b16 %v480, %v478
      %v509 = vpack.c.b16 %v483, %v481
      %v510 = vpack.c.b16 %v484, %v482
      %v511 = vpack.c.b16 %v487, %v485
      %v512 = vpack.c.b16 %v488, %v486
      %v513 = vpack.c.b16 %v491, %v489
      %v514 = vpack.c.b16 %v492, %v490
      %v515 = vpack.c.b16 %v495, %v493
      %v516 = vpack.c.b16 %v496, %v494
      %v517 = vpack.c.b16 %v499, %v497
      %v518 = vpack.c.b16 %v500, %v498
      %v519 = vpack.c.b16 %v503, %v501
      %v520 = vpack.c.b16 %v504, %v502
      %537 = vmatprep.subr.bf16.mxu0 %v520
      %538 = vmatpush1.bf16.msra.mxu0 %v519
      %539 = vmatprep.subr.bf16.mxu0 %v518
      %540 = vmatpush1.bf16.msra.mxu0 %v517
      %541 = vmatprep.subr.bf16.mxu0 %v516
      %542 = vmatpush1.bf16.msra.mxu0 %v515
      %543 = vmatprep.subr.bf16.mxu0 %v514
      %544 = vmatpush1.bf16.msra.mxu0 %v513
      %545 = vmatprep.subr.bf16.mxu0 %v512
      %546 = vmatpush1.bf16.msra.mxu0 %v511
      %547 = vmatprep.subr.bf16.mxu0 %v510
      %548 = vmatpush1.bf16.msra.mxu0 %v509
      %549 = vmatprep.subr.bf16.mxu0 %v508
      %550 = vmatpush1.bf16.msra.mxu0 %v507
      %551 = vmatprep.subr.bf16.mxu0 %v506
      %552 = vmatpush1.bf16.msra.mxu0 %v505
      %553 = vmatprep.subr.bf16.mxu0 0
      %554 = vmatpush2.bf16.msra.mxu0 0
      %555 = vmatprep.subr.bf16.mxu0 0
      %556 = vmatpush2.bf16.msra.mxu0 0
      %557 = vmatprep.subr.bf16.mxu0 0
      %558 = vmatpush2.bf16.msra.mxu0 0
      %559 = vmatprep.subr.bf16.mxu0 0
      %560 = vmatpush2.bf16.msra.mxu0 0
      %561 = vmatprep.subr.bf16.mxu0 0
      %562 = vmatpush2.bf16.msra.mxu0 0
      %563 = vmatprep.subr.bf16.mxu0 0
      %564 = vmatpush2.bf16.msra.mxu0 0
      %565 = vmatprep.subr.bf16.mxu0 0
      %566 = vmatpush2.bf16.msra.mxu0 0
      %567 = vmatprep.subr.bf16.mxu0 0
      %568 = vmatpush2.bf16.msra.mxu0 0
      %569 = vmatprep.mubr.bf16.mxu0 0
      %570 = vmatmul.mubr.bf16.gmra.mxu0 %v245
      %v571 = vpop.f32.mrf.mxu0
      %v572 = vadd.f32 0.0, %v571
      %v573 = vpop.f32.mrf.mxu0
      %v574 = vpop.f32.mrf.mxu0
      %v575 = vadd.f32 0.0, %v574
      %v576 = vpop.f32.mrf.mxu0
      %577 = vmatprep.mubr.bf16.mxu0 0
      %578 = vmatmul.mubr.bf16.gmra.mxu0 %v258
      %v579 = vpop.f32.mrf.mxu0
      %v580 = vadd.f32 0.0, %v579
      %v581 = vpop.f32.mrf.mxu0
      %v582 = vadd.f32 0.0, %v581
      %v583 = vpop.f32.mrf.mxu0
      %v584 = vadd.f32 0.0, %v583
      %v585 = vpop.f32.mrf.mxu0
      %v586 = vadd.f32 0.0, %v585
      %587 = vmatprep.mubr.bf16.mxu0 0
      %588 = vmatmul.mubr.bf16.gmra.mxu0 %v271
      %v589 = vpop.f32.mrf.mxu0
      %v590 = vadd.f32 0.0, %v589
      %v591 = vpop.f32.mrf.mxu0
      %v592 = vadd.f32 0.0, %v591
      %v593 = vpop.f32.mrf.mxu0
      %v594 = vadd.f32 0.0, %v593
      %v595 = vpop.f32.mrf.mxu0
      %v596 = vadd.f32 0.0, %v595
      %597 = vmatprep.mubr.bf16.mxu0 0
      %598 = vmatmul.mubr.bf16.gmra.mxu0 %v284
      %v599 = vpop.f32.mrf.mxu0
      %v600 = vadd.f32 0.0, %v599
      %v601 = vpop.f32.mrf.mxu0
      %v602 = vadd.f32 0.0, %v601
      %v603 = vpop.f32.mrf.mxu0
      %v604 = vadd.f32 0.0, %v603
      %v605 = vpop.f32.mrf.mxu0
      %v606 = vadd.f32 0.0, %v605
      %607 = vmatprep.mubr.bf16.mxu0 0
      %608 = vmatmul.mubr.bf16.gmra.mxu0 %v297
      %v609 = vpop.f32.mrf.mxu0
      %v610 = vadd.f32 0.0, %v609
      %v611 = vpop.f32.mrf.mxu0
      %v612 = vadd.f32 0.0, %v611
      %v613 = vpop.f32.mrf.mxu0
      %v614 = vadd.f32 0.0, %v613
      %v615 = vpop.f32.mrf.mxu0
      %v616 = vadd.f32 0.0, %v615
      %617 = vmatprep.mubr.bf16.mxu0 0
      %618 = vmatmul.mubr.bf16.gmra.mxu0 %v310
      %v619 = vpop.f32.mrf.mxu0
      %v620 = vadd.f32 0.0, %v619
      %v621 = vpop.f32.mrf.mxu0
      %v622 = vadd.f32 0.0, %v621
      %v623 = vpop.f32.mrf.mxu0
      %v624 = vadd.f32 0.0, %v623
      %v625 = vpop.f32.mrf.mxu0
      %v626 = vadd.f32 0.0, %v625
      %627 = vmatprep.mubr.bf16.mxu0 0
      %628 = vmatmul.mubr.bf16.gmra.mxu0 %v323
      %v629 = vpop.f32.mrf.mxu0
      %v630 = vadd.f32 0.0, %v629
      %v631 = vpop.f32.mrf.mxu0
      %v632 = vadd.f32 0.0, %v631
      %v633 = vpop.f32.mrf.mxu0
      %v634 = vadd.f32 0.0, %v633
      %v635 = vpop.f32.mrf.mxu0
      %v636 = vadd.f32 0.0, %v635
      %637 = vmatprep.mubr.bf16.mxu0 0
      %638 = vmatmul.mubr.bf16.gmra.mxu0 %v336
      %v639 = vpop.f32.mrf.mxu0
      %v640 = vadd.f32 0.0, %v639
      %v641 = vpop.f32.mrf.mxu0
      %v642 = vadd.f32 0.0, %v641
      %v643 = vpop.f32.mrf.mxu0
      %v644 = vadd.f32 0.0, %v643
      %v645 = vpop.f32.mrf.mxu0
      %v646 = vadd.f32 0.0, %v645
      %647 = vmatprep.mubr.bf16.mxu0 0
      %648 = vmatmul.mubr.bf16.gmra.mxu0 %v349
      %v649 = vpop.f32.mrf.mxu0
      %v650 = vadd.f32 0.0, %v649
      %v651 = vpop.f32.mrf.mxu0
      %v652 = vadd.f32 0.0, %v651
      %v653 = vpop.f32.mrf.mxu0
      %v654 = vadd.f32 0.0, %v653
      %v655 = vpop.f32.mrf.mxu0
      %v656 = vadd.f32 0.0, %v655
      %657 = vmatprep.mubr.bf16.mxu0 0
      %658 = vmatmul.mubr.bf16.gmra.mxu0 %v362
      %v659 = vpop.f32.mrf.mxu0
      %v660 = vadd.f32 0.0, %v659
      %v661 = vpop.f32.mrf.mxu0
      %v662 = vadd.f32 0.0, %v661
      %v663 = vpop.f32.mrf.mxu0
      %v664 = vadd.f32 0.0, %v663
      %v665 = vpop.f32.mrf.mxu0
      %v666 = vadd.f32 0.0, %v665
      %667 = vmatprep.mubr.bf16.mxu0 0
      %668 = vmatmul.mubr.bf16.gmra.mxu0 %v375
      %v669 = vpop.f32.mrf.mxu0
      %v670 = vadd.f32 0.0, %v669
      %v671 = vpop.f32.mrf.mxu0
      %v672 = vadd.f32 0.0, %v671
      %v673 = vpop.f32.mrf.mxu0
      %v674 = vadd.f32 0.0, %v673
      %v675 = vpop.f32.mrf.mxu0
      %v676 = vadd.f32 0.0, %v675
      %677 = vmatprep.mubr.bf16.mxu0 0
      %678 = vmatmul.mubr.bf16.gmra.mxu0 %v388
      %v679 = vpop.f32.mrf.mxu0
      %v680 = vadd.f32 0.0, %v679
      %v681 = vpop.f32.mrf.mxu0
      %v682 = vadd.f32 0.0, %v681
      %v683 = vpop.f32.mrf.mxu0
      %v684 = vadd.f32 0.0, %v683
      %v685 = vpop.f32.mrf.mxu0
      %v686 = vadd.f32 0.0, %v685
      %687 = vmatprep.mubr.bf16.mxu0 0
      %688 = vmatmul.mubr.bf16.gmra.mxu0 %v401
      %v689 = vpop.f32.mrf.mxu0
      %v690 = vadd.f32 0.0, %v689
      %v691 = vpop.f32.mrf.mxu0
      %v692 = vadd.f32 0.0, %v691
      %v693 = vpop.f32.mrf.mxu0
      %v694 = vadd.f32 0.0, %v693
      %v695 = vpop.f32.mrf.mxu0
      %v696 = vadd.f32 0.0, %v695
      %697 = vmatprep.mubr.bf16.mxu0 0
      %698 = vmatmul.mubr.bf16.gmra.mxu0 %v414
      %v699 = vpop.f32.mrf.mxu0
      %v700 = vadd.f32 0.0, %v699
      %v701 = vpop.f32.mrf.mxu0
      %v702 = vadd.f32 0.0, %v701
      %v703 = vpop.f32.mrf.mxu0
      %v704 = vadd.f32 0.0, %v703
      %v705 = vpop.f32.mrf.mxu0
      %v706 = vadd.f32 0.0, %v705
      %707 = vmatprep.mubr.bf16.mxu0 0
      %708 = vmatmul.mubr.bf16.gmra.mxu0 %v427
      %v709 = vpop.f32.mrf.mxu0
      %v710 = vadd.f32 0.0, %v709
      %v711 = vpop.f32.mrf.mxu0
      %v712 = vadd.f32 0.0, %v711
      %v713 = vpop.f32.mrf.mxu0
      %v714 = vadd.f32 0.0, %v713
      %v715 = vpop.f32.mrf.mxu0
      %v716 = vadd.f32 0.0, %v715
      %717 = vmatprep.mubr.bf16.mxu0 0
      %718 = vmatmul.mubr.bf16.gmra.mxu0 %v440
      %v719 = vpop.f32.mrf.mxu0
      %v720 = vadd.f32 0.0, %v719
      %v721 = vpop.f32.mrf.mxu0
      %v722 = vadd.f32 0.0, %v721
      %v723 = vpop.f32.mrf.mxu0
      %v724 = vadd.f32 0.0, %v723
      %v725 = vpop.f32.mrf.mxu0
      %v726 = vadd.f32 0.0, %v725
      %727 = vdwg.mxu0
      %756 = vrot.lane.b32.xlu0 %v580, 112
      %v757 = vpop.permute.xlu0 %756
      %758 = vrot.lane.b32.xlu0 %v584, 112
      %v759 = vpop.permute.xlu0 %758
      %760 = vrot.lane.b32.xlu0 %v590, 112
      %v761 = vpop.permute.xlu0 %760
      %762 = vrot.lane.b32.xlu0 %v594, 112
      %v763 = vpop.permute.xlu0 %762
      %764 = vrot.lane.b32.xlu0 %v600, 112
      %v765 = vpop.permute.xlu0 %764
      %766 = vrot.lane.b32.xlu0 %v604, 112
      %v767 = vpop.permute.xlu0 %766
      %768 = vrot.lane.b32.xlu0 %v610, 112
      %v769 = vpop.permute.xlu0 %768
      %770 = vrot.lane.b32.xlu0 %v614, 112
      %v771 = vpop.permute.xlu0 %770
      %772 = vrot.lane.b32.xlu0 %v620, 112
      %v773 = vpop.permute.xlu0 %772
      %774 = vrot.lane.b32.xlu0 %v624, 112
      %v775 = vpop.permute.xlu0 %774
      %776 = vrot.lane.b32.xlu0 %v630, 112
      %v777 = vpop.permute.xlu0 %776
      %778 = vrot.lane.b32.xlu0 %v634, 112
      %v779 = vpop.permute.xlu0 %778
      %780 = vrot.lane.b32.xlu0 %v640, 112
      %v781 = vpop.permute.xlu0 %780
      %782 = vrot.lane.b32.xlu0 %v644, 112
      %v783 = vpop.permute.xlu0 %782
      %784 = vrot.lane.b32.xlu0 %v650, 112
      %v785 = vpop.permute.xlu0 %784
      %786 = vrot.lane.b32.xlu0 %v654, 112
      %v787 = vpop.permute.xlu0 %786
      %788 = vrot.lane.b32.xlu0 %v660, 112
      %v789 = vpop.permute.xlu0 %788
      %790 = vrot.lane.b32.xlu0 %v664, 112
      %v791 = vpop.permute.xlu0 %790
      %792 = vrot.lane.b32.xlu0 %v670, 112
      %v793 = vpop.permute.xlu0 %792
      %794 = vrot.lane.b32.xlu0 %v674, 112
      %v795 = vpop.permute.xlu0 %794
      %796 = vrot.lane.b32.xlu0 %v680, 112
      %v797 = vpop.permute.xlu0 %796
      %798 = vrot.lane.b32.xlu0 %v684, 112
      %v799 = vpop.permute.xlu0 %798
      %800 = vrot.lane.b32.xlu0 %v690, 112
      %v801 = vpop.permute.xlu0 %800
      %802 = vrot.lane.b32.xlu0 %v694, 112
      %v803 = vpop.permute.xlu0 %802
      %804 = vrot.lane.b32.xlu0 %v700, 112
      %v805 = vpop.permute.xlu0 %804
      %806 = vrot.lane.b32.xlu0 %v704, 112
      %v807 = vpop.permute.xlu0 %806
      %808 = vrot.lane.b32.xlu0 %v710, 112
      %v809 = vpop.permute.xlu0 %808
      %810 = vrot.lane.b32.xlu0 %v714, 112
      %v811 = vpop.permute.xlu0 %810
      %v840 = vadd.f32 %v572, %v757
      %v841 = vadd.f32 %v575, %v759
      %v842 = vadd.f32 %v580, %v761
      %v843 = vadd.f32 %v584, %v763
      %v844 = vadd.f32 %v590, %v765
      %v845 = vadd.f32 %v594, %v767
      %v846 = vadd.f32 %v600, %v769
      %v847 = vadd.f32 %v604, %v771
      %v848 = vadd.f32 %v610, %v773
      %v849 = vadd.f32 %v614, %v775
      %v850 = vadd.f32 %v620, %v777
      %v851 = vadd.f32 %v624, %v779
      %v852 = vadd.f32 %v630, %v781
      %v853 = vadd.f32 %v634, %v783
      %v854 = vadd.f32 %v640, %v785
      %v855 = vadd.f32 %v644, %v787
      %v856 = vadd.f32 %v650, %v789
      %v857 = vadd.f32 %v654, %v791
      %v858 = vadd.f32 %v660, %v793
      %v859 = vadd.f32 %v664, %v795
      %v860 = vadd.f32 %v670, %v797
      %v861 = vadd.f32 %v674, %v799
      %v862 = vadd.f32 %v680, %v801
      %v863 = vadd.f32 %v684, %v803
      %v864 = vadd.f32 %v690, %v805
      %v865 = vadd.f32 %v694, %v807
      %v866 = vadd.f32 %v700, %v809
      %v867 = vadd.f32 %v704, %v811
      %870 = vrot.lane.b32.xlu0 %v590, 96
      %v871 = vpop.permute.xlu0 %870
      %872 = vrot.lane.b32.xlu0 %v594, 96
      %v873 = vpop.permute.xlu0 %872
      %874 = vrot.lane.b32.xlu0 %v600, 96
      %v875 = vpop.permute.xlu0 %874
      %876 = vrot.lane.b32.xlu0 %v604, 96
      %v877 = vpop.permute.xlu0 %876
      %878 = vrot.lane.b32.xlu0 %v610, 96
      %v879 = vpop.permute.xlu0 %878
      %880 = vrot.lane.b32.xlu0 %v614, 96
      %v881 = vpop.permute.xlu0 %880
      %882 = vrot.lane.b32.xlu0 %v620, 96
      %v883 = vpop.permute.xlu0 %882
      %884 = vrot.lane.b32.xlu0 %v624, 96
      %v885 = vpop.permute.xlu0 %884
      %886 = vrot.lane.b32.xlu0 %v630, 96
      %v887 = vpop.permute.xlu0 %886
      %888 = vrot.lane.b32.xlu0 %v634, 96
      %v889 = vpop.permute.xlu0 %888
      %890 = vrot.lane.b32.xlu0 %v640, 96
      %v891 = vpop.permute.xlu0 %890
      %892 = vrot.lane.b32.xlu0 %v644, 96
      %v893 = vpop.permute.xlu0 %892
      %894 = vrot.lane.b32.xlu0 %v650, 96
      %v895 = vpop.permute.xlu0 %894
      %896 = vrot.lane.b32.xlu0 %v654, 96
      %v897 = vpop.permute.xlu0 %896
      %898 = vrot.lane.b32.xlu0 %v660, 96
      %v899 = vpop.permute.xlu0 %898
      %900 = vrot.lane.b32.xlu0 %v664, 96
      %v901 = vpop.permute.xlu0 %900
      %902 = vrot.lane.b32.xlu0 %v670, 96
      %v903 = vpop.permute.xlu0 %902
      %904 = vrot.lane.b32.xlu0 %v674, 96
      %v905 = vpop.permute.xlu0 %904
      %906 = vrot.lane.b32.xlu0 %v680, 96
      %v907 = vpop.permute.xlu0 %906
      %908 = vrot.lane.b32.xlu0 %v684, 96
      %v909 = vpop.permute.xlu0 %908
      %910 = vrot.lane.b32.xlu0 %v690, 96
      %v911 = vpop.permute.xlu0 %910
      %912 = vrot.lane.b32.xlu0 %v694, 96
      %v913 = vpop.permute.xlu0 %912
      %914 = vrot.lane.b32.xlu0 %v700, 96
      %v915 = vpop.permute.xlu0 %914
      %916 = vrot.lane.b32.xlu0 %v704, 96
      %v917 = vpop.permute.xlu0 %916
      %918 = vrot.lane.b32.xlu0 %v710, 96
      %v919 = vpop.permute.xlu0 %918
      %920 = vrot.lane.b32.xlu0 %v714, 96
      %v921 = vpop.permute.xlu0 %920
      %922 = vrot.lane.b32.xlu0 %v720, 96
      %v923 = vpop.permute.xlu0 %922
      %924 = vrot.lane.b32.xlu0 %v724, 96
      %v925 = vpop.permute.xlu0 %924
      %v954 = vadd.f32 %v840, %v871
      %v955 = vadd.f32 %v841, %v873
      %v956 = vadd.f32 %v842, %v875
      %v957 = vadd.f32 %v843, %v877
      %v958 = vadd.f32 %v844, %v879
      %v959 = vadd.f32 %v845, %v881
      %v960 = vadd.f32 %v846, %v883
      %v961 = vadd.f32 %v847, %v885
      %v962 = vadd.f32 %v848, %v887
      %v963 = vadd.f32 %v849, %v889
      %v964 = vadd.f32 %v850, %v891
      %v965 = vadd.f32 %v851, %v893
      %v966 = vadd.f32 %v852, %v895
      %v967 = vadd.f32 %v853, %v897
      %v968 = vadd.f32 %v854, %v899
      %v969 = vadd.f32 %v855, %v901
      %v970 = vadd.f32 %v856, %v903
      %v971 = vadd.f32 %v857, %v905
      %v972 = vadd.f32 %v858, %v907
      %v973 = vadd.f32 %v859, %v909
      %v974 = vadd.f32 %v860, %v911
      %v975 = vadd.f32 %v861, %v913
      %v976 = vadd.f32 %v862, %v915
      %v977 = vadd.f32 %v863, %v917
      %v978 = vadd.f32 %v864, %v919
      %v979 = vadd.f32 %v865, %v921
      %v980 = vadd.f32 %v866, %v923
      %v981 = vadd.f32 %v867, %v925
      %vm982 = vcmask 130048
      %v983 = vsel %vm982, %v954, -inf
      %v984 = vsel %vm982, %v956, -inf
      %v985 = vsel %vm982, %v958, -inf
      %v986 = vmax.f32 %v983, %v985
      %v987 = vsel %vm982, %v960, -inf
      %v988 = vmax.f32 %v984, %v987
      %v989 = vsel %vm982, %v962, -inf
      %v990 = vmax.f32 %v986, %v989
      %v991 = vsel %vm982, %v964, -inf
      %v992 = vmax.f32 %v988, %v991
      %v993 = vsel %vm982, %v966, -inf
      %v994 = vmax.f32 %v990, %v993
      %v995 = vsel %vm982, %v968, -inf
      %v996 = vmax.f32 %v992, %v995
      %v997 = vsel %vm982, %v970, -inf
      %v998 = vmax.f32 %v994, %v997
      %v999 = vsel %vm982, %v972, -inf
      %v1000 = vmax.f32 %v996, %v999
      %v1001 = vsel %vm982, %v974, -inf
      %v1002 = vmax.f32 %v998, %v1001
      %v1003 = vsel %vm982, %v976, -inf
      %v1004 = vmax.f32 %v1000, %v1003
      %v1005 = vsel %vm982, %v978, -inf
      %v1006 = vmax.f32 %v1002, %v1005
      %v1007 = vsel %vm982, %v980, -inf
      %v1008 = vmax.f32 %v1004, %v1007
      %v1009 = vmax.f32 %v1006, %v1008
      %v1010 = vsel %vm982, %v955, -inf
      %v1011 = vsel %vm982, %v957, -inf
      %v1012 = vsel %vm982, %v959, -inf
      %v1013 = vmax.f32 %v1010, %v1012
      %v1014 = vsel %vm982, %v961, -inf
      %v1015 = vmax.f32 %v1011, %v1014
      %v1016 = vsel %vm982, %v963, -inf
      %v1017 = vmax.f32 %v1013, %v1016
      %v1018 = vsel %vm982, %v965, -inf
      %v1019 = vmax.f32 %v1015, %v1018
      %v1020 = vsel %vm982, %v967, -inf
      %v1021 = vmax.f32 %v1017, %v1020
      %v1022 = vsel %vm982, %v969, -inf
      %v1023 = vmax.f32 %v1019, %v1022
      %v1024 = vsel %vm982, %v971, -inf
      %v1025 = vmax.f32 %v1021, %v1024
      %v1026 = vsel %vm982, %v973, -inf
      %v1027 = vmax.f32 %v1023, %v1026
      %v1028 = vsel %vm982, %v975, -inf
      %v1029 = vmax.f32 %v1025, %v1028
      %v1030 = vsel %vm982, %v977, -inf
      %v1031 = vmax.f32 %v1027, %v1030
      %v1032 = vsel %vm982, %v979, -inf
      %v1033 = vmax.f32 %v1029, %v1032
      %v1034 = vsel %vm982, %v981, -inf
      %v1035 = vmax.f32 %v1031, %v1034
      %v1036 = vmax.f32 %v1033, %v1035
      %v1037 = vld [vmem:[%s2] sm:$0x1]
      %v1039 = vlaneseq
      %v1040 = vshrl.u32 %v1039, 7
      %v1041 = vsub.s32 0, %v1040
      %v1042 = vrot.slane %v1037, %v1041
      %v1044 = vadd.f32 %v1009, %v1042
      %v1045 = vadd.f32 %v1036, %v1042
      %v1046 = vmax.f32 %v1044, 0.0
      %v1047 = vmax.f32 %v1045, 0.0
      %1048 = vrot.lane.b32.xlu0 %v600, 80
      %v1049 = vpop.permute.xlu0 %1048
      %1050 = vrot.lane.b32.xlu0 %v604, 80
      %v1051 = vpop.permute.xlu0 %1050
      %1052 = vrot.lane.b32.xlu0 %v610, 80
      %v1053 = vpop.permute.xlu0 %1052
      %1054 = vrot.lane.b32.xlu0 %v614, 80
      %v1055 = vpop.permute.xlu0 %1054
      %1056 = vrot.lane.b32.xlu0 %v620, 80
      %v1057 = vpop.permute.xlu0 %1056
      %1058 = vrot.lane.b32.xlu0 %v624, 80
      %v1059 = vpop.permute.xlu0 %1058
      %1060 = vrot.lane.b32.xlu0 %v630, 80
      %v1061 = vpop.permute.xlu0 %1060
      %1062 = vrot.lane.b32.xlu0 %v634, 80
      %v1063 = vpop.permute.xlu0 %1062
      %1064 = vrot.lane.b32.xlu0 %v640, 80
      %v1065 = vpop.permute.xlu0 %1064
      %1066 = vrot.lane.b32.xlu0 %v644, 80
      %v1067 = vpop.permute.xlu0 %1066
      %1068 = vrot.lane.b32.xlu0 %v650, 80
      %v1069 = vpop.permute.xlu0 %1068
      %1070 = vrot.lane.b32.xlu0 %v654, 80
      %v1071 = vpop.permute.xlu0 %1070
      %1072 = vrot.lane.b32.xlu0 %v660, 80
      %v1073 = vpop.permute.xlu0 %1072
      %1074 = vrot.lane.b32.xlu0 %v664, 80
      %v1075 = vpop.permute.xlu0 %1074
      %1076 = vrot.lane.b32.xlu0 %v670, 80
      %v1077 = vpop.permute.xlu0 %1076
      %1078 = vrot.lane.b32.xlu0 %v674, 80
      %v1079 = vpop.permute.xlu0 %1078
      %1080 = vrot.lane.b32.xlu0 %v680, 80
      %v1081 = vpop.permute.xlu0 %1080
      %1082 = vrot.lane.b32.xlu0 %v684, 80
      %v1083 = vpop.permute.xlu0 %1082
      %1084 = vrot.lane.b32.xlu0 %v690, 80
      %v1085 = vpop.permute.xlu0 %1084
      %1086 = vrot.lane.b32.xlu0 %v694, 80
      %v1087 = vpop.permute.xlu0 %1086
      %1088 = vrot.lane.b32.xlu0 %v700, 80
      %v1089 = vpop.permute.xlu0 %1088
      %1090 = vrot.lane.b32.xlu0 %v704, 80
      %v1091 = vpop.permute.xlu0 %1090
      %1092 = vrot.lane.b32.xlu0 %v710, 80
      %v1093 = vpop.permute.xlu0 %1092
      %1094 = vrot.lane.b32.xlu0 %v714, 80
      %v1095 = vpop.permute.xlu0 %1094
      %1096 = vrot.lane.b32.xlu0 %v720, 80
      %v1097 = vpop.permute.xlu0 %1096
      %1098 = vrot.lane.b32.xlu0 %v724, 80
      %v1099 = vpop.permute.xlu0 %1098
      %v1126 = vadd.f32 %v954, %v1049
      %v1127 = vadd.f32 %v955, %v1051
      %v1128 = vadd.f32 %v956, %v1053
      %v1129 = vadd.f32 %v957, %v1055
      %v1130 = vadd.f32 %v958, %v1057
      %v1131 = vadd.f32 %v959, %v1059
      %v1132 = vadd.f32 %v960, %v1061
      %v1133 = vadd.f32 %v961, %v1063
      %v1134 = vadd.f32 %v962, %v1065
      %v1135 = vadd.f32 %v963, %v1067
      %v1136 = vadd.f32 %v964, %v1069
      %v1137 = vadd.f32 %v965, %v1071
      %v1138 = vadd.f32 %v966, %v1073
      %v1139 = vadd.f32 %v967, %v1075
      %v1140 = vadd.f32 %v968, %v1077
      %v1141 = vadd.f32 %v969, %v1079
      %v1142 = vadd.f32 %v970, %v1081
      %v1143 = vadd.f32 %v971, %v1083
      %v1144 = vadd.f32 %v972, %v1085
      %v1145 = vadd.f32 %v973, %v1087
      %v1146 = vadd.f32 %v974, %v1089
      %v1147 = vadd.f32 %v975, %v1091
      %v1148 = vadd.f32 %v976, %v1093
      %v1149 = vadd.f32 %v977, %v1095
      %v1150 = vadd.f32 %v978, %v1097
      %v1151 = vadd.f32 %v979, %v1099
      %vm1152 = vcmask 523648
      %v1153 = vsel %vm1152, %v1126, -inf
      %v1154 = vsel %vm1152, %v1128, -inf
      %v1155 = vsel %vm1152, %v1130, -inf
      %v1156 = vmax.f32 %v1153, %v1155
      %v1157 = vsel %vm1152, %v1132, -inf
      %v1158 = vmax.f32 %v1154, %v1157
      %v1159 = vsel %vm1152, %v1134, -inf
      %v1160 = vmax.f32 %v1156, %v1159
      %v1161 = vsel %vm1152, %v1136, -inf
      %v1162 = vmax.f32 %v1158, %v1161
      %v1163 = vsel %vm1152, %v1138, -inf
      %v1164 = vmax.f32 %v1160, %v1163
      %v1165 = vsel %vm1152, %v1140, -inf
      %v1166 = vmax.f32 %v1162, %v1165
      %v1167 = vsel %vm1152, %v1142, -inf
      %v1168 = vmax.f32 %v1164, %v1167
      %v1169 = vsel %vm1152, %v1144, -inf
      %v1170 = vmax.f32 %v1166, %v1169
      %v1171 = vsel %vm1152, %v1146, -inf
      %v1172 = vmax.f32 %v1168, %v1171
      %v1173 = vsel %vm1152, %v1148, -inf
      %v1174 = vmax.f32 %v1170, %v1173
      %v1175 = vsel %vm1152, %v1150, -inf
      %v1176 = vmax.f32 %v1172, %v1175
      %v1177 = vmax.f32 %v1176, %v1174
      %v1178 = vsel %vm1152, %v1127, -inf
      %v1179 = vsel %vm1152, %v1129, -inf
      %v1180 = vsel %vm1152, %v1131, -inf
      %v1181 = vmax.f32 %v1178, %v1180
      %v1182 = vsel %vm1152, %v1133, -inf
      %v1183 = vmax.f32 %v1179, %v1182
      %v1184 = vsel %vm1152, %v1135, -inf
      %v1185 = vmax.f32 %v1181, %v1184
      %v1186 = vsel %vm1152, %v1137, -inf
      %v1187 = vmax.f32 %v1183, %v1186
      %v1188 = vsel %vm1152, %v1139, -inf
      %v1189 = vmax.f32 %v1185, %v1188
      %v1190 = vsel %vm1152, %v1141, -inf
      %v1191 = vmax.f32 %v1187, %v1190
      %v1192 = vsel %vm1152, %v1143, -inf
      %v1193 = vmax.f32 %v1189, %v1192
      %v1194 = vsel %vm1152, %v1145, -inf
      %v1195 = vmax.f32 %v1191, %v1194
      %v1196 = vsel %vm1152, %v1147, -inf
      %v1197 = vmax.f32 %v1193, %v1196
      %v1198 = vsel %vm1152, %v1149, -inf
      %v1199 = vmax.f32 %v1195, %v1198
      %v1200 = vsel %vm1152, %v1151, -inf
      %v1201 = vmax.f32 %v1197, %v1200
      %v1202 = vmax.f32 %v1201, %v1199
      %1203 = vrot.lane.b32.xlu0 %v1042, 32
      %v1204 = vpop.permute.xlu0 %1203
      %v1206 = vadd.f32 %v1177, %v1204
      %v1207 = vadd.f32 %v1202, %v1204
      %v1208 = vmax.f32 %v1206, 0.0
      %v1209 = vmax.f32 %v1207, 0.0
      %1234 = vrot.lane.b32.xlu0 %v582, 112
      %v1235 = vpop.permute.xlu0 %1234
      %1236 = vrot.lane.b32.xlu0 %v586, 112
      %v1237 = vpop.permute.xlu0 %1236
      %1238 = vrot.lane.b32.xlu0 %v592, 112
      %v1239 = vpop.permute.xlu0 %1238
      %1240 = vrot.lane.b32.xlu0 %v596, 112
      %v1241 = vpop.permute.xlu0 %1240
      %1242 = vrot.lane.b32.xlu0 %v602, 112
      %v1243 = vpop.permute.xlu0 %1242
      %1244 = vrot.lane.b32.xlu0 %v606, 112
      %v1245 = vpop.permute.xlu0 %1244
      %1246 = vrot.lane.b32.xlu0 %v612, 112
      %v1247 = vpop.permute.xlu0 %1246
      %1248 = vrot.lane.b32.xlu0 %v616, 112
      %v1249 = vpop.permute.xlu0 %1248
      %1250 = vrot.lane.b32.xlu0 %v622, 112
      %v1251 = vpop.permute.xlu0 %1250
      %1252 = vrot.lane.b32.xlu0 %v626, 112
      %v1253 = vpop.permute.xlu0 %1252
      %1254 = vrot.lane.b32.xlu0 %v632, 112
      %v1255 = vpop.permute.xlu0 %1254
      %1256 = vrot.lane.b32.xlu0 %v636, 112
      %v1257 = vpop.permute.xlu0 %1256
      %1258 = vrot.lane.b32.xlu0 %v642, 112
      %v1259 = vpop.permute.xlu0 %1258
      %1260 = vrot.lane.b32.xlu0 %v646, 112
      %v1261 = vpop.permute.xlu0 %1260
      %1262 = vrot.lane.b32.xlu0 %v652, 112
      %v1263 = vpop.permute.xlu0 %1262
      %1264 = vrot.lane.b32.xlu0 %v656, 112
      %v1265 = vpop.permute.xlu0 %1264
      %1266 = vrot.lane.b32.xlu0 %v662, 112
      %v1267 = vpop.permute.xlu0 %1266
      %1268 = vrot.lane.b32.xlu0 %v666, 112
      %v1269 = vpop.permute.xlu0 %1268
      %1270 = vrot.lane.b32.xlu0 %v672, 112
      %v1271 = vpop.permute.xlu0 %1270
      %1272 = vrot.lane.b32.xlu0 %v676, 112
      %v1273 = vpop.permute.xlu0 %1272
      %1274 = vrot.lane.b32.xlu0 %v682, 112
      %v1275 = vpop.permute.xlu0 %1274
      %1276 = vrot.lane.b32.xlu0 %v686, 112
      %v1277 = vpop.permute.xlu0 %1276
      %1278 = vrot.lane.b32.xlu0 %v692, 112
      %v1279 = vpop.permute.xlu0 %1278
      %1280 = vrot.lane.b32.xlu0 %v696, 112
      %v1281 = vpop.permute.xlu0 %1280
      %v1306 = vadd.f32 %v572, %v1235
      %v1307 = vadd.f32 %v575, %v1237
      %v1308 = vadd.f32 %v580, %v1239
      %v1309 = vadd.f32 %v584, %v1241
      %v1310 = vadd.f32 %v590, %v1243
      %v1311 = vadd.f32 %v594, %v1245
      %v1312 = vadd.f32 %v600, %v1247
      %v1313 = vadd.f32 %v604, %v1249
      %v1314 = vadd.f32 %v610, %v1251
      %v1315 = vadd.f32 %v614, %v1253
      %v1316 = vadd.f32 %v620, %v1255
      %v1317 = vadd.f32 %v624, %v1257
      %v1318 = vadd.f32 %v630, %v1259
      %v1319 = vadd.f32 %v634, %v1261
      %v1320 = vadd.f32 %v640, %v1263
      %v1321 = vadd.f32 %v644, %v1265
      %v1322 = vadd.f32 %v650, %v1267
      %v1323 = vadd.f32 %v654, %v1269
      %v1324 = vadd.f32 %v660, %v1271
      %v1325 = vadd.f32 %v664, %v1273
      %v1326 = vadd.f32 %v670, %v1275
      %v1327 = vadd.f32 %v674, %v1277
      %v1328 = vadd.f32 %v680, %v1279
      %v1329 = vadd.f32 %v684, %v1281
      %1332 = vrot.lane.b32.xlu0 %v592, 96
      %v1333 = vpop.permute.xlu0 %1332
      %1334 = vrot.lane.b32.xlu0 %v596, 96
      %v1335 = vpop.permute.xlu0 %1334
      %1336 = vrot.lane.b32.xlu0 %v602, 96
      %v1337 = vpop.permute.xlu0 %1336
      %1338 = vrot.lane.b32.xlu0 %v606, 96
      %v1339 = vpop.permute.xlu0 %1338
      %1340 = vrot.lane.b32.xlu0 %v612, 96
      %v1341 = vpop.permute.xlu0 %1340
      %1342 = vrot.lane.b32.xlu0 %v616, 96
      %v1343 = vpop.permute.xlu0 %1342
      %1344 = vrot.lane.b32.xlu0 %v622, 96
      %v1345 = vpop.permute.xlu0 %1344
      %1346 = vrot.lane.b32.xlu0 %v626, 96
      %v1347 = vpop.permute.xlu0 %1346
      %1348 = vrot.lane.b32.xlu0 %v632, 96
      %v1349 = vpop.permute.xlu0 %1348
      %1350 = vrot.lane.b32.xlu0 %v636, 96
      %v1351 = vpop.permute.xlu0 %1350
      %1352 = vrot.lane.b32.xlu0 %v642, 96
      %v1353 = vpop.permute.xlu0 %1352
      %1354 = vrot.lane.b32.xlu0 %v646, 96
      %v1355 = vpop.permute.xlu0 %1354
      %1356 = vrot.lane.b32.xlu0 %v652, 96
      %v1357 = vpop.permute.xlu0 %1356
      %1358 = vrot.lane.b32.xlu0 %v656, 96
      %v1359 = vpop.permute.xlu0 %1358
      %1360 = vrot.lane.b32.xlu0 %v662, 96
      %v1361 = vpop.permute.xlu0 %1360
      %1362 = vrot.lane.b32.xlu0 %v666, 96
      %v1363 = vpop.permute.xlu0 %1362
      %1364 = vrot.lane.b32.xlu0 %v672, 96
      %v1365 = vpop.permute.xlu0 %1364
      %1366 = vrot.lane.b32.xlu0 %v676, 96
      %v1367 = vpop.permute.xlu0 %1366
      %1368 = vrot.lane.b32.xlu0 %v682, 96
      %v1369 = vpop.permute.xlu0 %1368
      %1370 = vrot.lane.b32.xlu0 %v686, 96
      %v1371 = vpop.permute.xlu0 %1370
      %1372 = vrot.lane.b32.xlu0 %v692, 96
      %v1373 = vpop.permute.xlu0 %1372
      %1374 = vrot.lane.b32.xlu0 %v696, 96
      %v1375 = vpop.permute.xlu0 %1374
      %1376 = vrot.lane.b32.xlu0 %v702, 96
      %v1377 = vpop.permute.xlu0 %1376
      %1378 = vrot.lane.b32.xlu0 %v706, 96
      %v1379 = vpop.permute.xlu0 %1378
      %v1404 = vadd.f32 %v1306, %v1333
      %v1405 = vadd.f32 %v1307, %v1335
      %v1406 = vadd.f32 %v1308, %v1337
      %v1407 = vadd.f32 %v1309, %v1339
      %v1408 = vadd.f32 %v1310, %v1341
      %v1409 = vadd.f32 %v1311, %v1343
      %v1410 = vadd.f32 %v1312, %v1345
      %v1411 = vadd.f32 %v1313, %v1347
      %v1412 = vadd.f32 %v1314, %v1349
      %v1413 = vadd.f32 %v1315, %v1351
      %v1414 = vadd.f32 %v1316, %v1353
      %v1415 = vadd.f32 %v1317, %v1355
      %v1416 = vadd.f32 %v1318, %v1357
      %v1417 = vadd.f32 %v1319, %v1359
      %v1418 = vadd.f32 %v1320, %v1361
      %v1419 = vadd.f32 %v1321, %v1363
      %v1420 = vadd.f32 %v1322, %v1365
      %v1421 = vadd.f32 %v1323, %v1367
      %v1422 = vadd.f32 %v1324, %v1369
      %v1423 = vadd.f32 %v1325, %v1371
      %v1424 = vadd.f32 %v1326, %v1373
      %v1425 = vadd.f32 %v1327, %v1375
      %v1426 = vadd.f32 %v1328, %v1377
      %v1427 = vadd.f32 %v1329, %v1379
      %1430 = vrot.lane.b32.xlu0 %v602, 80
      %v1431 = vpop.permute.xlu0 %1430
      %1432 = vrot.lane.b32.xlu0 %v606, 80
      %v1433 = vpop.permute.xlu0 %1432
      %1434 = vrot.lane.b32.xlu0 %v612, 80
      %v1435 = vpop.permute.xlu0 %1434
      %1436 = vrot.lane.b32.xlu0 %v616, 80
      %v1437 = vpop.permute.xlu0 %1436
      %1438 = vrot.lane.b32.xlu0 %v622, 80
      %v1439 = vpop.permute.xlu0 %1438
      %1440 = vrot.lane.b32.xlu0 %v626, 80
      %v1441 = vpop.permute.xlu0 %1440
      %1442 = vrot.lane.b32.xlu0 %v632, 80
      %v1443 = vpop.permute.xlu0 %1442
      %1444 = vrot.lane.b32.xlu0 %v636, 80
      %v1445 = vpop.permute.xlu0 %1444
      %1446 = vrot.lane.b32.xlu0 %v642, 80
      %v1447 = vpop.permute.xlu0 %1446
      %1448 = vrot.lane.b32.xlu0 %v646, 80
      %v1449 = vpop.permute.xlu0 %1448
      %1450 = vrot.lane.b32.xlu0 %v652, 80
      %v1451 = vpop.permute.xlu0 %1450
      %1452 = vrot.lane.b32.xlu0 %v656, 80
      %v1453 = vpop.permute.xlu0 %1452
      %1454 = vrot.lane.b32.xlu0 %v662, 80
      %v1455 = vpop.permute.xlu0 %1454
      %1456 = vrot.lane.b32.xlu0 %v666, 80
      %v1457 = vpop.permute.xlu0 %1456
      %1458 = vrot.lane.b32.xlu0 %v672, 80
      %v1459 = vpop.permute.xlu0 %1458
      %1460 = vrot.lane.b32.xlu0 %v676, 80
      %v1461 = vpop.permute.xlu0 %1460
      %1462 = vrot.lane.b32.xlu0 %v682, 80
      %v1463 = vpop.permute.xlu0 %1462
      %1464 = vrot.lane.b32.xlu0 %v686, 80
      %v1465 = vpop.permute.xlu0 %1464
      %1466 = vrot.lane.b32.xlu0 %v692, 80
      %v1467 = vpop.permute.xlu0 %1466
      %1468 = vrot.lane.b32.xlu0 %v696, 80
      %v1469 = vpop.permute.xlu0 %1468
      %1470 = vrot.lane.b32.xlu0 %v702, 80
      %v1471 = vpop.permute.xlu0 %1470
      %1472 = vrot.lane.b32.xlu0 %v706, 80
      %v1473 = vpop.permute.xlu0 %1472
      %1474 = vrot.lane.b32.xlu0 %v712, 80
      %v1475 = vpop.permute.xlu0 %1474
      %1476 = vrot.lane.b32.xlu0 %v716, 80
      %v1477 = vpop.permute.xlu0 %1476
      %v1502 = vadd.f32 %v1404, %v1431
      %v1503 = vadd.f32 %v1405, %v1433
      %v1504 = vadd.f32 %v1406, %v1435
      %v1505 = vadd.f32 %v1407, %v1437
      %v1506 = vadd.f32 %v1408, %v1439
      %v1507 = vadd.f32 %v1409, %v1441
      %v1508 = vadd.f32 %v1410, %v1443
      %v1509 = vadd.f32 %v1411, %v1445
      %v1510 = vadd.f32 %v1412, %v1447
      %v1511 = vadd.f32 %v1413, %v1449
      %v1512 = vadd.f32 %v1414, %v1451
      %v1513 = vadd.f32 %v1415, %v1453
      %v1514 = vadd.f32 %v1416, %v1455
      %v1515 = vadd.f32 %v1417, %v1457
      %v1516 = vadd.f32 %v1418, %v1459
      %v1517 = vadd.f32 %v1419, %v1461
      %v1518 = vadd.f32 %v1420, %v1463
      %v1519 = vadd.f32 %v1421, %v1465
      %v1520 = vadd.f32 %v1422, %v1467
      %v1521 = vadd.f32 %v1423, %v1469
      %v1522 = vadd.f32 %v1424, %v1471
      %v1523 = vadd.f32 %v1425, %v1473
      %v1524 = vadd.f32 %v1426, %v1475
      %v1525 = vadd.f32 %v1427, %v1477
      %1528 = vrot.lane.b32.xlu0 %v612, 64
      %v1529 = vpop.permute.xlu0 %1528
      %1530 = vrot.lane.b32.xlu0 %v616, 64
      %v1531 = vpop.permute.xlu0 %1530
      %1532 = vrot.lane.b32.xlu0 %v622, 64
      %v1533 = vpop.permute.xlu0 %1532
      %1534 = vrot.lane.b32.xlu0 %v626, 64
      %v1535 = vpop.permute.xlu0 %1534
      %1536 = vrot.lane.b32.xlu0 %v632, 64
      %v1537 = vpop.permute.xlu0 %1536
      %1538 = vrot.lane.b32.xlu0 %v636, 64
      %v1539 = vpop.permute.xlu0 %1538
      %1540 = vrot.lane.b32.xlu0 %v642, 64
      %v1541 = vpop.permute.xlu0 %1540
      %1542 = vrot.lane.b32.xlu0 %v646, 64
      %v1543 = vpop.permute.xlu0 %1542
      %1544 = vrot.lane.b32.xlu0 %v652, 64
      %v1545 = vpop.permute.xlu0 %1544
      %1546 = vrot.lane.b32.xlu0 %v656, 64
      %v1547 = vpop.permute.xlu0 %1546
      %1548 = vrot.lane.b32.xlu0 %v662, 64
      %v1549 = vpop.permute.xlu0 %1548
      %1550 = vrot.lane.b32.xlu0 %v666, 64
      %v1551 = vpop.permute.xlu0 %1550
      %1552 = vrot.lane.b32.xlu0 %v672, 64
      %v1553 = vpop.permute.xlu0 %1552
      %1554 = vrot.lane.b32.xlu0 %v676, 64
      %v1555 = vpop.permute.xlu0 %1554
      %1556 = vrot.lane.b32.xlu0 %v682, 64
      %v1557 = vpop.permute.xlu0 %1556
      %1558 = vrot.lane.b32.xlu0 %v686, 64
      %v1559 = vpop.permute.xlu0 %1558
      %1560 = vrot.lane.b32.xlu0 %v692, 64
      %v1561 = vpop.permute.xlu0 %1560
      %1562 = vrot.lane.b32.xlu0 %v696, 64
      %v1563 = vpop.permute.xlu0 %1562
      %1564 = vrot.lane.b32.xlu0 %v702, 64
      %v1565 = vpop.permute.xlu0 %1564
      %1566 = vrot.lane.b32.xlu0 %v706, 64
      %v1567 = vpop.permute.xlu0 %1566
      %1568 = vrot.lane.b32.xlu0 %v712, 64
      %v1569 = vpop.permute.xlu0 %1568
      %1570 = vrot.lane.b32.xlu0 %v716, 64
      %v1571 = vpop.permute.xlu0 %1570
      %1572 = vrot.lane.b32.xlu0 %v722, 64
      %v1573 = vpop.permute.xlu0 %1572
      %1574 = vrot.lane.b32.xlu0 %v726, 64
      %v1575 = vpop.permute.xlu0 %1574
      %v1600 = vadd.f32 %v1502, %v1529
      %v1601 = vadd.f32 %v1503, %v1531
      %v1602 = vadd.f32 %v1504, %v1533
      %v1603 = vadd.f32 %v1505, %v1535
      %v1604 = vadd.f32 %v1506, %v1537
      %v1605 = vadd.f32 %v1507, %v1539
      %v1606 = vadd.f32 %v1508, %v1541
      %v1607 = vadd.f32 %v1509, %v1543
      %v1608 = vadd.f32 %v1510, %v1545
      %v1609 = vadd.f32 %v1511, %v1547
      %v1610 = vadd.f32 %v1512, %v1549
      %v1611 = vadd.f32 %v1513, %v1551
      %v1612 = vadd.f32 %v1514, %v1553
      %v1613 = vadd.f32 %v1515, %v1555
      %v1614 = vadd.f32 %v1516, %v1557
      %v1615 = vadd.f32 %v1517, %v1559
      %v1616 = vadd.f32 %v1518, %v1561
      %v1617 = vadd.f32 %v1519, %v1563
      %v1618 = vadd.f32 %v1520, %v1565
      %v1619 = vadd.f32 %v1521, %v1567
      %v1620 = vadd.f32 %v1522, %v1569
      %v1621 = vadd.f32 %v1523, %v1571
      %v1622 = vadd.f32 %v1524, %v1573
      %v1623 = vadd.f32 %v1525, %v1575
      %vm1624 = vcmask 1048448
      %v1625 = vsel %vm1624, %v1600, -inf
      %v1626 = vsel %vm1624, %v1602, -inf
      %v1627 = vsel %vm1624, %v1604, -inf
      %v1628 = vmax.f32 %v1625, %v1627
      %v1629 = vsel %vm1624, %v1606, -inf
      %v1630 = vmax.f32 %v1626, %v1629
      %v1631 = vsel %vm1624, %v1608, -inf
      %v1632 = vmax.f32 %v1628, %v1631
      %v1633 = vsel %vm1624, %v1610, -inf
      %v1634 = vmax.f32 %v1630, %v1633
      %v1635 = vsel %vm1624, %v1612, -inf
      %v1636 = vmax.f32 %v1632, %v1635
      %v1637 = vsel %vm1624, %v1614, -inf
      %v1638 = vmax.f32 %v1634, %v1637
      %v1639 = vsel %vm1624, %v1616, -inf
      %v1640 = vmax.f32 %v1636, %v1639
      %v1641 = vsel %vm1624, %v1618, -inf
      %v1642 = vmax.f32 %v1638, %v1641
      %v1643 = vsel %vm1624, %v1620, -inf
      %v1644 = vmax.f32 %v1640, %v1643
      %v1645 = vsel %vm1624, %v1622, -inf
      %v1646 = vmax.f32 %v1642, %v1645
      %v1647 = vmax.f32 %v1644, %v1646
      %v1648 = vsel %vm1624, %v1601, -inf
      %v1649 = vsel %vm1624, %v1603, -inf
      %v1650 = vsel %vm1624, %v1605, -inf
      %v1651 = vmax.f32 %v1648, %v1650
      %v1652 = vsel %vm1624, %v1607, -inf
      %v1653 = vmax.f32 %v1649, %v1652
      %v1654 = vsel %vm1624, %v1609, -inf
      %v1655 = vmax.f32 %v1651, %v1654
      %v1656 = vsel %vm1624, %v1611, -inf
      %v1657 = vmax.f32 %v1653, %v1656
      %v1658 = vsel %vm1624, %v1613, -inf
      %v1659 = vmax.f32 %v1655, %v1658
      %v1660 = vsel %vm1624, %v1615, -inf
      %v1661 = vmax.f32 %v1657, %v1660
      %v1662 = vsel %vm1624, %v1617, -inf
      %v1663 = vmax.f32 %v1659, %v1662
      %v1664 = vsel %vm1624, %v1619, -inf
      %v1665 = vmax.f32 %v1661, %v1664
      %v1666 = vsel %vm1624, %v1621, -inf
      %v1667 = vmax.f32 %v1663, %v1666
      %v1668 = vsel %vm1624, %v1623, -inf
      %v1669 = vmax.f32 %v1665, %v1668
      %v1670 = vmax.f32 %v1667, %v1669
      %1671 = vrot.lane.b32.xlu0 %v1042, 80
      %v1672 = vpop.permute.xlu0 %1671
      %v1674 = vadd.f32 %v1647, %v1672
      %v1675 = vadd.f32 %v1670, %v1672
      %v1676 = vmax.f32 %v1674, 0.0
      %v1677 = vmax.f32 %v1675, 0.0
      %1680 = vrot.lane.b32.xlu0 %v1208, 96
      %v1681 = vpop.permute.xlu0 %1680
      %1682 = vrot.lane.b32.xlu0 %v1209, 96
      %v1683 = vpop.permute.xlu0 %1682
      %1688 = vrot.lane.b32.xlu0 %v1676, 48
      %v1689 = vpop.permute.xlu0 %1688
      %1690 = vrot.lane.b32.xlu0 %v1677, 48
      %v1691 = vpop.permute.xlu0 %1690
      %v1694 = vsel %vm982, %v1046, %v1681
      %v1695 = vsel %vm982, %v1047, %v1683
      %vm1696 = vcmask 261120
      %v1697 = vsel %vm1696, %v1694, %v1689
      %v1698 = vsel %vm1696, %v1695, %v1691
      %v1699 = vpack.c.bf16 %v1698, %v1697
      %v1700 = vld [vmem:[%s3] sm:$0xf]
      %v1701 = vld [vmem:[%s3 + $0x4] sm:$0xf]
      %v1702 = vld [vmem:[%s3 + $0x8] sm:$0xf]
      %v1703 = vld [vmem:[%s3 + $0xc] sm:$0xf]
      %v1704 = vld [vmem:[%s3 + $0x10] sm:$0xf]
      %v1705 = vld [vmem:[%s3 + $0x14] sm:$0xf]
      %v1706 = vld [vmem:[%s4] sm:$0x1]
      %v1708 = vlaneseq
      %v1709 = vshrl.u32 %v1708, 7
      %v1710 = vsub.s32 0, %v1709
      %v1711 = vrot.slane %v1706, %v1710
      %v1719 = vunpack.c.l.b16 %v1700
      %v1720 = vunpack.c.l.b16 %v1701
      %v1721 = vunpack.c.l.b16 %v1702
      %v1722 = vunpack.c.l.b16 %v1703
      %v1723 = vunpack.c.l.b16 %v1704
      %v1724 = vunpack.c.l.b16 %v1705
      %v1725 = vpack.c.b16 %v1720, %v1719
      %v1726 = vpack.c.b16 %v1722, %v1721
      %v1727 = vpack.c.b16 %v1724, %v1723
      %vm1731 = vcmask 392192
      %v1733 = vsel %vm1731, %v1699, 0
      %1735 = vmatprep.subr.bf16.mxu0 0
      %1736 = vmatpush1.bf16.msra.mxu0 0
      %1737 = vmatprep.subr.bf16.mxu0 0
      %1738 = vmatpush1.bf16.msra.mxu0 0
      %1739 = vmatprep.subr.bf16.mxu0 0
      %1740 = vmatpush1.bf16.msra.mxu0 0
      %1741 = vmatprep.subr.bf16.mxu0 0
      %1742 = vmatpush1.bf16.msra.mxu0 0
      %1743 = vmatprep.subr.bf16.mxu0 0
      %1744 = vmatpush1.bf16.msra.mxu0 0
      %1745 = vmatprep.subr.bf16.mxu0 0
      %1746 = vmatpush1.bf16.msra.mxu0 %v1727
      %1747 = vmatprep.subr.bf16.mxu0 0
      %1748 = vmatpush1.bf16.msra.mxu0 %v1726
      %1749 = vmatprep.subr.bf16.mxu0 0
      %1750 = vmatpush1.bf16.msra.mxu0 %v1725
      %1751 = vmatprep.subr.bf16.mxu0 0
      %1752 = vmatpush2.bf16.msra.mxu0 0
      %1753 = vmatprep.subr.bf16.mxu0 0
      %1754 = vmatpush2.bf16.msra.mxu0 0
      %1755 = vmatprep.subr.bf16.mxu0 0
      %1756 = vmatpush2.bf16.msra.mxu0 0
      %1757 = vmatprep.subr.bf16.mxu0 0
      %1758 = vmatpush2.bf16.msra.mxu0 0
      %1759 = vmatprep.subr.bf16.mxu0 0
      %1760 = vmatpush2.bf16.msra.mxu0 0
      %1761 = vmatprep.subr.bf16.mxu0 0
      %1762 = vmatpush2.bf16.msra.mxu0 0
      %1763 = vmatprep.subr.bf16.mxu0 0
      %1764 = vmatpush2.bf16.msra.mxu0 0
      %1765 = vmatprep.subr.bf16.mxu0 0
      %1766 = vmatpush2.bf16.msra.mxu0 0
      %1767 = vmatprep.mubr.bf16.mxu0 0
      %1768 = vmatmul.mubr.bf16.gmra.mxu0 %v1733
      %v1769 = vpop.f32.mrf.mxu0
      %v1770 = vadd.f32 %v1711, %v1769
      %v1771 = vpop.f32.mrf.mxu0
      %v1772 = vpop.f32.mrf.mxu0
      %v1773 = vadd.f32 %v1711, %v1772
      %v1774 = vpop.f32.mrf.mxu0
      %1775 = vdwg.mxu0
      %1776 = vst [vmem:[%s226] sm:$0xff] %v1770
      %1777 = vst [vmem:[%s226 + $0x8] sm:$0xff] %v1773
      %s1778 = smul.u32 2, %s16
      %p1779 = scmp.lt.s32.totalorder %s1778, 5
      %s1780 = scalar_select %p1779, %s1778, 5
      %s1781 = smul.addr %s1780, 8
      %s1782 = scalar_lea.vmem %s5, %s1781
      // Predicated region
      $region41: #{_cnn1d_forward_impl.1} parent=39 // pred_check
        %p1783 = pneg %p144
      $region42: #{_cnn1d_forward_impl.1} parent=39 // pred_check_branch
        %1785 = sbr.rel (%p1783) target = $region44
      $region43: #{_cnn1d_forward_impl.1} parent=39 // pred_region
        %s1786 = smul.u32 2, %s16
      $region44: #{_cnn1d_forward_impl.1} parent=39 // pred_fallthru
        _
    $region40: #{_cnn1d_forward_impl.1} parent=5 // pred_fallthru
      _
    %p1787 = scmp.le.s32.totalorder 2, %s11
    // Predicated region
    $region45: #{_cnn1d_forward_impl.1} parent=5 // pred_check
      %p1788 = pneg %p1787
    $region46: #{_cnn1d_forward_impl.1} parent=5 // pred_check_branch
      %1790 = sbr.rel (%p1788) target = $region48
    $region47: #{_cnn1d_forward_impl.1} parent=5 // pred_region
      %s1791 = ssub.s32 %s11, 2
      // Predicated region
      $region49: #{_cnn1d_forward_impl.1} parent=47 // pred_check
        %p1792 = pneg %p150
      $region50: #{_cnn1d_forward_impl.1} parent=47 // pred_check_branch
        %1794 = sbr.rel (%p1792) target = $region52
      $region51: #{_cnn1d_forward_impl.1} parent=47 // pred_region
        %s1795 = smul.u32 2, %s17
        %p1796 = scmp.lt.s32.totalorder %s1795, 5
        %s1797 = scalar_select %p1796, %s1795, 5
        %s1798 = smul.addr %s1797, 8
        %s1799 = scalar_lea.vmem %s5, %s1798
      $region52: #{_cnn1d_forward_impl.1} parent=47 // pred_fallthru
        _
    $region48: #{_cnn1d_forward_impl.1} parent=5 // pred_fallthru
      _
  $region6: #{_cnn1d_forward_impl.1} parent=0 // loop_footer
    %s15 = sadd.s32 1, %s11
  $region7: #{_cnn1d_forward_impl.1} parent=0 // loop_footer_branch
    %10 = sbr.rel target = $region3
  $region8: #{_cnn1d_forward_impl.1} parent=0 // loop_exit
    _

// kernel: _cnn1d_forward_impl.1
$region0: #{_cnn1d_forward_impl.1}
  #allocation0 [shape = 'u32[]', space=smem, size = 0x4, offset = 0x4, fixed_abs, tag = 'smem constant byte address 0x4 - core index']
  #allocation1 [shape = 'u32[144,128]{1,0:T(1,128)}', space=vmem, size = 0x12000, scoped, tag = 'internal scratch']
  %s0 = inlined_call_operand.vmem [shape: bf16[48,16,32], index: 0, kind: input, shape index: {}]
  %s1 = inlined_call_operand.vmem [shape: bf16[32,256], index: 1, kind: input, shape index: {}]
  %s2 = inlined_call_operand.vmem [shape: f32[1,48], index: 2, kind: input, shape index: {}]
  %s3 = inlined_call_operand.vmem [shape: bf16[48,128], index: 3, kind: input, shape index: {}]
  %s4 = inlined_call_operand.vmem [shape: f32[1,128], index: 4, kind: input, shape index: {}]
  %s5 = inlined_call_operand.vmem [shape: f32[48,128], index: 5, kind: output, shape index: {}]
  %s6 = sld [smem:[#allocation0]]
  $region53: #{_cnn1d_forward_impl.1} parent=0
    _
  %s8 = ssub.s32 1, %s6
  %s9 = scalar_select 0, %s8, %s6
  loop: start=0, step=1, limit=5
  $region2: #{_cnn1d_forward_impl.1} parent=0 // loop_pre_header
    _
  $region3: #{_cnn1d_forward_impl.1} parent=0 // loop_header
    %s11 = sphi 0, %s15
    %p12 = scmp.ge.s32.totalorder %s11, 5
    %s21 = sphi 0, %s23
    %s24 = sphi 0, %s21
    %s25 = sphi 0, %s24
    %s41 = sphi 0, %s25
    %s45 = sphi 0, %s45
    %s47 = sphi 0, %s45
    %s48 = sphi 0, %s47
    %s62 = sphi 0, %s48
    %s66 = sphi 0, %s66
    %s68 = sphi 0, %s66
    %s69 = sphi 0, %s68
    %s83 = sphi 0, %s69
    %s87 = sphi 0, %s87
    %s89 = sphi 0, %s87
    %s90 = sphi 0, %s89
    %s104 = sphi 0, %s90
    %s108 = sphi 0, %s108
    %s110 = sphi 0, %s108
    %s111 = sphi 0, %s110
    %s125 = sphi 0, %s111
    %s131 = sphi 0, %s133
    %s134 = sphi 0, %s131
    %s135 = sphi 0, %s134
    %s151 = sphi 0, %s135
  $region4: #{_cnn1d_forward_impl.1} parent=0 // loop_header_branch
    %14 = sbr.rel (%p12) target = $region8
  $region5: #{_cnn1d_forward_impl.1} parent=0 // loop_body
    %s16 = ssub.s32 %s11, 1
    %s17 = ssub.s32 %s11, 2
    %s18 = sadd.s32 %s11, 1
    %s19 = ssub.s32 %s11, %s18
    %p20 = scmp.eq.s32.totalorder %s19, 0
    %s22 = sadd.s32 %s21, 1
    %s23 = scalar_select %p20, %s21, %s22
    %p26 = pneg %p20
    %p27 = scmp.eq.s32.totalorder %s11, 2
    %p28 = por %p26, %p27
    %p29 = scmp.ne.s32.totalorder %s21, %s24
    %p30 = scmp.eq.s32.totalorder %s11, 0
    %p31 = por %p29, %p30
    %p32 = scmp.ne.s32.totalorder %s21, %s24
    %p33 = scmp.eq.s32.totalorder %s16, 2
    %p34 = por %p32, %p33
    %p35 = scmp.ne.s32.totalorder %s24, %s25
    %p36 = scmp.eq.s32.totalorder %s16, 0
    %p37 = por %p35, %p36
    %p38 = scmp.ne.s32.totalorder %s24, %s25
    %p39 = scmp.eq.s32.totalorder %s17, 2
    %p40 = por %p38, %p39
    %p42 = scmp.ne.s32.totalorder %s25, %s41
    %p43 = scmp.eq.s32.totalorder %s17, 0
    %p44 = por %p42, %p43
    %s46 = sadd.s32 %s45, 1
    %p49 = scmp.eq.s32.totalorder %s11, 2
    %p50 = scmp.ne.s32.totalorder %s45, %s47
    %p51 = scmp.eq.s32.totalorder %s11, 0
    %p52 = por %p50, %p51
    %p53 = scmp.ne.s32.totalorder %s45, %s47
    %p54 = scmp.eq.s32.totalorder %s16, 2
    %p55 = por %p53, %p54
    %p56 = scmp.ne.s32.totalorder %s47, %s48
    %p57 = scmp.eq.s32.totalorder %s16, 0
    %p58 = por %p56, %p57
    %p59 = scmp.ne.s32.totalorder %s47, %s48
    %p60 = scmp.eq.s32.totalorder %s17, 2
    %p61 = por %p59, %p60
    %p63 = scmp.ne.s32.totalorder %s48, %s62
    %p64 = scmp.eq.s32.totalorder %s17, 0
    %p65 = por %p63, %p64
    %s67 = sadd.s32 %s66, 1
    %p70 = scmp.eq.s32.totalorder %s11, 2
    %p71 = scmp.ne.s32.totalorder %s66, %s68
    %p72 = scmp.eq.s32.totalorder %s11, 0
    %p73 = por %p71, %p72
    %p74 = scmp.ne.s32.totalorder %s66, %s68
    %p75 = scmp.eq.s32.totalorder %s16, 2
    %p76 = por %p74, %p75
    %p77 = scmp.ne.s32.totalorder %s68, %s69
    %p78 = scmp.eq.s32.totalorder %s16, 0
    %p79 = por %p77, %p78
    %p80 = scmp.ne.s32.totalorder %s68, %s69
    %p81 = scmp.eq.s32.totalorder %s17, 2
    %p82 = por %p80, %p81
    %p84 = scmp.ne.s32.totalorder %s69, %s83
    %p85 = scmp.eq.s32.totalorder %s17, 0
    %p86 = por %p84, %p85
    %s88 = sadd.s32 %s87, 1
    %p91 = scmp.eq.s32.totalorder %s11, 2
    %p92 = scmp.ne.s32.totalorder %s87, %s89
    %p93 = scmp.eq.s32.totalorder %s11, 0
    %p94 = por %p92, %p93
    %p95 = scmp.ne.s32.totalorder %s87, %s89
    %p96 = scmp.eq.s32.totalorder %s16, 2
    %p97 = por %p95, %p96
    %p98 = scmp.ne.s32.totalorder %s89, %s90
    %p99 = scmp.eq.s32.totalorder %s16, 0
    %p100 = por %p98, %p99
    %p101 = scmp.ne.s32.totalorder %s89, %s90
    %p102 = scmp.eq.s32.totalorder %s17, 2
    %p103 = por %p101, %p102
    %p105 = scmp.ne.s32.totalorder %s90, %s104
    %p106 = scmp.eq.s32.totalorder %s17, 0
    %p107 = por %p105, %p106
    %s109 = sadd.s32 %s108, 1
    %p112 = scmp.eq.s32.totalorder %s11, 2
    %p113 = scmp.ne.s32.totalorder %s108, %s110
    %p114 = scmp.eq.s32.totalorder %s11, 0
    %p115 = por %p113, %p114
    %p116 = scmp.ne.s32.totalorder %s108, %s110
    %p117 = scmp.eq.s32.totalorder %s16, 2
    %p118 = por %p116, %p117
    %p119 = scmp.ne.s32.totalorder %s110, %s111
    %p120 = scmp.eq.s32.totalorder %s16, 0
    %p121 = por %p119, %p120
    %p122 = scmp.ne.s32.totalorder %s110, %s111
    %p123 = scmp.eq.s32.totalorder %s17, 2
    %p124 = por %p122, %p123
    %p126 = scmp.ne.s32.totalorder %s111, %s125
    %p127 = scmp.eq.s32.totalorder %s17, 0
    %p128 = por %p126, %p127
    %s129 = ssub.s32 %s11, %s18
    %p130 = scmp.eq.s32.totalorder %s129, 0
    %s132 = sadd.s32 %s131, 1
    %s133 = scalar_select %p130, %s131, %s132
    %p136 = pneg %p130
    %p137 = scmp.eq.s32.totalorder %s11, 2
    %p138 = por %p136, %p137
    %p139 = scmp.ne.s32.totalorder %s131, %s134
    %p140 = scmp.eq.s32.totalorder %s11, 0
    %p141 = por %p139, %p140
    %p142 = scmp.ne.s32.totalorder %s131, %s134
    %p143 = scmp.eq.s32.totalorder %s16, 2
    %p144 = por %p142, %p143
    %p145 = scmp.ne.s32.totalorder %s134, %s135
    %p146 = scmp.eq.s32.totalorder %s16, 0
    %p147 = por %p145, %p146
    %p148 = scmp.ne.s32.totalorder %s134, %s135
    %p149 = scmp.eq.s32.totalorder %s17, 2
    %p150 = por %p148, %p149
    %p152 = scmp.ne.s32.totalorder %s135, %s151
    %p153 = scmp.eq.s32.totalorder %s17, 0
    %p154 = por %p152, %p153
    %p155 = scmp.le.s32.totalorder 1, %s11
    %p156 = scmp.lt.s32.totalorder %s11, 4
    %p157 = pnand %p155, %p156
    %p158 = pneg %p157
    // Predicated region
    $region9: #{_cnn1d_forward_impl.1} parent=5 // pred_check
      _
    $region10: #{_cnn1d_forward_impl.1} parent=5 // pred_check_branch
      %160 = sbr.rel (%p157) target = $region12
    $region11: #{_cnn1d_forward_impl.1} parent=5 // pred_region
      %s161 = ssub.s32 %s11, 1
      // Predicated region
      $region13: #{_cnn1d_forward_impl.1} parent=11 // pred_check
        %p162 = pneg %p58
      $region14: #{_cnn1d_forward_impl.1} parent=11 // pred_check_branch
        %164 = sbr.rel (%p162) target = $region16
      $region15: #{_cnn1d_forward_impl.1} parent=11 // pred_region
        _
      $region16: #{_cnn1d_forward_impl.1} parent=11 // pred_fallthru
        _
      // Predicated region
      $region17: #{_cnn1d_forward_impl.1} parent=11 // pred_check
        %p165 = pneg %p79
      $region18: #{_cnn1d_forward_impl.1} parent=11 // pred_check_branch
        %167 = sbr.rel (%p165) target = $region20
      $region19: #{_cnn1d_forward_impl.1} parent=11 // pred_region
        _
      $region20: #{_cnn1d_forward_impl.1} parent=11 // pred_fallthru
        _
      // Predicated region
      $region21: #{_cnn1d_forward_impl.1} parent=11 // pred_check
        %p168 = pneg %p100
      $region22: #{_cnn1d_forward_impl.1} parent=11 // pred_check_branch
        %170 = sbr.rel (%p168) target = $region24
      $region23: #{_cnn1d_forward_impl.1} parent=11 // pred_region
        _
      $region24: #{_cnn1d_forward_impl.1} parent=11 // pred_fallthru
        _
      // Predicated region
      $region25: #{_cnn1d_forward_impl.1} parent=11 // pred_check
        %p171 = pneg %p121
      $region26: #{_cnn1d_forward_impl.1} parent=11 // pred_check_branch
        %173 = sbr.rel (%p171) target = $region28
      $region27: #{_cnn1d_forward_impl.1} parent=11 // pred_region
        _
      $region28: #{_cnn1d_forward_impl.1} parent=11 // pred_fallthru
        _
    $region12: #{_cnn1d_forward_impl.1} parent=5 // pred_fallthru
      _
    %p174 = scmp.lt.s32.totalorder %s11, 3
    // Predicated region
    $region29: #{_cnn1d_forward_impl.1} parent=5 // pred_check
      %p175 = pneg %p174
    $region30: #{_cnn1d_forward_impl.1} parent=5 // pred_check_branch
      %177 = sbr.rel (%p175) target = $region32
    $region31: #{_cnn1d_forward_impl.1} parent=5 // pred_region
      // Predicated region
      $region33: #{_cnn1d_forward_impl.1} parent=31 // pred_check
        %p178 = pneg %p31
      $region34: #{_cnn1d_forward_impl.1} parent=31 // pred_check_branch
        %180 = sbr.rel (%p178) target = $region36
      $region35: #{_cnn1d_forward_impl.1} parent=31 // pred_region
        %s181 = smul.u32 16, %s11
        %p182 = scmp.lt.s32.totalorder %s181, 47
        %s183 = scalar_select %p182, %s181, 47
        %s184 = smul.addr %s183, 2
        %s185 = smul.addr %s184, 4
        %s186 = scalar_lea.vmem %s0, %s185
        %s187 = smul.u32 16, %s11
      $region36: #{_cnn1d_forward_impl.1} parent=31 // pred_fallthru
        _
    $region32: #{_cnn1d_forward_impl.1} parent=5 // pred_fallthru
      _
    %p188 = scmp.le.s32.totalorder 1, %s11
    %p189 = scmp.lt.s32.totalorder %s11, 4
    %p190 = pnand %p188, %p189
    %p191 = pneg %p190
    // Predicated region
    $region37: #{_cnn1d_forward_impl.1} parent=5 // pred_check
      _
    $region38: #{_cnn1d_forward_impl.1} parent=5 // pred_check_branch
      %193 = sbr.rel (%p190) target = $region40
    $region39: #{_cnn1d_forward_impl.1} parent=5 // pred_region
      %s194 = ssub.s32 %s11, 1
      %s195 = smul.u32 16, %s16
      %p196 = scmp.lt.s32.totalorder %s195, 47
      %s197 = scalar_select %p196, %s195, 47
      %s198 = smul.addr %s197, 2
      %s199 = smul.addr %s198, 4
      %s200 = scalar_lea.vmem %s0, %s199
      %p201 = pneg %p37
      %p202 = pneg %p34
      %p203 = pneg %p58
      %p204 = pneg %p55
      %p205 = pneg %p79
      %p206 = pneg %p76
      %p207 = pneg %p100
      %p208 = pneg %p97
      %p209 = pneg %p121
      %p210 = pneg %p118
      %p211 = pneg %p147
      %p212 = pneg %p144
      %s213 = smul.u32 2, %s16
      %p214 = scmp.lt.s32.totalorder %s213, 5
      %s215 = scalar_select %p214, %s213, 5
      %s216 = smul.addr %s215, 8
      %s217 = scalar_lea.vmem %s5, %s216
      %s218 = smul.u32 16, %s16
      %p219 = scmp.lt.s32.totalorder %s218, 47
      %s220 = scalar_select %p219, %s218, 47
      %s221 = smul.addr %s220, 2
      %s222 = smul.addr %s221, 4
      %s223 = scalar_lea.vmem %s0, %s222
      %s224 = smul.u32 16, %s16
      %s225 = smul.u32 2, %s16
      %p226 = scmp.lt.s32.totalorder %s225, 5
      %s227 = scalar_select %p226, %s225, 5
      %s228 = smul.addr %s227, 8
      %s229 = scalar_lea.vmem %s5, %s228
      %s230 = smul.u32 2, %s16
      %v232 = vld [vmem:[%s223] sm:$0xf]
      %v233 = vld [vmem:[%s223 + $0x4] sm:$0xf]
      %v234 = vld [vmem:[%s223 + $0x8] sm:$0xf]
      %v235 = vld [vmem:[%s223 + $0xc] sm:$0xf]
      %v236 = vld [vmem:[%s223 + $0x10] sm:$0xf]
      %v237 = vld [vmem:[%s223 + $0x14] sm:$0xf]
      %v238 = vld [vmem:[%s223 + $0x18] sm:$0xf]
      %v239 = vld [vmem:[%s223 + $0x1c] sm:$0xf]
      %v240 = vld [vmem:[%s223 + $0x20] sm:$0xf]
      %v241 = vld [vmem:[%s223 + $0x24] sm:$0xf]
      %v242 = vld [vmem:[%s223 + $0x28] sm:$0xf]
      %v243 = vld [vmem:[%s223 + $0x2c] sm:$0xf]
      %v244 = vld [vmem:[%s223 + $0x30] sm:$0xf]
      %v245 = vld [vmem:[%s223 + $0x34] sm:$0xf]
      %v246 = vld [vmem:[%s223 + $0x38] sm:$0xf]
      %v247 = vld [vmem:[%s223 + $0x3c] sm:$0xf]
      %v248 = vld [vmem:[%s223 + $0x40] sm:$0xf]
      %v249 = vld [vmem:[%s223 + $0x44] sm:$0xf]
      %v250 = vld [vmem:[%s223 + $0x48] sm:$0xf]
      %v251 = vld [vmem:[%s223 + $0x4c] sm:$0xf]
      %v252 = vld [vmem:[%s223 + $0x50] sm:$0xf]
      %v253 = vld [vmem:[%s223 + $0x54] sm:$0xf]
      %v254 = vld [vmem:[%s223 + $0x58] sm:$0xf]
      %v255 = vld [vmem:[%s223 + $0x5c] sm:$0xf]
      %v256 = vld [vmem:[%s223 + $0x60] sm:$0xf]
      %v257 = vld [vmem:[%s223 + $0x64] sm:$0xf]
      %v258 = vld [vmem:[%s223 + $0x68] sm:$0xf]
      %v259 = vld [vmem:[%s223 + $0x6c] sm:$0xf]
      %v260 = vld [vmem:[%s223 + $0x70] sm:$0xf]
      %v261 = vld [vmem:[%s223 + $0x74] sm:$0xf]
      %v262 = vld [vmem:[%s223 + $0x78] sm:$0xf]
      %v263 = vld [vmem:[%s223 + $0x7c] sm:$0xf]
      %v264 = vld [vmem:[%s1] sm:$0xff]
      %v265 = vld [vmem:[%s1 + $0x8] sm:$0xff]
      %v266 = vld [vmem:[%s1 + $0x10] sm:$0xff]
      %v267 = vld [vmem:[%s1 + $0x18] sm:$0xff]
      %v300 = vunpack.c.l.b16 %v232
      %v301 = vunpack.c.l.b16 %v233
      %v302 = vunpack.c.l.b16 %v234
      %v303 = vunpack.c.l.b16 %v235
      %v304 = vunpack.c.l.b16 %v236
      %v305 = vunpack.c.l.b16 %v237
      %v306 = vunpack.c.l.b16 %v238
      %v307 = vunpack.c.l.b16 %v239
      %v308 = vunpack.c.l.b16 %v240
      %v309 = vunpack.c.l.b16 %v241
      %v310 = vunpack.c.l.b16 %v242
      %v311 = vunpack.c.l.b16 %v243
      %v312 = vunpack.c.l.b16 %v244
      %v313 = vunpack.c.l.b16 %v245
      %v314 = vunpack.c.l.b16 %v246
      %v315 = vunpack.c.l.b16 %v247
      %v316 = vunpack.c.l.b16 %v248
      %v317 = vunpack.c.l.b16 %v249
      %v318 = vunpack.c.l.b16 %v250
      %v319 = vunpack.c.l.b16 %v251
      %v320 = vunpack.c.l.b16 %v252
      %v321 = vunpack.c.l.b16 %v253
      %v322 = vunpack.c.l.b16 %v254
      %v323 = vunpack.c.l.b16 %v255
      %v324 = vunpack.c.l.b16 %v256
      %v325 = vunpack.c.l.b16 %v257
      %v326 = vunpack.c.l.b16 %v258
      %v327 = vunpack.c.l.b16 %v259
      %v328 = vunpack.c.l.b16 %v260
      %v329 = vunpack.c.l.b16 %v261
      %v330 = vunpack.c.l.b16 %v262
      %v331 = vunpack.c.l.b16 %v263
      %v332 = vpack.c.b16 %v301, %v300
      %v333 = vpack.c.b16 %v303, %v302
      %v334 = vpack.c.b16 %v305, %v304
      %v335 = vpack.c.b16 %v307, %v306
      %v336 = vpack.c.b16 %v309, %v308
      %v337 = vpack.c.b16 %v311, %v310
      %v338 = vpack.c.b16 %v313, %v312
      %v339 = vpack.c.b16 %v315, %v314
      %v340 = vpack.c.b16 %v317, %v316
      %v341 = vpack.c.b16 %v319, %v318
      %v342 = vpack.c.b16 %v321, %v320
      %v343 = vpack.c.b16 %v323, %v322
      %v344 = vpack.c.b16 %v325, %v324
      %v345 = vpack.c.b16 %v327, %v326
      %v346 = vpack.c.b16 %v329, %v328
      %v347 = vpack.c.b16 %v331, %v330
      %v352 = vunpack.c.l.b16 %v264
      %v353 = vunpack.c.h.b16 %v264
      %v354 = vunpack.c.l.b16 %v265
      %v355 = vunpack.c.h.b16 %v265
      %v356 = vunpack.c.l.b16 %v266
      %v357 = vunpack.c.h.b16 %v266
      %v358 = vunpack.c.l.b16 %v267
      %v359 = vunpack.c.h.b16 %v267
      %v360 = vpack.c.b16 %v354, %v352
      %v361 = vpack.c.b16 %v355, %v353
      %v362 = vpack.c.b16 %v358, %v356
      %v363 = vpack.c.b16 %v359, %v357
      %vm368 = vcmask 261120
      %v370 = vsel %vm368, %v332, 0
      %v373 = vsel %vm368, %v333, 0
      %v376 = vsel %vm368, %v334, 0
      %v379 = vsel %vm368, %v335, 0
      %v382 = vsel %vm368, %v336, 0
      %v385 = vsel %vm368, %v337, 0
      %v388 = vsel %vm368, %v338, 0
      %v391 = vsel %vm368, %v339, 0
      %v394 = vsel %vm368, %v340, 0
      %v397 = vsel %vm368, %v341, 0
      %v400 = vsel %vm368, %v342, 0
      %v403 = vsel %vm368, %v343, 0
      %v406 = vsel %vm368, %v344, 0
      %v409 = vsel %vm368, %v345, 0
      %v412 = vsel %vm368, %v346, 0
      %v415 = vsel %vm368, %v347, 0
      %417 = vmatprep.subr.bf16.mxu0 0
      %418 = vmatpush1.bf16.msra.mxu0 0
      %419 = vmatprep.subr.bf16.mxu0 0
      %420 = vmatpush1.bf16.msra.mxu0 0
      %421 = vmatprep.subr.bf16.mxu0 0
      %422 = vmatpush1.bf16.msra.mxu0 0
      %423 = vmatprep.subr.bf16.mxu0 0
      %424 = vmatpush1.bf16.msra.mxu0 0
      %425 = vmatprep.subr.bf16.mxu0 0
      %426 = vmatpush1.bf16.msra.mxu0 0
      %427 = vmatprep.subr.bf16.mxu0 0
      %428 = vmatpush1.bf16.msra.mxu0 0
      %429 = vmatprep.subr.bf16.mxu0 %v363
      %430 = vmatpush1.bf16.msra.mxu0 %v362
      %431 = vmatprep.subr.bf16.mxu0 %v361
      %432 = vmatpush1.bf16.msra.mxu0 %v360
      %433 = vmatprep.subr.bf16.mxu0 0
      %434 = vmatpush2.bf16.msra.mxu0 0
      %435 = vmatprep.subr.bf16.mxu0 0
      %436 = vmatpush2.bf16.msra.mxu0 0
      %437 = vmatprep.subr.bf16.mxu0 0
      %438 = vmatpush2.bf16.msra.mxu0 0
      %439 = vmatprep.subr.bf16.mxu0 0
      %440 = vmatpush2.bf16.msra.mxu0 0
      %441 = vmatprep.subr.bf16.mxu0 0
      %442 = vmatpush2.bf16.msra.mxu0 0
      %443 = vmatprep.subr.bf16.mxu0 0
      %444 = vmatpush2.bf16.msra.mxu0 0
      %445 = vmatprep.subr.bf16.mxu0 0
      %446 = vmatpush2.bf16.msra.mxu0 0
      %447 = vmatprep.subr.bf16.mxu0 0
      %448 = vmatpush2.bf16.msra.mxu0 0
      %449 = vmatprep.mubr.bf16.mxu0 0
      %450 = vmatmul.mubr.bf16.gmra.mxu0 %v370
      %v451 = vpop.f32.mrf.mxu0
      %v452 = vadd.f32 0.0, %v451
      %v453 = vpop.f32.mrf.mxu0
      %v454 = vadd.f32 0.0, %v453
      %v455 = vpop.f32.mrf.mxu0
      %v456 = vadd.f32 0.0, %v455
      %v457 = vpop.f32.mrf.mxu0
      %v458 = vadd.f32 0.0, %v457
      %459 = vmatprep.mubr.bf16.mxu0 0
      %460 = vmatmul.mubr.bf16.gmra.mxu0 %v373
      %v461 = vpop.f32.mrf.mxu0
      %v462 = vadd.f32 0.0, %v461
      %v463 = vpop.f32.mrf.mxu0
      %v464 = vadd.f32 0.0, %v463
      %v465 = vpop.f32.mrf.mxu0
      %v466 = vadd.f32 0.0, %v465
      %v467 = vpop.f32.mrf.mxu0
      %v468 = vadd.f32 0.0, %v467
      %469 = vmatprep.mubr.bf16.mxu0 0
      %470 = vmatmul.mubr.bf16.gmra.mxu0 %v376
      %v471 = vpop.f32.mrf.mxu0
      %v472 = vadd.f32 0.0, %v471
      %v473 = vpop.f32.mrf.mxu0
      %v474 = vadd.f32 0.0, %v473
      %v475 = vpop.f32.mrf.mxu0
      %v476 = vadd.f32 0.0, %v475
      %v477 = vpop.f32.mrf.mxu0
      %v478 = vadd.f32 0.0, %v477
      %479 = vmatprep.mubr.bf16.mxu0 0
      %480 = vmatmul.mubr.bf16.gmra.mxu0 %v379
      %v481 = vpop.f32.mrf.mxu0
      %v482 = vadd.f32 0.0, %v481
      %v483 = vpop.f32.mrf.mxu0
      %v484 = vadd.f32 0.0, %v483
      %v485 = vpop.f32.mrf.mxu0
      %v486 = vadd.f32 0.0, %v485
      %v487 = vpop.f32.mrf.mxu0
      %v488 = vadd.f32 0.0, %v487
      %489 = vmatprep.mubr.bf16.mxu0 0
      %490 = vmatmul.mubr.bf16.gmra.mxu0 %v382
      %v491 = vpop.f32.mrf.mxu0
      %v492 = vadd.f32 0.0, %v491
      %v493 = vpop.f32.mrf.mxu0
      %v494 = vadd.f32 0.0, %v493
      %v495 = vpop.f32.mrf.mxu0
      %v496 = vadd.f32 0.0, %v495
      %v497 = vpop.f32.mrf.mxu0
      %v498 = vadd.f32 0.0, %v497
      %499 = vmatprep.mubr.bf16.mxu0 0
      %500 = vmatmul.mubr.bf16.gmra.mxu0 %v385
      %v501 = vpop.f32.mrf.mxu0
      %v502 = vadd.f32 0.0, %v501
      %v503 = vpop.f32.mrf.mxu0
      %v504 = vadd.f32 0.0, %v503
      %v505 = vpop.f32.mrf.mxu0
      %v506 = vadd.f32 0.0, %v505
      %v507 = vpop.f32.mrf.mxu0
      %v508 = vadd.f32 0.0, %v507
      %509 = vmatprep.mubr.bf16.mxu0 0
      %510 = vmatmul.mubr.bf16.gmra.mxu0 %v388
      %v511 = vpop.f32.mrf.mxu0
      %v512 = vadd.f32 0.0, %v511
      %v513 = vpop.f32.mrf.mxu0
      %v514 = vadd.f32 0.0, %v513
      %v515 = vpop.f32.mrf.mxu0
      %v516 = vadd.f32 0.0, %v515
      %v517 = vpop.f32.mrf.mxu0
      %v518 = vadd.f32 0.0, %v517
      %519 = vmatprep.mubr.bf16.mxu0 0
      %520 = vmatmul.mubr.bf16.gmra.mxu0 %v391
      %v521 = vpop.f32.mrf.mxu0
      %v522 = vadd.f32 0.0, %v521
      %v523 = vpop.f32.mrf.mxu0
      %v524 = vadd.f32 0.0, %v523
      %v525 = vpop.f32.mrf.mxu0
      %v526 = vadd.f32 0.0, %v525
      %v527 = vpop.f32.mrf.mxu0
      %v528 = vadd.f32 0.0, %v527
      %529 = vmatprep.mubr.bf16.mxu0 0
      %530 = vmatmul.mubr.bf16.gmra.mxu0 %v394
      %v531 = vpop.f32.mrf.mxu0
      %v532 = vadd.f32 0.0, %v531
      %v533 = vpop.f32.mrf.mxu0
      %v534 = vadd.f32 0.0, %v533
      %v535 = vpop.f32.mrf.mxu0
      %v536 = vadd.f32 0.0, %v535
      %v537 = vpop.f32.mrf.mxu0
      %v538 = vadd.f32 0.0, %v537
      %539 = vmatprep.mubr.bf16.mxu0 0
      %540 = vmatmul.mubr.bf16.gmra.mxu0 %v397
      %v541 = vpop.f32.mrf.mxu0
      %v542 = vadd.f32 0.0, %v541
      %v543 = vpop.f32.mrf.mxu0
      %v544 = vadd.f32 0.0, %v543
      %v545 = vpop.f32.mrf.mxu0
      %v546 = vadd.f32 0.0, %v545
      %v547 = vpop.f32.mrf.mxu0
      %v548 = vadd.f32 0.0, %v547
      %549 = vmatprep.mubr.bf16.mxu0 0
      %550 = vmatmul.mubr.bf16.gmra.mxu0 %v400
      %v551 = vpop.f32.mrf.mxu0
      %v552 = vadd.f32 0.0, %v551
      %v553 = vpop.f32.mrf.mxu0
      %v554 = vadd.f32 0.0, %v553
      %v555 = vpop.f32.mrf.mxu0
      %v556 = vadd.f32 0.0, %v555
      %v557 = vpop.f32.mrf.mxu0
      %v558 = vadd.f32 0.0, %v557
      %559 = vmatprep.mubr.bf16.mxu0 0
      %560 = vmatmul.mubr.bf16.gmra.mxu0 %v403
      %v561 = vpop.f32.mrf.mxu0
      %v562 = vadd.f32 0.0, %v561
      %v563 = vpop.f32.mrf.mxu0
      %v564 = vadd.f32 0.0, %v563
      %v565 = vpop.f32.mrf.mxu0
      %v566 = vadd.f32 0.0, %v565
      %v567 = vpop.f32.mrf.mxu0
      %v568 = vadd.f32 0.0, %v567
      %569 = vmatprep.mubr.bf16.mxu0 0
      %570 = vmatmul.mubr.bf16.gmra.mxu0 %v406
      %v571 = vpop.f32.mrf.mxu0
      %v572 = vadd.f32 0.0, %v571
      %v573 = vpop.f32.mrf.mxu0
      %v574 = vadd.f32 0.0, %v573
      %v575 = vpop.f32.mrf.mxu0
      %v576 = vadd.f32 0.0, %v575
      %v577 = vpop.f32.mrf.mxu0
      %v578 = vadd.f32 0.0, %v577
      %579 = vmatprep.mubr.bf16.mxu0 0
      %580 = vmatmul.mubr.bf16.gmra.mxu0 %v409
      %v581 = vpop.f32.mrf.mxu0
      %v582 = vadd.f32 0.0, %v581
      %v583 = vpop.f32.mrf.mxu0
      %v584 = vadd.f32 0.0, %v583
      %v585 = vpop.f32.mrf.mxu0
      %v586 = vadd.f32 0.0, %v585
      %v587 = vpop.f32.mrf.mxu0
      %v588 = vadd.f32 0.0, %v587
      %589 = vmatprep.mubr.bf16.mxu0 0
      %590 = vmatmul.mubr.bf16.gmra.mxu0 %v412
      %v591 = vpop.f32.mrf.mxu0
      %v592 = vadd.f32 0.0, %v591
      %v593 = vpop.f32.mrf.mxu0
      %v594 = vadd.f32 0.0, %v593
      %v595 = vpop.f32.mrf.mxu0
      %v596 = vadd.f32 0.0, %v595
      %v597 = vpop.f32.mrf.mxu0
      %v598 = vadd.f32 0.0, %v597
      %599 = vmatprep.mubr.bf16.mxu0 0
      %600 = vmatmul.mubr.bf16.gmra.mxu0 %v415
      %v601 = vpop.f32.mrf.mxu0
      %v602 = vadd.f32 0.0, %v601
      %v603 = vpop.f32.mrf.mxu0
      %v604 = vadd.f32 0.0, %v603
      %v605 = vpop.f32.mrf.mxu0
      %v606 = vadd.f32 0.0, %v605
      %v607 = vpop.f32.mrf.mxu0
      %v608 = vadd.f32 0.0, %v607
      %609 = vdwg.mxu0
      %vm642 = vcmask 1046528
      %v643 = vrot.slane %v452, 1
      %v644 = vrot.slane %v456, 1
      %v645 = vsel %vm642, %v643, %v644
      %v646 = vrot.slane %v462, 1
      %v647 = vrot.slane %v466, 1
      %v648 = vsel %vm642, %v646, %v647
      %v649 = vrot.slane %v472, 1
      %v650 = vrot.slane %v476, 1
      %v651 = vsel %vm642, %v649, %v650
      %v652 = vrot.slane %v482, 1
      %v653 = vrot.slane %v486, 1
      %v654 = vsel %vm642, %v652, %v653
      %v655 = vrot.slane %v492, 1
      %v656 = vrot.slane %v496, 1
      %v657 = vsel %vm642, %v655, %v656
      %v658 = vrot.slane %v502, 1
      %v659 = vrot.slane %v506, 1
      %v660 = vsel %vm642, %v658, %v659
      %v661 = vrot.slane %v512, 1
      %v662 = vrot.slane %v516, 1
      %v663 = vsel %vm642, %v661, %v662
      %v664 = vrot.slane %v522, 1
      %v665 = vrot.slane %v526, 1
      %v666 = vsel %vm642, %v664, %v665
      %v667 = vrot.slane %v532, 1
      %v668 = vrot.slane %v536, 1
      %v669 = vsel %vm642, %v667, %v668
      %v670 = vrot.slane %v542, 1
      %v671 = vrot.slane %v546, 1
      %v672 = vsel %vm642, %v670, %v671
      %v673 = vrot.slane %v552, 1
      %v674 = vrot.slane %v556, 1
      %v675 = vsel %vm642, %v673, %v674
      %v676 = vrot.slane %v562, 1
      %v677 = vrot.slane %v566, 1
      %v678 = vsel %vm642, %v676, %v677
      %v679 = vrot.slane %v572, 1
      %v680 = vrot.slane %v576, 1
      %v681 = vsel %vm642, %v679, %v680
      %v682 = vrot.slane %v582, 1
      %v683 = vrot.slane %v586, 1
      %v684 = vsel %vm642, %v682, %v683
      %v685 = vrot.slane %v592, 1
      %v686 = vrot.slane %v596, 1
      %v687 = vsel %vm642, %v685, %v686
      %v688 = vrot.slane %v602, 1
      %v689 = vrot.slane %v606, 1
      %v690 = vsel %vm642, %v688, %v689
      %691 = vrot.lane.b32.xlu0 %v645, 112
      %v692 = vpop.permute.xlu0 %691
      %693 = vrot.lane.b32.xlu0 %v644, 112
      %v694 = vpop.permute.xlu0 %693
      %695 = vrot.lane.b32.xlu0 %v648, 112
      %v696 = vpop.permute.xlu0 %695
      %697 = vrot.lane.b32.xlu0 %v647, 112
      %v698 = vpop.permute.xlu0 %697
      %699 = vrot.lane.b32.xlu0 %v651, 112
      %v700 = vpop.permute.xlu0 %699
      %701 = vrot.lane.b32.xlu0 %v650, 112
      %v702 = vpop.permute.xlu0 %701
      %703 = vrot.lane.b32.xlu0 %v654, 112
      %v704 = vpop.permute.xlu0 %703
      %705 = vrot.lane.b32.xlu0 %v653, 112
      %v706 = vpop.permute.xlu0 %705
      %707 = vrot.lane.b32.xlu0 %v657, 112
      %v708 = vpop.permute.xlu0 %707
      %709 = vrot.lane.b32.xlu0 %v656, 112
      %v710 = vpop.permute.xlu0 %709
      %711 = vrot.lane.b32.xlu0 %v660, 112
      %v712 = vpop.permute.xlu0 %711
      %713 = vrot.lane.b32.xlu0 %v659, 112
      %v714 = vpop.permute.xlu0 %713
      %715 = vrot.lane.b32.xlu0 %v663, 112
      %v716 = vpop.permute.xlu0 %715
      %717 = vrot.lane.b32.xlu0 %v662, 112
      %v718 = vpop.permute.xlu0 %717
      %719 = vrot.lane.b32.xlu0 %v666, 112
      %v720 = vpop.permute.xlu0 %719
      %721 = vrot.lane.b32.xlu0 %v665, 112
      %v722 = vpop.permute.xlu0 %721
      %723 = vrot.lane.b32.xlu0 %v669, 112
      %v724 = vpop.permute.xlu0 %723
      %725 = vrot.lane.b32.xlu0 %v668, 112
      %v726 = vpop.permute.xlu0 %725
      %727 = vrot.lane.b32.xlu0 %v672, 112
      %v728 = vpop.permute.xlu0 %727
      %729 = vrot.lane.b32.xlu0 %v671, 112
      %v730 = vpop.permute.xlu0 %729
      %731 = vrot.lane.b32.xlu0 %v675, 112
      %v732 = vpop.permute.xlu0 %731
      %733 = vrot.lane.b32.xlu0 %v674, 112
      %v734 = vpop.permute.xlu0 %733
      %735 = vrot.lane.b32.xlu0 %v678, 112
      %v736 = vpop.permute.xlu0 %735
      %737 = vrot.lane.b32.xlu0 %v677, 112
      %v738 = vpop.permute.xlu0 %737
      %739 = vrot.lane.b32.xlu0 %v681, 112
      %v740 = vpop.permute.xlu0 %739
      %741 = vrot.lane.b32.xlu0 %v680, 112
      %v742 = vpop.permute.xlu0 %741
      %743 = vrot.lane.b32.xlu0 %v684, 112
      %v744 = vpop.permute.xlu0 %743
      %745 = vrot.lane.b32.xlu0 %v683, 112
      %v746 = vpop.permute.xlu0 %745
      %747 = vrot.lane.b32.xlu0 %v687, 112
      %v748 = vpop.permute.xlu0 %747
      %749 = vrot.lane.b32.xlu0 %v686, 112
      %v750 = vpop.permute.xlu0 %749
      %751 = vrot.lane.b32.xlu0 %v690, 112
      %v752 = vpop.permute.xlu0 %751
      %753 = vrot.lane.b32.xlu0 %v689, 112
      %v754 = vpop.permute.xlu0 %753
      %v787 = vadd.f32 %v452, %v692
      %v788 = vadd.f32 %v456, %v694
      %v789 = vadd.f32 %v462, %v696
      %v790 = vadd.f32 %v466, %v698
      %v791 = vadd.f32 %v472, %v700
      %v792 = vadd.f32 %v476, %v702
      %v793 = vadd.f32 %v482, %v704
      %v794 = vadd.f32 %v486, %v706
      %v795 = vadd.f32 %v492, %v708
      %v796 = vadd.f32 %v496, %v710
      %v797 = vadd.f32 %v502, %v712
      %v798 = vadd.f32 %v506, %v714
      %v799 = vadd.f32 %v512, %v716
      %v800 = vadd.f32 %v516, %v718
      %v801 = vadd.f32 %v522, %v720
      %v802 = vadd.f32 %v526, %v722
      %v803 = vadd.f32 %v532, %v724
      %v804 = vadd.f32 %v536, %v726
      %v805 = vadd.f32 %v542, %v728
      %v806 = vadd.f32 %v546, %v730
      %v807 = vadd.f32 %v552, %v732
      %v808 = vadd.f32 %v556, %v734
      %v809 = vadd.f32 %v562, %v736
      %v810 = vadd.f32 %v566, %v738
      %v811 = vadd.f32 %v572, %v740
      %v812 = vadd.f32 %v576, %v742
      %v813 = vadd.f32 %v582, %v744
      %v814 = vadd.f32 %v586, %v746
      %v815 = vadd.f32 %v592, %v748
      %v816 = vadd.f32 %v596, %v750
      %v817 = vadd.f32 %v602, %v752
      %v818 = vadd.f32 %v606, %v754
      %vm819 = vcmask 1045504
      %v820 = vrot.slane %v452, 2
      %v821 = vrot.slane %v456, 2
      %v822 = vsel %vm819, %v820, %v821
      %v823 = vrot.slane %v462, 2
      %v824 = vrot.slane %v466, 2
      %v825 = vsel %vm819, %v823, %v824
      %v826 = vrot.slane %v472, 2
      %v827 = vrot.slane %v476, 2
      %v828 = vsel %vm819, %v826, %v827
      %v829 = vrot.slane %v482, 2
      %v830 = vrot.slane %v486, 2
      %v831 = vsel %vm819, %v829, %v830
      %v832 = vrot.slane %v492, 2
      %v833 = vrot.slane %v496, 2
      %v834 = vsel %vm819, %v832, %v833
      %v835 = vrot.slane %v502, 2
      %v836 = vrot.slane %v506, 2
      %v837 = vsel %vm819, %v835, %v836
      %v838 = vrot.slane %v512, 2
      %v839 = vrot.slane %v516, 2
      %v840 = vsel %vm819, %v838, %v839
      %v841 = vrot.slane %v522, 2
      %v842 = vrot.slane %v526, 2
      %v843 = vsel %vm819, %v841, %v842
      %v844 = vrot.slane %v532, 2
      %v845 = vrot.slane %v536, 2
      %v846 = vsel %vm819, %v844, %v845
      %v847 = vrot.slane %v542, 2
      %v848 = vrot.slane %v546, 2
      %v849 = vsel %vm819, %v847, %v848
      %v850 = vrot.slane %v552, 2
      %v851 = vrot.slane %v556, 2
      %v852 = vsel %vm819, %v850, %v851
      %v853 = vrot.slane %v562, 2
      %v854 = vrot.slane %v566, 2
      %v855 = vsel %vm819, %v853, %v854
      %v856 = vrot.slane %v572, 2
      %v857 = vrot.slane %v576, 2
      %v858 = vsel %vm819, %v856, %v857
      %v859 = vrot.slane %v582, 2
      %v860 = vrot.slane %v586, 2
      %v861 = vsel %vm819, %v859, %v860
      %v862 = vrot.slane %v592, 2
      %v863 = vrot.slane %v596, 2
      %v864 = vsel %vm819, %v862, %v863
      %v865 = vrot.slane %v602, 2
      %v866 = vrot.slane %v606, 2
      %v867 = vsel %vm819, %v865, %v866
      %868 = vrot.lane.b32.xlu0 %v822, 96
      %v869 = vpop.permute.xlu0 %868
      %870 = vrot.lane.b32.xlu0 %v821, 96
      %v871 = vpop.permute.xlu0 %870
      %872 = vrot.lane.b32.xlu0 %v825, 96
      %v873 = vpop.permute.xlu0 %872
      %874 = vrot.lane.b32.xlu0 %v824, 96
      %v875 = vpop.permute.xlu0 %874
      %876 = vrot.lane.b32.xlu0 %v828, 96
      %v877 = vpop.permute.xlu0 %876
      %878 = vrot.lane.b32.xlu0 %v827, 96
      %v879 = vpop.permute.xlu0 %878
      %880 = vrot.lane.b32.xlu0 %v831, 96
      %v881 = vpop.permute.xlu0 %880
      %882 = vrot.lane.b32.xlu0 %v830, 96
      %v883 = vpop.permute.xlu0 %882
      %884 = vrot.lane.b32.xlu0 %v834, 96
      %v885 = vpop.permute.xlu0 %884
      %886 = vrot.lane.b32.xlu0 %v833, 96
      %v887 = vpop.permute.xlu0 %886
      %888 = vrot.lane.b32.xlu0 %v837, 96
      %v889 = vpop.permute.xlu0 %888
      %890 = vrot.lane.b32.xlu0 %v836, 96
      %v891 = vpop.permute.xlu0 %890
      %892 = vrot.lane.b32.xlu0 %v840, 96
      %v893 = vpop.permute.xlu0 %892
      %894 = vrot.lane.b32.xlu0 %v839, 96
      %v895 = vpop.permute.xlu0 %894
      %896 = vrot.lane.b32.xlu0 %v843, 96
      %v897 = vpop.permute.xlu0 %896
      %898 = vrot.lane.b32.xlu0 %v842, 96
      %v899 = vpop.permute.xlu0 %898
      %900 = vrot.lane.b32.xlu0 %v846, 96
      %v901 = vpop.permute.xlu0 %900
      %902 = vrot.lane.b32.xlu0 %v845, 96
      %v903 = vpop.permute.xlu0 %902
      %904 = vrot.lane.b32.xlu0 %v849, 96
      %v905 = vpop.permute.xlu0 %904
      %906 = vrot.lane.b32.xlu0 %v848, 96
      %v907 = vpop.permute.xlu0 %906
      %908 = vrot.lane.b32.xlu0 %v852, 96
      %v909 = vpop.permute.xlu0 %908
      %910 = vrot.lane.b32.xlu0 %v851, 96
      %v911 = vpop.permute.xlu0 %910
      %912 = vrot.lane.b32.xlu0 %v855, 96
      %v913 = vpop.permute.xlu0 %912
      %914 = vrot.lane.b32.xlu0 %v854, 96
      %v915 = vpop.permute.xlu0 %914
      %916 = vrot.lane.b32.xlu0 %v858, 96
      %v917 = vpop.permute.xlu0 %916
      %918 = vrot.lane.b32.xlu0 %v857, 96
      %v919 = vpop.permute.xlu0 %918
      %920 = vrot.lane.b32.xlu0 %v861, 96
      %v921 = vpop.permute.xlu0 %920
      %922 = vrot.lane.b32.xlu0 %v860, 96
      %v923 = vpop.permute.xlu0 %922
      %924 = vrot.lane.b32.xlu0 %v864, 96
      %v925 = vpop.permute.xlu0 %924
      %926 = vrot.lane.b32.xlu0 %v863, 96
      %v927 = vpop.permute.xlu0 %926
      %928 = vrot.lane.b32.xlu0 %v867, 96
      %v929 = vpop.permute.xlu0 %928
      %930 = vrot.lane.b32.xlu0 %v866, 96
      %v931 = vpop.permute.xlu0 %930
      %v964 = vadd.f32 %v787, %v869
      %v965 = vadd.f32 %v788, %v871
      %v966 = vadd.f32 %v789, %v873
      %v967 = vadd.f32 %v790, %v875
      %v968 = vadd.f32 %v791, %v877
      %v969 = vadd.f32 %v792, %v879
      %v970 = vadd.f32 %v793, %v881
      %v971 = vadd.f32 %v794, %v883
      %v972 = vadd.f32 %v795, %v885
      %v973 = vadd.f32 %v796, %v887
      %v974 = vadd.f32 %v797, %v889
      %v975 = vadd.f32 %v798, %v891
      %v976 = vadd.f32 %v799, %v893
      %v977 = vadd.f32 %v800, %v895
      %v978 = vadd.f32 %v801, %v897
      %v979 = vadd.f32 %v802, %v899
      %v980 = vadd.f32 %v803, %v901
      %v981 = vadd.f32 %v804, %v903
      %v982 = vadd.f32 %v805, %v905
      %v983 = vadd.f32 %v806, %v907
      %v984 = vadd.f32 %v807, %v909
      %v985 = vadd.f32 %v808, %v911
      %v986 = vadd.f32 %v809, %v913
      %v987 = vadd.f32 %v810, %v915
      %v988 = vadd.f32 %v811, %v917
      %v989 = vadd.f32 %v812, %v919
      %v990 = vadd.f32 %v813, %v921
      %v991 = vadd.f32 %v814, %v923
      %v992 = vadd.f32 %v815, %v925
      %v993 = vadd.f32 %v816, %v927
      %v994 = vadd.f32 %v817, %v929
      %v995 = vadd.f32 %v818, %v931
      %vm996 = vcmask 130048
      %v997 = vsel %vm996, %v964, -inf
      %vm998 = vcmask 128000
      %v999 = vsel %vm998, %v965, -inf
      %v1000 = vmax.f32 %v997, %v999
      %v1001 = vrot.slane %v1000, 4
      %v1002 = vmax.f32 %v1000, %v1001
      %v1003 = vrot.slane %v1002, 2
      %v1004 = vmax.f32 %v1002, %v1003
      %v1005 = vrot.slane %v1004, 1
      %v1006 = vmax.f32 %v1004, %v1005
      %v1007 = vsel %vm996, %v966, -inf
      %v1008 = vsel %vm998, %v967, -inf
      %v1009 = vmax.f32 %v1007, %v1008
      %v1010 = vrot.slane %v1009, 4
      %v1011 = vmax.f32 %v1009, %v1010
      %v1012 = vrot.slane %v1011, 2
      %v1013 = vmax.f32 %v1011, %v1012
      %v1014 = vrot.slane %v1013, 1
      %v1015 = vmax.f32 %v1013, %v1014
      %v1016 = vsel %vm996, %v968, -inf
      %v1017 = vsel %vm998, %v969, -inf
      %v1018 = vmax.f32 %v1016, %v1017
      %v1019 = vrot.slane %v1018, 4
      %v1020 = vmax.f32 %v1018, %v1019
      %v1021 = vrot.slane %v1020, 2
      %v1022 = vmax.f32 %v1020, %v1021
      %v1023 = vrot.slane %v1022, 1
      %v1024 = vmax.f32 %v1022, %v1023
      %v1025 = vsel %vm996, %v970, -inf
      %v1026 = vsel %vm998, %v971, -inf
      %v1027 = vmax.f32 %v1025, %v1026
      %v1028 = vrot.slane %v1027, 4
      %v1029 = vmax.f32 %v1027, %v1028
      %v1030 = vrot.slane %v1029, 2
      %v1031 = vmax.f32 %v1029, %v1030
      %v1032 = vrot.slane %v1031, 1
      %v1033 = vmax.f32 %v1031, %v1032
      %v1034 = vsel %vm996, %v972, -inf
      %v1035 = vsel %vm998, %v973, -inf
      %v1036 = vmax.f32 %v1034, %v1035
      %v1037 = vrot.slane %v1036, 4
      %v1038 = vmax.f32 %v1036, %v1037
      %v1039 = vrot.slane %v1038, 2
      %v1040 = vmax.f32 %v1038, %v1039
      %v1041 = vrot.slane %v1040, 1
      %v1042 = vmax.f32 %v1040, %v1041
      %v1043 = vsel %vm996, %v974, -inf
      %v1044 = vsel %vm998, %v975, -inf
      %v1045 = vmax.f32 %v1043, %v1044
      %v1046 = vrot.slane %v1045, 4
      %v1047 = vmax.f32 %v1045, %v1046
      %v1048 = vrot.slane %v1047, 2
      %v1049 = vmax.f32 %v1047, %v1048
      %v1050 = vrot.slane %v1049, 1
      %v1051 = vmax.f32 %v1049, %v1050
      %v1052 = vsel %vm996, %v976, -inf
      %v1053 = vsel %vm998, %v977, -inf
      %v1054 = vmax.f32 %v1052, %v1053
      %v1055 = vrot.slane %v1054, 4
      %v1056 = vmax.f32 %v1054, %v1055
      %v1057 = vrot.slane %v1056, 2
      %v1058 = vmax.f32 %v1056, %v1057
      %v1059 = vrot.slane %v1058, 1
      %v1060 = vmax.f32 %v1058, %v1059
      %v1061 = vsel %vm996, %v978, -inf
      %v1062 = vsel %vm998, %v979, -inf
      %v1063 = vmax.f32 %v1061, %v1062
      %v1064 = vrot.slane %v1063, 4
      %v1065 = vmax.f32 %v1063, %v1064
      %v1066 = vrot.slane %v1065, 2
      %v1067 = vmax.f32 %v1065, %v1066
      %v1068 = vrot.slane %v1067, 1
      %v1069 = vmax.f32 %v1067, %v1068
      %v1070 = vsel %vm996, %v980, -inf
      %v1071 = vsel %vm998, %v981, -inf
      %v1072 = vmax.f32 %v1070, %v1071
      %v1073 = vrot.slane %v1072, 4
      %v1074 = vmax.f32 %v1072, %v1073
      %v1075 = vrot.slane %v1074, 2
      %v1076 = vmax.f32 %v1074, %v1075
      %v1077 = vrot.slane %v1076, 1
      %v1078 = vmax.f32 %v1076, %v1077
      %v1079 = vsel %vm996, %v982, -inf
      %v1080 = vsel %vm998, %v983, -inf
      %v1081 = vmax.f32 %v1079, %v1080
      %v1082 = vrot.slane %v1081, 4
      %v1083 = vmax.f32 %v1081, %v1082
      %v1084 = vrot.slane %v1083, 2
      %v1085 = vmax.f32 %v1083, %v1084
      %v1086 = vrot.slane %v1085, 1
      %v1087 = vmax.f32 %v1085, %v1086
      %v1088 = vsel %vm996, %v984, -inf
      %v1089 = vsel %vm998, %v985, -inf
      %v1090 = vmax.f32 %v1088, %v1089
      %v1091 = vrot.slane %v1090, 4
      %v1092 = vmax.f32 %v1090, %v1091
      %v1093 = vrot.slane %v1092, 2
      %v1094 = vmax.f32 %v1092, %v1093
      %v1095 = vrot.slane %v1094, 1
      %v1096 = vmax.f32 %v1094, %v1095
      %v1097 = vsel %vm996, %v986, -inf
      %v1098 = vsel %vm998, %v987, -inf
      %v1099 = vmax.f32 %v1097, %v1098
      %v1100 = vrot.slane %v1099, 4
      %v1101 = vmax.f32 %v1099, %v1100
      %v1102 = vrot.slane %v1101, 2
      %v1103 = vmax.f32 %v1101, %v1102
      %v1104 = vrot.slane %v1103, 1
      %v1105 = vmax.f32 %v1103, %v1104
      %v1106 = vsel %vm996, %v988, -inf
      %v1107 = vsel %vm998, %v989, -inf
      %v1108 = vmax.f32 %v1106, %v1107
      %v1109 = vrot.slane %v1108, 4
      %v1110 = vmax.f32 %v1108, %v1109
      %v1111 = vrot.slane %v1110, 2
      %v1112 = vmax.f32 %v1110, %v1111
      %v1113 = vrot.slane %v1112, 1
      %v1114 = vmax.f32 %v1112, %v1113
      %v1115 = vsel %vm996, %v990, -inf
      %v1116 = vsel %vm998, %v991, -inf
      %v1117 = vmax.f32 %v1115, %v1116
      %v1118 = vrot.slane %v1117, 4
      %v1119 = vmax.f32 %v1117, %v1118
      %v1120 = vrot.slane %v1119, 2
      %v1121 = vmax.f32 %v1119, %v1120
      %v1122 = vrot.slane %v1121, 1
      %v1123 = vmax.f32 %v1121, %v1122
      %v1124 = vsel %vm996, %v992, -inf
      %v1125 = vsel %vm998, %v993, -inf
      %v1126 = vmax.f32 %v1124, %v1125
      %v1127 = vrot.slane %v1126, 4
      %v1128 = vmax.f32 %v1126, %v1127
      %v1129 = vrot.slane %v1128, 2
      %v1130 = vmax.f32 %v1128, %v1129
      %v1131 = vrot.slane %v1130, 1
      %v1132 = vmax.f32 %v1130, %v1131
      %v1133 = vsel %vm996, %v994, -inf
      %v1134 = vsel %vm998, %v995, -inf
      %v1135 = vmax.f32 %v1133, %v1134
      %v1136 = vrot.slane %v1135, 4
      %v1137 = vmax.f32 %v1135, %v1136
      %v1138 = vrot.slane %v1137, 2
      %v1139 = vmax.f32 %v1137, %v1138
      %v1140 = vrot.slane %v1139, 1
      %v1141 = vmax.f32 %v1139, %v1140
      %v1142 = vld [vmem:[%s2] sm:$0x1]
      %v1144 = vlaneseq
      %v1145 = vshrl.u32 %v1144, 7
      %v1146 = vsub.s32 0, %v1145
      %v1147 = vrot.slane %v1142, %v1146
      %v1149 = vadd.f32 %v1006, %v1147
      %v1150 = vadd.f32 %v1015, %v1147
      %v1151 = vadd.f32 %v1024, %v1147
      %v1152 = vadd.f32 %v1033, %v1147
      %v1153 = vadd.f32 %v1042, %v1147
      %v1154 = vadd.f32 %v1051, %v1147
      %v1155 = vadd.f32 %v1060, %v1147
      %v1156 = vadd.f32 %v1069, %v1147
      %v1157 = vadd.f32 %v1078, %v1147
      %v1158 = vadd.f32 %v1087, %v1147
      %v1159 = vadd.f32 %v1096, %v1147
      %v1160 = vadd.f32 %v1105, %v1147
      %v1161 = vadd.f32 %v1114, %v1147
      %v1162 = vadd.f32 %v1123, %v1147
      %v1163 = vadd.f32 %v1132, %v1147
      %v1164 = vadd.f32 %v1141, %v1147
      %v1165 = vmax.f32 %v1149, 0.0
      %v1166 = vmax.f32 %v1150, 0.0
      %v1167 = vmax.f32 %v1151, 0.0
      %v1168 = vmax.f32 %v1152, 0.0
      %v1169 = vmax.f32 %v1153, 0.0
      %v1170 = vmax.f32 %v1154, 0.0
      %v1171 = vmax.f32 %v1155, 0.0
      %v1172 = vmax.f32 %v1156, 0.0
      %v1173 = vmax.f32 %v1157, 0.0
      %v1174 = vmax.f32 %v1158, 0.0
      %v1175 = vmax.f32 %v1159, 0.0
      %v1176 = vmax.f32 %v1160, 0.0
      %v1177 = vmax.f32 %v1161, 0.0
      %v1178 = vmax.f32 %v1162, 0.0
      %v1179 = vmax.f32 %v1163, 0.0
      %v1180 = vmax.f32 %v1164, 0.0
      %vm1181 = vcmask 1044480
      %v1182 = vrot.slane %v452, 3
      %v1183 = vrot.slane %v456, 3
      %v1184 = vsel %vm1181, %v1182, %v1183
      %v1185 = vrot.slane %v462, 3
      %v1186 = vrot.slane %v466, 3
      %v1187 = vsel %vm1181, %v1185, %v1186
      %v1188 = vrot.slane %v472, 3
      %v1189 = vrot.slane %v476, 3
      %v1190 = vsel %vm1181, %v1188, %v1189
      %v1191 = vrot.slane %v482, 3
      %v1192 = vrot.slane %v486, 3
      %v1193 = vsel %vm1181, %v1191, %v1192
      %v1194 = vrot.slane %v492, 3
      %v1195 = vrot.slane %v496, 3
      %v1196 = vsel %vm1181, %v1194, %v1195
      %v1197 = vrot.slane %v502, 3
      %v1198 = vrot.slane %v506, 3
      %v1199 = vsel %vm1181, %v1197, %v1198
      %v1200 = vrot.slane %v512, 3
      %v1201 = vrot.slane %v516, 3
      %v1202 = vsel %vm1181, %v1200, %v1201
      %v1203 = vrot.slane %v522, 3
      %v1204 = vrot.slane %v526, 3
      %v1205 = vsel %vm1181, %v1203, %v1204
      %v1206 = vrot.slane %v532, 3
      %v1207 = vrot.slane %v536, 3
      %v1208 = vsel %vm1181, %v1206, %v1207
      %v1209 = vrot.slane %v542, 3
      %v1210 = vrot.slane %v546, 3
      %v1211 = vsel %vm1181, %v1209, %v1210
      %v1212 = vrot.slane %v552, 3
      %v1213 = vrot.slane %v556, 3
      %v1214 = vsel %vm1181, %v1212, %v1213
      %v1215 = vrot.slane %v562, 3
      %v1216 = vrot.slane %v566, 3
      %v1217 = vsel %vm1181, %v1215, %v1216
      %v1218 = vrot.slane %v572, 3
      %v1219 = vrot.slane %v576, 3
      %v1220 = vsel %vm1181, %v1218, %v1219
      %v1221 = vrot.slane %v582, 3
      %v1222 = vrot.slane %v586, 3
      %v1223 = vsel %vm1181, %v1221, %v1222
      %v1224 = vrot.slane %v592, 3
      %v1225 = vrot.slane %v596, 3
      %v1226 = vsel %vm1181, %v1224, %v1225
      %v1227 = vrot.slane %v602, 3
      %v1228 = vrot.slane %v606, 3
      %v1229 = vsel %vm1181, %v1227, %v1228
      %1230 = vrot.lane.b32.xlu0 %v1184, 80
      %v1231 = vpop.permute.xlu0 %1230
      %1232 = vrot.lane.b32.xlu0 %v1183, 80
      %v1233 = vpop.permute.xlu0 %1232
      %1234 = vrot.lane.b32.xlu0 %v1187, 80
      %v1235 = vpop.permute.xlu0 %1234
      %1236 = vrot.lane.b32.xlu0 %v1186, 80
      %v1237 = vpop.permute.xlu0 %1236
      %1238 = vrot.lane.b32.xlu0 %v1190, 80
      %v1239 = vpop.permute.xlu0 %1238
      %1240 = vrot.lane.b32.xlu0 %v1189, 80
      %v1241 = vpop.permute.xlu0 %1240
      %1242 = vrot.lane.b32.xlu0 %v1193, 80
      %v1243 = vpop.permute.xlu0 %1242
      %1244 = vrot.lane.b32.xlu0 %v1192, 80
      %v1245 = vpop.permute.xlu0 %1244
      %1246 = vrot.lane.b32.xlu0 %v1196, 80
      %v1247 = vpop.permute.xlu0 %1246
      %1248 = vrot.lane.b32.xlu0 %v1195, 80
      %v1249 = vpop.permute.xlu0 %1248
      %1250 = vrot.lane.b32.xlu0 %v1199, 80
      %v1251 = vpop.permute.xlu0 %1250
      %1252 = vrot.lane.b32.xlu0 %v1198, 80
      %v1253 = vpop.permute.xlu0 %1252
      %1254 = vrot.lane.b32.xlu0 %v1202, 80
      %v1255 = vpop.permute.xlu0 %1254
      %1256 = vrot.lane.b32.xlu0 %v1201, 80
      %v1257 = vpop.permute.xlu0 %1256
      %1258 = vrot.lane.b32.xlu0 %v1205, 80
      %v1259 = vpop.permute.xlu0 %1258
      %1260 = vrot.lane.b32.xlu0 %v1204, 80
      %v1261 = vpop.permute.xlu0 %1260
      %1262 = vrot.lane.b32.xlu0 %v1208, 80
      %v1263 = vpop.permute.xlu0 %1262
      %1264 = vrot.lane.b32.xlu0 %v1207, 80
      %v1265 = vpop.permute.xlu0 %1264
      %1266 = vrot.lane.b32.xlu0 %v1211, 80
      %v1267 = vpop.permute.xlu0 %1266
      %1268 = vrot.lane.b32.xlu0 %v1210, 80
      %v1269 = vpop.permute.xlu0 %1268
      %1270 = vrot.lane.b32.xlu0 %v1214, 80
      %v1271 = vpop.permute.xlu0 %1270
      %1272 = vrot.lane.b32.xlu0 %v1213, 80
      %v1273 = vpop.permute.xlu0 %1272
      %1274 = vrot.lane.b32.xlu0 %v1217, 80
      %v1275 = vpop.permute.xlu0 %1274
      %1276 = vrot.lane.b32.xlu0 %v1216, 80
      %v1277 = vpop.permute.xlu0 %1276
      %1278 = vrot.lane.b32.xlu0 %v1220, 80
      %v1279 = vpop.permute.xlu0 %1278
      %1280 = vrot.lane.b32.xlu0 %v1219, 80
      %v1281 = vpop.permute.xlu0 %1280
      %1282 = vrot.lane.b32.xlu0 %v1223, 80
      %v1283 = vpop.permute.xlu0 %1282
      %1284 = vrot.lane.b32.xlu0 %v1222, 80
      %v1285 = vpop.permute.xlu0 %1284
      %1286 = vrot.lane.b32.xlu0 %v1226, 80
      %v1287 = vpop.permute.xlu0 %1286
      %1288 = vrot.lane.b32.xlu0 %v1225, 80
      %v1289 = vpop.permute.xlu0 %1288
      %1290 = vrot.lane.b32.xlu0 %v1229, 80
      %v1291 = vpop.permute.xlu0 %1290
      %1292 = vrot.lane.b32.xlu0 %v1228, 80
      %v1293 = vpop.permute.xlu0 %1292
      %v1326 = vadd.f32 %v964, %v1231
      %v1327 = vadd.f32 %v965, %v1233
      %v1328 = vadd.f32 %v966, %v1235
      %v1329 = vadd.f32 %v967, %v1237
      %v1330 = vadd.f32 %v968, %v1239
      %v1331 = vadd.f32 %v969, %v1241
      %v1332 = vadd.f32 %v970, %v1243
      %v1333 = vadd.f32 %v971, %v1245
      %v1334 = vadd.f32 %v972, %v1247
      %v1335 = vadd.f32 %v973, %v1249
      %v1336 = vadd.f32 %v974, %v1251
      %v1337 = vadd.f32 %v975, %v1253
      %v1338 = vadd.f32 %v976, %v1255
      %v1339 = vadd.f32 %v977, %v1257
      %v1340 = vadd.f32 %v978, %v1259
      %v1341 = vadd.f32 %v979, %v1261
      %v1342 = vadd.f32 %v980, %v1263
      %v1343 = vadd.f32 %v981, %v1265
      %v1344 = vadd.f32 %v982, %v1267
      %v1345 = vadd.f32 %v983, %v1269
      %v1346 = vadd.f32 %v984, %v1271
      %v1347 = vadd.f32 %v985, %v1273
      %v1348 = vadd.f32 %v986, %v1275
      %v1349 = vadd.f32 %v987, %v1277
      %v1350 = vadd.f32 %v988, %v1279
      %v1351 = vadd.f32 %v989, %v1281
      %v1352 = vadd.f32 %v990, %v1283
      %v1353 = vadd.f32 %v991, %v1285
      %v1354 = vadd.f32 %v992, %v1287
      %v1355 = vadd.f32 %v993, %v1289
      %v1356 = vadd.f32 %v994, %v1291
      %v1357 = vadd.f32 %v995, %v1293
      %vm1358 = vcmask 523648
      %v1359 = vsel %vm1358, %v1326, -inf
      %vm1360 = vcmask 520576
      %v1361 = vsel %vm1360, %v1327, -inf
      %v1362 = vmax.f32 %v1359, %v1361
      %v1363 = vrot.slane %v1362, 4
      %v1364 = vmax.f32 %v1362, %v1363
      %v1365 = vrot.slane %v1364, 2
      %v1366 = vmax.f32 %v1364, %v1365
      %v1367 = vrot.slane %v1366, 1
      %v1368 = vmax.f32 %v1366, %v1367
      %v1369 = vsel %vm1358, %v1328, -inf
      %v1370 = vsel %vm1360, %v1329, -inf
      %v1371 = vmax.f32 %v1369, %v1370
      %v1372 = vrot.slane %v1371, 4
      %v1373 = vmax.f32 %v1371, %v1372
      %v1374 = vrot.slane %v1373, 2
      %v1375 = vmax.f32 %v1373, %v1374
      %v1376 = vrot.slane %v1375, 1
      %v1377 = vmax.f32 %v1375, %v1376
      %v1378 = vsel %vm1358, %v1330, -inf
      %v1379 = vsel %vm1360, %v1331, -inf
      %v1380 = vmax.f32 %v1378, %v1379
      %v1381 = vrot.slane %v1380, 4
      %v1382 = vmax.f32 %v1380, %v1381
      %v1383 = vrot.slane %v1382, 2
      %v1384 = vmax.f32 %v1382, %v1383
      %v1385 = vrot.slane %v1384, 1
      %v1386 = vmax.f32 %v1384, %v1385
      %v1387 = vsel %vm1358, %v1332, -inf
      %v1388 = vsel %vm1360, %v1333, -inf
      %v1389 = vmax.f32 %v1387, %v1388
      %v1390 = vrot.slane %v1389, 4
      %v1391 = vmax.f32 %v1389, %v1390
      %v1392 = vrot.slane %v1391, 2
      %v1393 = vmax.f32 %v1391, %v1392
      %v1394 = vrot.slane %v1393, 1
      %v1395 = vmax.f32 %v1393, %v1394
      %v1396 = vsel %vm1358, %v1334, -inf
      %v1397 = vsel %vm1360, %v1335, -inf
      %v1398 = vmax.f32 %v1396, %v1397
      %v1399 = vrot.slane %v1398, 4
      %v1400 = vmax.f32 %v1398, %v1399
      %v1401 = vrot.slane %v1400, 2
      %v1402 = vmax.f32 %v1400, %v1401
      %v1403 = vrot.slane %v1402, 1
      %v1404 = vmax.f32 %v1402, %v1403
      %v1405 = vsel %vm1358, %v1336, -inf
      %v1406 = vsel %vm1360, %v1337, -inf
      %v1407 = vmax.f32 %v1405, %v1406
      %v1408 = vrot.slane %v1407, 4
      %v1409 = vmax.f32 %v1407, %v1408
      %v1410 = vrot.slane %v1409, 2
      %v1411 = vmax.f32 %v1409, %v1410
      %v1412 = vrot.slane %v1411, 1
      %v1413 = vmax.f32 %v1411, %v1412
      %v1414 = vsel %vm1358, %v1338, -inf
      %v1415 = vsel %vm1360, %v1339, -inf
      %v1416 = vmax.f32 %v1414, %v1415
      %v1417 = vrot.slane %v1416, 4
      %v1418 = vmax.f32 %v1416, %v1417
      %v1419 = vrot.slane %v1418, 2
      %v1420 = vmax.f32 %v1418, %v1419
      %v1421 = vrot.slane %v1420, 1
      %v1422 = vmax.f32 %v1420, %v1421
      %v1423 = vsel %vm1358, %v1340, -inf
      %v1424 = vsel %vm1360, %v1341, -inf
      %v1425 = vmax.f32 %v1423, %v1424
      %v1426 = vrot.slane %v1425, 4
      %v1427 = vmax.f32 %v1425, %v1426
      %v1428 = vrot.slane %v1427, 2
      %v1429 = vmax.f32 %v1427, %v1428
      %v1430 = vrot.slane %v1429, 1
      %v1431 = vmax.f32 %v1429, %v1430
      %v1432 = vsel %vm1358, %v1342, -inf
      %v1433 = vsel %vm1360, %v1343, -inf
      %v1434 = vmax.f32 %v1432, %v1433
      %v1435 = vrot.slane %v1434, 4
      %v1436 = vmax.f32 %v1434, %v1435
      %v1437 = vrot.slane %v1436, 2
      %v1438 = vmax.f32 %v1436, %v1437
      %v1439 = vrot.slane %v1438, 1
      %v1440 = vmax.f32 %v1438, %v1439
      %v1441 = vsel %vm1358, %v1344, -inf
      %v1442 = vsel %vm1360, %v1345, -inf
      %v1443 = vmax.f32 %v1441, %v1442
      %v1444 = vrot.slane %v1443, 4
      %v1445 = vmax.f32 %v1443, %v1444
      %v1446 = vrot.slane %v1445, 2
      %v1447 = vmax.f32 %v1445, %v1446
      %v1448 = vrot.slane %v1447, 1
      %v1449 = vmax.f32 %v1447, %v1448
      %v1450 = vsel %vm1358, %v1346, -inf
      %v1451 = vsel %vm1360, %v1347, -inf
      %v1452 = vmax.f32 %v1450, %v1451
      %v1453 = vrot.slane %v1452, 4
      %v1454 = vmax.f32 %v1452, %v1453
      %v1455 = vrot.slane %v1454, 2
      %v1456 = vmax.f32 %v1454, %v1455
      %v1457 = vrot.slane %v1456, 1
      %v1458 = vmax.f32 %v1456, %v1457
      %v1459 = vsel %vm1358, %v1348, -inf
      %v1460 = vsel %vm1360, %v1349, -inf
      %v1461 = vmax.f32 %v1459, %v1460
      %v1462 = vrot.slane %v1461, 4
      %v1463 = vmax.f32 %v1461, %v1462
      %v1464 = vrot.slane %v1463, 2
      %v1465 = vmax.f32 %v1463, %v1464
      %v1466 = vrot.slane %v1465, 1
      %v1467 = vmax.f32 %v1465, %v1466
      %v1468 = vsel %vm1358, %v1350, -inf
      %v1469 = vsel %vm1360, %v1351, -inf
      %v1470 = vmax.f32 %v1468, %v1469
      %v1471 = vrot.slane %v1470, 4
      %v1472 = vmax.f32 %v1470, %v1471
      %v1473 = vrot.slane %v1472, 2
      %v1474 = vmax.f32 %v1472, %v1473
      %v1475 = vrot.slane %v1474, 1
      %v1476 = vmax.f32 %v1474, %v1475
      %v1477 = vsel %vm1358, %v1352, -inf
      %v1478 = vsel %vm1360, %v1353, -inf
      %v1479 = vmax.f32 %v1477, %v1478
      %v1480 = vrot.slane %v1479, 4
      %v1481 = vmax.f32 %v1479, %v1480
      %v1482 = vrot.slane %v1481, 2
      %v1483 = vmax.f32 %v1481, %v1482
      %v1484 = vrot.slane %v1483, 1
      %v1485 = vmax.f32 %v1483, %v1484
      %v1486 = vsel %vm1358, %v1354, -inf
      %v1487 = vsel %vm1360, %v1355, -inf
      %v1488 = vmax.f32 %v1486, %v1487
      %v1489 = vrot.slane %v1488, 4
      %v1490 = vmax.f32 %v1488, %v1489
      %v1491 = vrot.slane %v1490, 2
      %v1492 = vmax.f32 %v1490, %v1491
      %v1493 = vrot.slane %v1492, 1
      %v1494 = vmax.f32 %v1492, %v1493
      %v1495 = vsel %vm1358, %v1356, -inf
      %v1496 = vsel %vm1360, %v1357, -inf
      %v1497 = vmax.f32 %v1495, %v1496
      %v1498 = vrot.slane %v1497, 4
      %v1499 = vmax.f32 %v1497, %v1498
      %v1500 = vrot.slane %v1499, 2
      %v1501 = vmax.f32 %v1499, %v1500
      %v1502 = vrot.slane %v1501, 1
      %v1503 = vmax.f32 %v1501, %v1502
      %1504 = vrot.lane.b32.xlu0 %v1147, 32
      %v1505 = vpop.permute.xlu0 %1504
      %v1507 = vadd.f32 %v1368, %v1505
      %v1508 = vadd.f32 %v1377, %v1505
      %v1509 = vadd.f32 %v1386, %v1505
      %v1510 = vadd.f32 %v1395, %v1505
      %v1511 = vadd.f32 %v1404, %v1505
      %v1512 = vadd.f32 %v1413, %v1505
      %v1513 = vadd.f32 %v1422, %v1505
      %v1514 = vadd.f32 %v1431, %v1505
      %v1515 = vadd.f32 %v1440, %v1505
      %v1516 = vadd.f32 %v1449, %v1505
      %v1517 = vadd.f32 %v1458, %v1505
      %v1518 = vadd.f32 %v1467, %v1505
      %v1519 = vadd.f32 %v1476, %v1505
      %v1520 = vadd.f32 %v1485, %v1505
      %v1521 = vadd.f32 %v1494, %v1505
      %v1522 = vadd.f32 %v1503, %v1505
      %v1523 = vmax.f32 %v1507, 0.0
      %v1524 = vmax.f32 %v1508, 0.0
      %v1525 = vmax.f32 %v1509, 0.0
      %v1526 = vmax.f32 %v1510, 0.0
      %v1527 = vmax.f32 %v1511, 0.0
      %v1528 = vmax.f32 %v1512, 0.0
      %v1529 = vmax.f32 %v1513, 0.0
      %v1530 = vmax.f32 %v1514, 0.0
      %v1531 = vmax.f32 %v1515, 0.0
      %v1532 = vmax.f32 %v1516, 0.0
      %v1533 = vmax.f32 %v1517, 0.0
      %v1534 = vmax.f32 %v1518, 0.0
      %v1535 = vmax.f32 %v1519, 0.0
      %v1536 = vmax.f32 %v1520, 0.0
      %v1537 = vmax.f32 %v1521, 0.0
      %v1538 = vmax.f32 %v1522, 0.0
      %v1571 = vrot.slane %v454, 1
      %v1572 = vrot.slane %v458, 1
      %v1573 = vsel %vm642, %v1571, %v1572
      %v1574 = vrot.slane %v464, 1
      %v1575 = vrot.slane %v468, 1
      %v1576 = vsel %vm642, %v1574, %v1575
      %v1577 = vrot.slane %v474, 1
      %v1578 = vrot.slane %v478, 1
      %v1579 = vsel %vm642, %v1577, %v1578
      %v1580 = vrot.slane %v484, 1
      %v1581 = vrot.slane %v488, 1
      %v1582 = vsel %vm642, %v1580, %v1581
      %v1583 = vrot.slane %v494, 1
      %v1584 = vrot.slane %v498, 1
      %v1585 = vsel %vm642, %v1583, %v1584
      %v1586 = vrot.slane %v504, 1
      %v1587 = vrot.slane %v508, 1
      %v1588 = vsel %vm642, %v1586, %v1587
      %v1589 = vrot.slane %v514, 1
      %v1590 = vrot.slane %v518, 1
      %v1591 = vsel %vm642, %v1589, %v1590
      %v1592 = vrot.slane %v524, 1
      %v1593 = vrot.slane %v528, 1
      %v1594 = vsel %vm642, %v1592, %v1593
      %v1595 = vrot.slane %v534, 1
      %v1596 = vrot.slane %v538, 1
      %v1597 = vsel %vm642, %v1595, %v1596
      %v1598 = vrot.slane %v544, 1
      %v1599 = vrot.slane %v548, 1
      %v1600 = vsel %vm642, %v1598, %v1599
      %v1601 = vrot.slane %v554, 1
      %v1602 = vrot.slane %v558, 1
      %v1603 = vsel %vm642, %v1601, %v1602
      %v1604 = vrot.slane %v564, 1
      %v1605 = vrot.slane %v568, 1
      %v1606 = vsel %vm642, %v1604, %v1605
      %v1607 = vrot.slane %v574, 1
      %v1608 = vrot.slane %v578, 1
      %v1609 = vsel %vm642, %v1607, %v1608
      %v1610 = vrot.slane %v584, 1
      %v1611 = vrot.slane %v588, 1
      %v1612 = vsel %vm642, %v1610, %v1611
      %v1613 = vrot.slane %v594, 1
      %v1614 = vrot.slane %v598, 1
      %v1615 = vsel %vm642, %v1613, %v1614
      %v1616 = vrot.slane %v604, 1
      %v1617 = vrot.slane %v608, 1
      %v1618 = vsel %vm642, %v1616, %v1617
      %1619 = vrot.lane.b32.xlu0 %v1573, 112
      %v1620 = vpop.permute.xlu0 %1619
      %1621 = vrot.lane.b32.xlu0 %v1572, 112
      %v1622 = vpop.permute.xlu0 %1621
      %1623 = vrot.lane.b32.xlu0 %v1576, 112
      %v1624 = vpop.permute.xlu0 %1623
      %1625 = vrot.lane.b32.xlu0 %v1575, 112
      %v1626 = vpop.permute.xlu0 %1625
      %1627 = vrot.lane.b32.xlu0 %v1579, 112
      %v1628 = vpop.permute.xlu0 %1627
      %1629 = vrot.lane.b32.xlu0 %v1578, 112
      %v1630 = vpop.permute.xlu0 %1629
      %1631 = vrot.lane.b32.xlu0 %v1582, 112
      %v1632 = vpop.permute.xlu0 %1631
      %1633 = vrot.lane.b32.xlu0 %v1581, 112
      %v1634 = vpop.permute.xlu0 %1633
      %1635 = vrot.lane.b32.xlu0 %v1585, 112
      %v1636 = vpop.permute.xlu0 %1635
      %1637 = vrot.lane.b32.xlu0 %v1584, 112
      %v1638 = vpop.permute.xlu0 %1637
      %1639 = vrot.lane.b32.xlu0 %v1588, 112
      %v1640 = vpop.permute.xlu0 %1639
      %1641 = vrot.lane.b32.xlu0 %v1587, 112
      %v1642 = vpop.permute.xlu0 %1641
      %1643 = vrot.lane.b32.xlu0 %v1591, 112
      %v1644 = vpop.permute.xlu0 %1643
      %1645 = vrot.lane.b32.xlu0 %v1590, 112
      %v1646 = vpop.permute.xlu0 %1645
      %1647 = vrot.lane.b32.xlu0 %v1594, 112
      %v1648 = vpop.permute.xlu0 %1647
      %1649 = vrot.lane.b32.xlu0 %v1593, 112
      %v1650 = vpop.permute.xlu0 %1649
      %1651 = vrot.lane.b32.xlu0 %v1597, 112
      %v1652 = vpop.permute.xlu0 %1651
      %1653 = vrot.lane.b32.xlu0 %v1596, 112
      %v1654 = vpop.permute.xlu0 %1653
      %1655 = vrot.lane.b32.xlu0 %v1600, 112
      %v1656 = vpop.permute.xlu0 %1655
      %1657 = vrot.lane.b32.xlu0 %v1599, 112
      %v1658 = vpop.permute.xlu0 %1657
      %1659 = vrot.lane.b32.xlu0 %v1603, 112
      %v1660 = vpop.permute.xlu0 %1659
      %1661 = vrot.lane.b32.xlu0 %v1602, 112
      %v1662 = vpop.permute.xlu0 %1661
      %1663 = vrot.lane.b32.xlu0 %v1606, 112
      %v1664 = vpop.permute.xlu0 %1663
      %1665 = vrot.lane.b32.xlu0 %v1605, 112
      %v1666 = vpop.permute.xlu0 %1665
      %1667 = vrot.lane.b32.xlu0 %v1609, 112
      %v1668 = vpop.permute.xlu0 %1667
      %1669 = vrot.lane.b32.xlu0 %v1608, 112
      %v1670 = vpop.permute.xlu0 %1669
      %1671 = vrot.lane.b32.xlu0 %v1612, 112
      %v1672 = vpop.permute.xlu0 %1671
      %1673 = vrot.lane.b32.xlu0 %v1611, 112
      %v1674 = vpop.permute.xlu0 %1673
      %1675 = vrot.lane.b32.xlu0 %v1615, 112
      %v1676 = vpop.permute.xlu0 %1675
      %1677 = vrot.lane.b32.xlu0 %v1614, 112
      %v1678 = vpop.permute.xlu0 %1677
      %1679 = vrot.lane.b32.xlu0 %v1618, 112
      %v1680 = vpop.permute.xlu0 %1679
      %1681 = vrot.lane.b32.xlu0 %v1617, 112
      %v1682 = vpop.permute.xlu0 %1681
      %v1715 = vadd.f32 %v452, %v1620
      %v1716 = vadd.f32 %v456, %v1622
      %v1717 = vadd.f32 %v462, %v1624
      %v1718 = vadd.f32 %v466, %v1626
      %v1719 = vadd.f32 %v472, %v1628
      %v1720 = vadd.f32 %v476, %v1630
      %v1721 = vadd.f32 %v482, %v1632
      %v1722 = vadd.f32 %v486, %v1634
      %v1723 = vadd.f32 %v492, %v1636
      %v1724 = vadd.f32 %v496, %v1638
      %v1725 = vadd.f32 %v502, %v1640
      %v1726 = vadd.f32 %v506, %v1642
      %v1727 = vadd.f32 %v512, %v1644
      %v1728 = vadd.f32 %v516, %v1646
      %v1729 = vadd.f32 %v522, %v1648
      %v1730 = vadd.f32 %v526, %v1650
      %v1731 = vadd.f32 %v532, %v1652
      %v1732 = vadd.f32 %v536, %v1654
      %v1733 = vadd.f32 %v542, %v1656
      %v1734 = vadd.f32 %v546, %v1658
      %v1735 = vadd.f32 %v552, %v1660
      %v1736 = vadd.f32 %v556, %v1662
      %v1737 = vadd.f32 %v562, %v1664
      %v1738 = vadd.f32 %v566, %v1666
      %v1739 = vadd.f32 %v572, %v1668
      %v1740 = vadd.f32 %v576, %v1670
      %v1741 = vadd.f32 %v582, %v1672
      %v1742 = vadd.f32 %v586, %v1674
      %v1743 = vadd.f32 %v592, %v1676
      %v1744 = vadd.f32 %v596, %v1678
      %v1745 = vadd.f32 %v602, %v1680
      %v1746 = vadd.f32 %v606, %v1682
      %v1747 = vrot.slane %v454, 2
      %v1748 = vrot.slane %v458, 2
      %v1749 = vsel %vm819, %v1747, %v1748
      %v1750 = vrot.slane %v464, 2
      %v1751 = vrot.slane %v468, 2
      %v1752 = vsel %vm819, %v1750, %v1751
      %v1753 = vrot.slane %v474, 2
      %v1754 = vrot.slane %v478, 2
      %v1755 = vsel %vm819, %v1753, %v1754
      %v1756 = vrot.slane %v484, 2
      %v1757 = vrot.slane %v488, 2
      %v1758 = vsel %vm819, %v1756, %v1757
      %v1759 = vrot.slane %v494, 2
      %v1760 = vrot.slane %v498, 2
      %v1761 = vsel %vm819, %v1759, %v1760
      %v1762 = vrot.slane %v504, 2
      %v1763 = vrot.slane %v508, 2
      %v1764 = vsel %vm819, %v1762, %v1763
      %v1765 = vrot.slane %v514, 2
      %v1766 = vrot.slane %v518, 2
      %v1767 = vsel %vm819, %v1765, %v1766
      %v1768 = vrot.slane %v524, 2
      %v1769 = vrot.slane %v528, 2
      %v1770 = vsel %vm819, %v1768, %v1769
      %v1771 = vrot.slane %v534, 2
      %v1772 = vrot.slane %v538, 2
      %v1773 = vsel %vm819, %v1771, %v1772
      %v1774 = vrot.slane %v544, 2
      %v1775 = vrot.slane %v548, 2
      %v1776 = vsel %vm819, %v1774, %v1775
      %v1777 = vrot.slane %v554, 2
      %v1778 = vrot.slane %v558, 2
      %v1779 = vsel %vm819, %v1777, %v1778
      %v1780 = vrot.slane %v564, 2
      %v1781 = vrot.slane %v568, 2
      %v1782 = vsel %vm819, %v1780, %v1781
      %v1783 = vrot.slane %v574, 2
      %v1784 = vrot.slane %v578, 2
      %v1785 = vsel %vm819, %v1783, %v1784
      %v1786 = vrot.slane %v584, 2
      %v1787 = vrot.slane %v588, 2
      %v1788 = vsel %vm819, %v1786, %v1787
      %v1789 = vrot.slane %v594, 2
      %v1790 = vrot.slane %v598, 2
      %v1791 = vsel %vm819, %v1789, %v1790
      %v1792 = vrot.slane %v604, 2
      %v1793 = vrot.slane %v608, 2
      %v1794 = vsel %vm819, %v1792, %v1793
      %1795 = vrot.lane.b32.xlu0 %v1749, 96
      %v1796 = vpop.permute.xlu0 %1795
      %1797 = vrot.lane.b32.xlu0 %v1748, 96
      %v1798 = vpop.permute.xlu0 %1797
      %1799 = vrot.lane.b32.xlu0 %v1752, 96
      %v1800 = vpop.permute.xlu0 %1799
      %1801 = vrot.lane.b32.xlu0 %v1751, 96
      %v1802 = vpop.permute.xlu0 %1801
      %1803 = vrot.lane.b32.xlu0 %v1755, 96
      %v1804 = vpop.permute.xlu0 %1803
      %1805 = vrot.lane.b32.xlu0 %v1754, 96
      %v1806 = vpop.permute.xlu0 %1805
      %1807 = vrot.lane.b32.xlu0 %v1758, 96
      %v1808 = vpop.permute.xlu0 %1807
      %1809 = vrot.lane.b32.xlu0 %v1757, 96
      %v1810 = vpop.permute.xlu0 %1809
      %1811 = vrot.lane.b32.xlu0 %v1761, 96
      %v1812 = vpop.permute.xlu0 %1811
      %1813 = vrot.lane.b32.xlu0 %v1760, 96
      %v1814 = vpop.permute.xlu0 %1813
      %1815 = vrot.lane.b32.xlu0 %v1764, 96
      %v1816 = vpop.permute.xlu0 %1815
      %1817 = vrot.lane.b32.xlu0 %v1763, 96
      %v1818 = vpop.permute.xlu0 %1817
      %1819 = vrot.lane.b32.xlu0 %v1767, 96
      %v1820 = vpop.permute.xlu0 %1819
      %1821 = vrot.lane.b32.xlu0 %v1766, 96
      %v1822 = vpop.permute.xlu0 %1821
      %1823 = vrot.lane.b32.xlu0 %v1770, 96
      %v1824 = vpop.permute.xlu0 %1823
      %1825 = vrot.lane.b32.xlu0 %v1769, 96
      %v1826 = vpop.permute.xlu0 %1825
      %1827 = vrot.lane.b32.xlu0 %v1773, 96
      %v1828 = vpop.permute.xlu0 %1827
      %1829 = vrot.lane.b32.xlu0 %v1772, 96
      %v1830 = vpop.permute.xlu0 %1829
      %1831 = vrot.lane.b32.xlu0 %v1776, 96
      %v1832 = vpop.permute.xlu0 %1831
      %1833 = vrot.lane.b32.xlu0 %v1775, 96
      %v1834 = vpop.permute.xlu0 %1833
      %1835 = vrot.lane.b32.xlu0 %v1779, 96
      %v1836 = vpop.permute.xlu0 %1835
      %1837 = vrot.lane.b32.xlu0 %v1778, 96
      %v1838 = vpop.permute.xlu0 %1837
      %1839 = vrot.lane.b32.xlu0 %v1782, 96
      %v1840 = vpop.permute.xlu0 %1839
      %1841 = vrot.lane.b32.xlu0 %v1781, 96
      %v1842 = vpop.permute.xlu0 %1841
      %1843 = vrot.lane.b32.xlu0 %v1785, 96
      %v1844 = vpop.permute.xlu0 %1843
      %1845 = vrot.lane.b32.xlu0 %v1784, 96
      %v1846 = vpop.permute.xlu0 %1845
      %1847 = vrot.lane.b32.xlu0 %v1788, 96
      %v1848 = vpop.permute.xlu0 %1847
      %1849 = vrot.lane.b32.xlu0 %v1787, 96
      %v1850 = vpop.permute.xlu0 %1849
      %1851 = vrot.lane.b32.xlu0 %v1791, 96
      %v1852 = vpop.permute.xlu0 %1851
      %1853 = vrot.lane.b32.xlu0 %v1790, 96
      %v1854 = vpop.permute.xlu0 %1853
      %1855 = vrot.lane.b32.xlu0 %v1794, 96
      %v1856 = vpop.permute.xlu0 %1855
      %1857 = vrot.lane.b32.xlu0 %v1793, 96
      %v1858 = vpop.permute.xlu0 %1857
      %v1891 = vadd.f32 %v1715, %v1796
      %v1892 = vadd.f32 %v1716, %v1798
      %v1893 = vadd.f32 %v1717, %v1800
      %v1894 = vadd.f32 %v1718, %v1802
      %v1895 = vadd.f32 %v1719, %v1804
      %v1896 = vadd.f32 %v1720, %v1806
      %v1897 = vadd.f32 %v1721, %v1808
      %v1898 = vadd.f32 %v1722, %v1810
      %v1899 = vadd.f32 %v1723, %v1812
      %v1900 = vadd.f32 %v1724, %v1814
      %v1901 = vadd.f32 %v1725, %v1816
      %v1902 = vadd.f32 %v1726, %v1818
      %v1903 = vadd.f32 %v1727, %v1820
      %v1904 = vadd.f32 %v1728, %v1822
      %v1905 = vadd.f32 %v1729, %v1824
      %v1906 = vadd.f32 %v1730, %v1826
      %v1907 = vadd.f32 %v1731, %v1828
      %v1908 = vadd.f32 %v1732, %v1830
      %v1909 = vadd.f32 %v1733, %v1832
      %v1910 = vadd.f32 %v1734, %v1834
      %v1911 = vadd.f32 %v1735, %v1836
      %v1912 = vadd.f32 %v1736, %v1838
      %v1913 = vadd.f32 %v1737, %v1840
      %v1914 = vadd.f32 %v1738, %v1842
      %v1915 = vadd.f32 %v1739, %v1844
      %v1916 = vadd.f32 %v1740, %v1846
      %v1917 = vadd.f32 %v1741, %v1848
      %v1918 = vadd.f32 %v1742, %v1850
      %v1919 = vadd.f32 %v1743, %v1852
      %v1920 = vadd.f32 %v1744, %v1854
      %v1921 = vadd.f32 %v1745, %v1856
      %v1922 = vadd.f32 %v1746, %v1858
      %v1923 = vrot.slane %v454, 3
      %v1924 = vrot.slane %v458, 3
      %v1925 = vsel %vm1181, %v1923, %v1924
      %v1926 = vrot.slane %v464, 3
      %v1927 = vrot.slane %v468, 3
      %v1928 = vsel %vm1181, %v1926, %v1927
      %v1929 = vrot.slane %v474, 3
      %v1930 = vrot.slane %v478, 3
      %v1931 = vsel %vm1181, %v1929, %v1930
      %v1932 = vrot.slane %v484, 3
      %v1933 = vrot.slane %v488, 3
      %v1934 = vsel %vm1181, %v1932, %v1933
      %v1935 = vrot.slane %v494, 3
      %v1936 = vrot.slane %v498, 3
      %v1937 = vsel %vm1181, %v1935, %v1936
      %v1938 = vrot.slane %v504, 3
      %v1939 = vrot.slane %v508, 3
      %v1940 = vsel %vm1181, %v1938, %v1939
      %v1941 = vrot.slane %v514, 3
      %v1942 = vrot.slane %v518, 3
      %v1943 = vsel %vm1181, %v1941, %v1942
      %v1944 = vrot.slane %v524, 3
      %v1945 = vrot.slane %v528, 3
      %v1946 = vsel %vm1181, %v1944, %v1945
      %v1947 = vrot.slane %v534, 3
      %v1948 = vrot.slane %v538, 3
      %v1949 = vsel %vm1181, %v1947, %v1948
      %v1950 = vrot.slane %v544, 3
      %v1951 = vrot.slane %v548, 3
      %v1952 = vsel %vm1181, %v1950, %v1951
      %v1953 = vrot.slane %v554, 3
      %v1954 = vrot.slane %v558, 3
      %v1955 = vsel %vm1181, %v1953, %v1954
      %v1956 = vrot.slane %v564, 3
      %v1957 = vrot.slane %v568, 3
      %v1958 = vsel %vm1181, %v1956, %v1957
      %v1959 = vrot.slane %v574, 3
      %v1960 = vrot.slane %v578, 3
      %v1961 = vsel %vm1181, %v1959, %v1960
      %v1962 = vrot.slane %v584, 3
      %v1963 = vrot.slane %v588, 3
      %v1964 = vsel %vm1181, %v1962, %v1963
      %v1965 = vrot.slane %v594, 3
      %v1966 = vrot.slane %v598, 3
      %v1967 = vsel %vm1181, %v1965, %v1966
      %v1968 = vrot.slane %v604, 3
      %v1969 = vrot.slane %v608, 3
      %v1970 = vsel %vm1181, %v1968, %v1969
      %1971 = vrot.lane.b32.xlu0 %v1925, 80
      %v1972 = vpop.permute.xlu0 %1971
      %1973 = vrot.lane.b32.xlu0 %v1924, 80
      %v1974 = vpop.permute.xlu0 %1973
      %1975 = vrot.lane.b32.xlu0 %v1928, 80
      %v1976 = vpop.permute.xlu0 %1975
      %1977 = vrot.lane.b32.xlu0 %v1927, 80
      %v1978 = vpop.permute.xlu0 %1977
      %1979 = vrot.lane.b32.xlu0 %v1931, 80
      %v1980 = vpop.permute.xlu0 %1979
      %1981 = vrot.lane.b32.xlu0 %v1930, 80
      %v1982 = vpop.permute.xlu0 %1981
      %1983 = vrot.lane.b32.xlu0 %v1934, 80
      %v1984 = vpop.permute.xlu0 %1983
      %1985 = vrot.lane.b32.xlu0 %v1933, 80
      %v1986 = vpop.permute.xlu0 %1985
      %1987 = vrot.lane.b32.xlu0 %v1937, 80
      %v1988 = vpop.permute.xlu0 %1987
      %1989 = vrot.lane.b32.xlu0 %v1936, 80
      %v1990 = vpop.permute.xlu0 %1989
      %1991 = vrot.lane.b32.xlu0 %v1940, 80
      %v1992 = vpop.permute.xlu0 %1991
      %1993 = vrot.lane.b32.xlu0 %v1939, 80
      %v1994 = vpop.permute.xlu0 %1993
      %1995 = vrot.lane.b32.xlu0 %v1943, 80
      %v1996 = vpop.permute.xlu0 %1995
      %1997 = vrot.lane.b32.xlu0 %v1942, 80
      %v1998 = vpop.permute.xlu0 %1997
      %1999 = vrot.lane.b32.xlu0 %v1946, 80
      %v2000 = vpop.permute.xlu0 %1999
      %2001 = vrot.lane.b32.xlu0 %v1945, 80
      %v2002 = vpop.permute.xlu0 %2001
      %2003 = vrot.lane.b32.xlu0 %v1949, 80
      %v2004 = vpop.permute.xlu0 %2003
      %2005 = vrot.lane.b32.xlu0 %v1948, 80
      %v2006 = vpop.permute.xlu0 %2005
      %2007 = vrot.lane.b32.xlu0 %v1952, 80
      %v2008 = vpop.permute.xlu0 %2007
      %2009 = vrot.lane.b32.xlu0 %v1951, 80
      %v2010 = vpop.permute.xlu0 %2009
      %2011 = vrot.lane.b32.xlu0 %v1955, 80
      %v2012 = vpop.permute.xlu0 %2011
      %2013 = vrot.lane.b32.xlu0 %v1954, 80
      %v2014 = vpop.permute.xlu0 %2013
      %2015 = vrot.lane.b32.xlu0 %v1958, 80
      %v2016 = vpop.permute.xlu0 %2015
      %2017 = vrot.lane.b32.xlu0 %v1957, 80
      %v2018 = vpop.permute.xlu0 %2017
      %2019 = vrot.lane.b32.xlu0 %v1961, 80
      %v2020 = vpop.permute.xlu0 %2019
      %2021 = vrot.lane.b32.xlu0 %v1960, 80
      %v2022 = vpop.permute.xlu0 %2021
      %2023 = vrot.lane.b32.xlu0 %v1964, 80
      %v2024 = vpop.permute.xlu0 %2023
      %2025 = vrot.lane.b32.xlu0 %v1963, 80
      %v2026 = vpop.permute.xlu0 %2025
      %2027 = vrot.lane.b32.xlu0 %v1967, 80
      %v2028 = vpop.permute.xlu0 %2027
      %2029 = vrot.lane.b32.xlu0 %v1966, 80
      %v2030 = vpop.permute.xlu0 %2029
      %2031 = vrot.lane.b32.xlu0 %v1970, 80
      %v2032 = vpop.permute.xlu0 %2031
      %2033 = vrot.lane.b32.xlu0 %v1969, 80
      %v2034 = vpop.permute.xlu0 %2033
      %v2067 = vadd.f32 %v1891, %v1972
      %v2068 = vadd.f32 %v1892, %v1974
      %v2069 = vadd.f32 %v1893, %v1976
      %v2070 = vadd.f32 %v1894, %v1978
      %v2071 = vadd.f32 %v1895, %v1980
      %v2072 = vadd.f32 %v1896, %v1982
      %v2073 = vadd.f32 %v1897, %v1984
      %v2074 = vadd.f32 %v1898, %v1986
      %v2075 = vadd.f32 %v1899, %v1988
      %v2076 = vadd.f32 %v1900, %v1990
      %v2077 = vadd.f32 %v1901, %v1992
      %v2078 = vadd.f32 %v1902, %v1994
      %v2079 = vadd.f32 %v1903, %v1996
      %v2080 = vadd.f32 %v1904, %v1998
      %v2081 = vadd.f32 %v1905, %v2000
      %v2082 = vadd.f32 %v1906, %v2002
      %v2083 = vadd.f32 %v1907, %v2004
      %v2084 = vadd.f32 %v1908, %v2006
      %v2085 = vadd.f32 %v1909, %v2008
      %v2086 = vadd.f32 %v1910, %v2010
      %v2087 = vadd.f32 %v1911, %v2012
      %v2088 = vadd.f32 %v1912, %v2014
      %v2089 = vadd.f32 %v1913, %v2016
      %v2090 = vadd.f32 %v1914, %v2018
      %v2091 = vadd.f32 %v1915, %v2020
      %v2092 = vadd.f32 %v1916, %v2022
      %v2093 = vadd.f32 %v1917, %v2024
      %v2094 = vadd.f32 %v1918, %v2026
      %v2095 = vadd.f32 %v1919, %v2028
      %v2096 = vadd.f32 %v1920, %v2030
      %v2097 = vadd.f32 %v1921, %v2032
      %v2098 = vadd.f32 %v1922, %v2034
      %vm2099 = vcmask 1043456
      %v2100 = vrot.slane %v454, 4
      %v2101 = vrot.slane %v458, 4
      %v2102 = vsel %vm2099, %v2100, %v2101
      %v2103 = vrot.slane %v464, 4
      %v2104 = vrot.slane %v468, 4
      %v2105 = vsel %vm2099, %v2103, %v2104
      %v2106 = vrot.slane %v474, 4
      %v2107 = vrot.slane %v478, 4
      %v2108 = vsel %vm2099, %v2106, %v2107
      %v2109 = vrot.slane %v484, 4
      %v2110 = vrot.slane %v488, 4
      %v2111 = vsel %vm2099, %v2109, %v2110
      %v2112 = vrot.slane %v494, 4
      %v2113 = vrot.slane %v498, 4
      %v2114 = vsel %vm2099, %v2112, %v2113
      %v2115 = vrot.slane %v504, 4
      %v2116 = vrot.slane %v508, 4
      %v2117 = vsel %vm2099, %v2115, %v2116
      %v2118 = vrot.slane %v514, 4
      %v2119 = vrot.slane %v518, 4
      %v2120 = vsel %vm2099, %v2118, %v2119
      %v2121 = vrot.slane %v524, 4
      %v2122 = vrot.slane %v528, 4
      %v2123 = vsel %vm2099, %v2121, %v2122
      %v2124 = vrot.slane %v534, 4
      %v2125 = vrot.slane %v538, 4
      %v2126 = vsel %vm2099, %v2124, %v2125
      %v2127 = vrot.slane %v544, 4
      %v2128 = vrot.slane %v548, 4
      %v2129 = vsel %vm2099, %v2127, %v2128
      %v2130 = vrot.slane %v554, 4
      %v2131 = vrot.slane %v558, 4
      %v2132 = vsel %vm2099, %v2130, %v2131
      %v2133 = vrot.slane %v564, 4
      %v2134 = vrot.slane %v568, 4
      %v2135 = vsel %vm2099, %v2133, %v2134
      %v2136 = vrot.slane %v574, 4
      %v2137 = vrot.slane %v578, 4
      %v2138 = vsel %vm2099, %v2136, %v2137
      %v2139 = vrot.slane %v584, 4
      %v2140 = vrot.slane %v588, 4
      %v2141 = vsel %vm2099, %v2139, %v2140
      %v2142 = vrot.slane %v594, 4
      %v2143 = vrot.slane %v598, 4
      %v2144 = vsel %vm2099, %v2142, %v2143
      %v2145 = vrot.slane %v604, 4
      %v2146 = vrot.slane %v608, 4
      %v2147 = vsel %vm2099, %v2145, %v2146
      %2148 = vrot.lane.b32.xlu0 %v2102, 64
      %v2149 = vpop.permute.xlu0 %2148
      %2150 = vrot.lane.b32.xlu0 %v2101, 64
      %v2151 = vpop.permute.xlu0 %2150
      %2152 = vrot.lane.b32.xlu0 %v2105, 64
      %v2153 = vpop.permute.xlu0 %2152
      %2154 = vrot.lane.b32.xlu0 %v2104, 64
      %v2155 = vpop.permute.xlu0 %2154
      %2156 = vrot.lane.b32.xlu0 %v2108, 64
      %v2157 = vpop.permute.xlu0 %2156
      %2158 = vrot.lane.b32.xlu0 %v2107, 64
      %v2159 = vpop.permute.xlu0 %2158
      %2160 = vrot.lane.b32.xlu0 %v2111, 64
      %v2161 = vpop.permute.xlu0 %2160
      %2162 = vrot.lane.b32.xlu0 %v2110, 64
      %v2163 = vpop.permute.xlu0 %2162
      %2164 = vrot.lane.b32.xlu0 %v2114, 64
      %v2165 = vpop.permute.xlu0 %2164
      %2166 = vrot.lane.b32.xlu0 %v2113, 64
      %v2167 = vpop.permute.xlu0 %2166
      %2168 = vrot.lane.b32.xlu0 %v2117, 64
      %v2169 = vpop.permute.xlu0 %2168
      %2170 = vrot.lane.b32.xlu0 %v2116, 64
      %v2171 = vpop.permute.xlu0 %2170
      %2172 = vrot.lane.b32.xlu0 %v2120, 64
      %v2173 = vpop.permute.xlu0 %2172
      %2174 = vrot.lane.b32.xlu0 %v2119, 64
      %v2175 = vpop.permute.xlu0 %2174
      %2176 = vrot.lane.b32.xlu0 %v2123, 64
      %v2177 = vpop.permute.xlu0 %2176
      %2178 = vrot.lane.b32.xlu0 %v2122, 64
      %v2179 = vpop.permute.xlu0 %2178
      %2180 = vrot.lane.b32.xlu0 %v2126, 64
      %v2181 = vpop.permute.xlu0 %2180
      %2182 = vrot.lane.b32.xlu0 %v2125, 64
      %v2183 = vpop.permute.xlu0 %2182
      %2184 = vrot.lane.b32.xlu0 %v2129, 64
      %v2185 = vpop.permute.xlu0 %2184
      %2186 = vrot.lane.b32.xlu0 %v2128, 64
      %v2187 = vpop.permute.xlu0 %2186
      %2188 = vrot.lane.b32.xlu0 %v2132, 64
      %v2189 = vpop.permute.xlu0 %2188
      %2190 = vrot.lane.b32.xlu0 %v2131, 64
      %v2191 = vpop.permute.xlu0 %2190
      %2192 = vrot.lane.b32.xlu0 %v2135, 64
      %v2193 = vpop.permute.xlu0 %2192
      %2194 = vrot.lane.b32.xlu0 %v2134, 64
      %v2195 = vpop.permute.xlu0 %2194
      %2196 = vrot.lane.b32.xlu0 %v2138, 64
      %v2197 = vpop.permute.xlu0 %2196
      %2198 = vrot.lane.b32.xlu0 %v2137, 64
      %v2199 = vpop.permute.xlu0 %2198
      %2200 = vrot.lane.b32.xlu0 %v2141, 64
      %v2201 = vpop.permute.xlu0 %2200
      %2202 = vrot.lane.b32.xlu0 %v2140, 64
      %v2203 = vpop.permute.xlu0 %2202
      %2204 = vrot.lane.b32.xlu0 %v2144, 64
      %v2205 = vpop.permute.xlu0 %2204
      %2206 = vrot.lane.b32.xlu0 %v2143, 64
      %v2207 = vpop.permute.xlu0 %2206
      %2208 = vrot.lane.b32.xlu0 %v2147, 64
      %v2209 = vpop.permute.xlu0 %2208
      %2210 = vrot.lane.b32.xlu0 %v2146, 64
      %v2211 = vpop.permute.xlu0 %2210
      %v2244 = vadd.f32 %v2067, %v2149
      %v2245 = vadd.f32 %v2068, %v2151
      %v2246 = vadd.f32 %v2069, %v2153
      %v2247 = vadd.f32 %v2070, %v2155
      %v2248 = vadd.f32 %v2071, %v2157
      %v2249 = vadd.f32 %v2072, %v2159
      %v2250 = vadd.f32 %v2073, %v2161
      %v2251 = vadd.f32 %v2074, %v2163
      %v2252 = vadd.f32 %v2075, %v2165
      %v2253 = vadd.f32 %v2076, %v2167
      %v2254 = vadd.f32 %v2077, %v2169
      %v2255 = vadd.f32 %v2078, %v2171
      %v2256 = vadd.f32 %v2079, %v2173
      %v2257 = vadd.f32 %v2080, %v2175
      %v2258 = vadd.f32 %v2081, %v2177
      %v2259 = vadd.f32 %v2082, %v2179
      %v2260 = vadd.f32 %v2083, %v2181
      %v2261 = vadd.f32 %v2084, %v2183
      %v2262 = vadd.f32 %v2085, %v2185
      %v2263 = vadd.f32 %v2086, %v2187
      %v2264 = vadd.f32 %v2087, %v2189
      %v2265 = vadd.f32 %v2088, %v2191
      %v2266 = vadd.f32 %v2089, %v2193
      %v2267 = vadd.f32 %v2090, %v2195
      %v2268 = vadd.f32 %v2091, %v2197
      %v2269 = vadd.f32 %v2092, %v2199
      %v2270 = vadd.f32 %v2093, %v2201
      %v2271 = vadd.f32 %v2094, %v2203
      %v2272 = vadd.f32 %v2095, %v2205
      %v2273 = vadd.f32 %v2096, %v2207
      %v2274 = vadd.f32 %v2097, %v2209
      %v2275 = vadd.f32 %v2098, %v2211
      %vm2276 = vcmask 1048448
      %v2277 = vsel %vm2276, %v2244, -inf
      %vm2278 = vcmask 1044352
      %v2279 = vsel %vm2278, %v2245, -inf
      %v2280 = vmax.f32 %v2277, %v2279
      %v2281 = vrot.slane %v2280, 4
      %v2282 = vmax.f32 %v2280, %v2281
      %v2283 = vrot.slane %v2282, 2
      %v2284 = vmax.f32 %v2282, %v2283
      %v2285 = vrot.slane %v2284, 1
      %v2286 = vmax.f32 %v2284, %v2285
      %v2287 = vsel %vm2276, %v2246, -inf
      %v2288 = vsel %vm2278, %v2247, -inf
      %v2289 = vmax.f32 %v2287, %v2288
      %v2290 = vrot.slane %v2289, 4
      %v2291 = vmax.f32 %v2289, %v2290
      %v2292 = vrot.slane %v2291, 2
      %v2293 = vmax.f32 %v2291, %v2292
      %v2294 = vrot.slane %v2293, 1
      %v2295 = vmax.f32 %v2293, %v2294
      %v2296 = vsel %vm2276, %v2248, -inf
      %v2297 = vsel %vm2278, %v2249, -inf
      %v2298 = vmax.f32 %v2296, %v2297
      %v2299 = vrot.slane %v2298, 4
      %v2300 = vmax.f32 %v2298, %v2299
      %v2301 = vrot.slane %v2300, 2
      %v2302 = vmax.f32 %v2300, %v2301
      %v2303 = vrot.slane %v2302, 1
      %v2304 = vmax.f32 %v2302, %v2303
      %v2305 = vsel %vm2276, %v2250, -inf
      %v2306 = vsel %vm2278, %v2251, -inf
      %v2307 = vmax.f32 %v2305, %v2306
      %v2308 = vrot.slane %v2307, 4
      %v2309 = vmax.f32 %v2307, %v2308
      %v2310 = vrot.slane %v2309, 2
      %v2311 = vmax.f32 %v2309, %v2310
      %v2312 = vrot.slane %v2311, 1
      %v2313 = vmax.f32 %v2311, %v2312
      %v2314 = vsel %vm2276, %v2252, -inf
      %v2315 = vsel %vm2278, %v2253, -inf
      %v2316 = vmax.f32 %v2314, %v2315
      %v2317 = vrot.slane %v2316, 4
      %v2318 = vmax.f32 %v2316, %v2317
      %v2319 = vrot.slane %v2318, 2
      %v2320 = vmax.f32 %v2318, %v2319
      %v2321 = vrot.slane %v2320, 1
      %v2322 = vmax.f32 %v2320, %v2321
      %v2323 = vsel %vm2276, %v2254, -inf
      %v2324 = vsel %vm2278, %v2255, -inf
      %v2325 = vmax.f32 %v2323, %v2324
      %v2326 = vrot.slane %v2325, 4
      %v2327 = vmax.f32 %v2325, %v2326
      %v2328 = vrot.slane %v2327, 2
      %v2329 = vmax.f32 %v2327, %v2328
      %v2330 = vrot.slane %v2329, 1
      %v2331 = vmax.f32 %v2329, %v2330
      %v2332 = vsel %vm2276, %v2256, -inf
      %v2333 = vsel %vm2278, %v2257, -inf
      %v2334 = vmax.f32 %v2332, %v2333
      %v2335 = vrot.slane %v2334, 4
      %v2336 = vmax.f32 %v2334, %v2335
      %v2337 = vrot.slane %v2336, 2
      %v2338 = vmax.f32 %v2336, %v2337
      %v2339 = vrot.slane %v2338, 1
      %v2340 = vmax.f32 %v2338, %v2339
      %v2341 = vsel %vm2276, %v2258, -inf
      %v2342 = vsel %vm2278, %v2259, -inf
      %v2343 = vmax.f32 %v2341, %v2342
      %v2344 = vrot.slane %v2343, 4
      %v2345 = vmax.f32 %v2343, %v2344
      %v2346 = vrot.slane %v2345, 2
      %v2347 = vmax.f32 %v2345, %v2346
      %v2348 = vrot.slane %v2347, 1
      %v2349 = vmax.f32 %v2347, %v2348
      %v2350 = vsel %vm2276, %v2260, -inf
      %v2351 = vsel %vm2278, %v2261, -inf
      %v2352 = vmax.f32 %v2350, %v2351
      %v2353 = vrot.slane %v2352, 4
      %v2354 = vmax.f32 %v2352, %v2353
      %v2355 = vrot.slane %v2354, 2
      %v2356 = vmax.f32 %v2354, %v2355
      %v2357 = vrot.slane %v2356, 1
      %v2358 = vmax.f32 %v2356, %v2357
      %v2359 = vsel %vm2276, %v2262, -inf
      %v2360 = vsel %vm2278, %v2263, -inf
      %v2361 = vmax.f32 %v2359, %v2360
      %v2362 = vrot.slane %v2361, 4
      %v2363 = vmax.f32 %v2361, %v2362
      %v2364 = vrot.slane %v2363, 2
      %v2365 = vmax.f32 %v2363, %v2364
      %v2366 = vrot.slane %v2365, 1
      %v2367 = vmax.f32 %v2365, %v2366
      %v2368 = vsel %vm2276, %v2264, -inf
      %v2369 = vsel %vm2278, %v2265, -inf
      %v2370 = vmax.f32 %v2368, %v2369
      %v2371 = vrot.slane %v2370, 4
      %v2372 = vmax.f32 %v2370, %v2371
      %v2373 = vrot.slane %v2372, 2
      %v2374 = vmax.f32 %v2372, %v2373
      %v2375 = vrot.slane %v2374, 1
      %v2376 = vmax.f32 %v2374, %v2375
      %v2377 = vsel %vm2276, %v2266, -inf
      %v2378 = vsel %vm2278, %v2267, -inf
      %v2379 = vmax.f32 %v2377, %v2378
      %v2380 = vrot.slane %v2379, 4
      %v2381 = vmax.f32 %v2379, %v2380
      %v2382 = vrot.slane %v2381, 2
      %v2383 = vmax.f32 %v2381, %v2382
      %v2384 = vrot.slane %v2383, 1
      %v2385 = vmax.f32 %v2383, %v2384
      %v2386 = vsel %vm2276, %v2268, -inf
      %v2387 = vsel %vm2278, %v2269, -inf
      %v2388 = vmax.f32 %v2386, %v2387
      %v2389 = vrot.slane %v2388, 4
      %v2390 = vmax.f32 %v2388, %v2389
      %v2391 = vrot.slane %v2390, 2
      %v2392 = vmax.f32 %v2390, %v2391
      %v2393 = vrot.slane %v2392, 1
      %v2394 = vmax.f32 %v2392, %v2393
      %v2395 = vsel %vm2276, %v2270, -inf
      %v2396 = vsel %vm2278, %v2271, -inf
      %v2397 = vmax.f32 %v2395, %v2396
      %v2398 = vrot.slane %v2397, 4
      %v2399 = vmax.f32 %v2397, %v2398
      %v2400 = vrot.slane %v2399, 2
      %v2401 = vmax.f32 %v2399, %v2400
      %v2402 = vrot.slane %v2401, 1
      %v2403 = vmax.f32 %v2401, %v2402
      %v2404 = vsel %vm2276, %v2272, -inf
      %v2405 = vsel %vm2278, %v2273, -inf
      %v2406 = vmax.f32 %v2404, %v2405
      %v2407 = vrot.slane %v2406, 4
      %v2408 = vmax.f32 %v2406, %v2407
      %v2409 = vrot.slane %v2408, 2
      %v2410 = vmax.f32 %v2408, %v2409
      %v2411 = vrot.slane %v2410, 1
      %v2412 = vmax.f32 %v2410, %v2411
      %v2413 = vsel %vm2276, %v2274, -inf
      %v2414 = vsel %vm2278, %v2275, -inf
      %v2415 = vmax.f32 %v2413, %v2414
      %v2416 = vrot.slane %v2415, 4
      %v2417 = vmax.f32 %v2415, %v2416
      %v2418 = vrot.slane %v2417, 2
      %v2419 = vmax.f32 %v2417, %v2418
      %v2420 = vrot.slane %v2419, 1
      %v2421 = vmax.f32 %v2419, %v2420
      %2422 = vrot.lane.b32.xlu0 %v1147, 80
      %v2423 = vpop.permute.xlu0 %2422
      %v2425 = vadd.f32 %v2286, %v2423
      %v2426 = vadd.f32 %v2295, %v2423
      %v2427 = vadd.f32 %v2304, %v2423
      %v2428 = vadd.f32 %v2313, %v2423
      %v2429 = vadd.f32 %v2322, %v2423
      %v2430 = vadd.f32 %v2331, %v2423
      %v2431 = vadd.f32 %v2340, %v2423
      %v2432 = vadd.f32 %v2349, %v2423
      %v2433 = vadd.f32 %v2358, %v2423
      %v2434 = vadd.f32 %v2367, %v2423
      %v2435 = vadd.f32 %v2376, %v2423
      %v2436 = vadd.f32 %v2385, %v2423
      %v2437 = vadd.f32 %v2394, %v2423
      %v2438 = vadd.f32 %v2403, %v2423
      %v2439 = vadd.f32 %v2412, %v2423
      %v2440 = vadd.f32 %v2421, %v2423
      %v2441 = vmax.f32 %v2425, 0.0
      %v2442 = vmax.f32 %v2426, 0.0
      %v2443 = vmax.f32 %v2427, 0.0
      %v2444 = vmax.f32 %v2428, 0.0
      %v2445 = vmax.f32 %v2429, 0.0
      %v2446 = vmax.f32 %v2430, 0.0
      %v2447 = vmax.f32 %v2431, 0.0
      %v2448 = vmax.f32 %v2432, 0.0
      %v2449 = vmax.f32 %v2433, 0.0
      %v2450 = vmax.f32 %v2434, 0.0
      %v2451 = vmax.f32 %v2435, 0.0
      %v2452 = vmax.f32 %v2436, 0.0
      %v2453 = vmax.f32 %v2437, 0.0
      %v2454 = vmax.f32 %v2438, 0.0
      %v2455 = vmax.f32 %v2439, 0.0
      %v2456 = vmax.f32 %v2440, 0.0
      %v2473 = vrot.slane %v1166, 7
      %vm2474 = vcmask 1041409
      %v2475 = vsel %vm2474, %v2473, %v1165
      %v2476 = vrot.slane %v1167, 6
      %vm2477 = vcmask 1042434
      %v2478 = vsel %vm2477, %v2476, %v2475
      %v2479 = vrot.slane %v1168, 5
      %vm2480 = vcmask 1043459
      %v2481 = vsel %vm2480, %v2479, %v2478
      %v2482 = vrot.slane %v1169, 4
      %vm2483 = vcmask 1044484
      %v2484 = vsel %vm2483, %v2482, %v2481
      %v2485 = vrot.slane %v1170, 3
      %vm2486 = vcmask 1045509
      %v2487 = vsel %vm2486, %v2485, %v2484
      %v2488 = vrot.slane %v1171, 2
      %vm2489 = vcmask 1046534
      %v2490 = vsel %vm2489, %v2488, %v2487
      %v2491 = vrot.slane %v1172, 1
      %vm2492 = vcmask 1047559
      %v2493 = vsel %vm2492, %v2491, %v2490
      %v2494 = vrot.slane %v1174, 7
      %v2495 = vsel %vm2474, %v2494, %v1173
      %v2496 = vrot.slane %v1175, 6
      %v2497 = vsel %vm2477, %v2496, %v2495
      %v2498 = vrot.slane %v1176, 5
      %v2499 = vsel %vm2480, %v2498, %v2497
      %v2500 = vrot.slane %v1177, 4
      %v2501 = vsel %vm2483, %v2500, %v2499
      %v2502 = vrot.slane %v1178, 3
      %v2503 = vsel %vm2486, %v2502, %v2501
      %v2504 = vrot.slane %v1179, 2
      %v2505 = vsel %vm2489, %v2504, %v2503
      %v2506 = vrot.slane %v1180, 1
      %v2507 = vsel %vm2492, %v2506, %v2505
      %v2526 = vrot.slane %v1524, 7
      %v2527 = vsel %vm2474, %v2526, %v1523
      %v2528 = vrot.slane %v1525, 6
      %v2529 = vsel %vm2477, %v2528, %v2527
      %v2530 = vrot.slane %v1526, 5
      %v2531 = vsel %vm2480, %v2530, %v2529
      %v2532 = vrot.slane %v1527, 4
      %v2533 = vsel %vm2483, %v2532, %v2531
      %v2534 = vrot.slane %v1528, 3
      %v2535 = vsel %vm2486, %v2534, %v2533
      %v2536 = vrot.slane %v1529, 2
      %v2537 = vsel %vm2489, %v2536, %v2535
      %v2538 = vrot.slane %v1530, 1
      %v2539 = vsel %vm2492, %v2538, %v2537
      %v2540 = vrot.slane %v1532, 7
      %v2541 = vsel %vm2474, %v2540, %v1531
      %v2542 = vrot.slane %v1533, 6
      %v2543 = vsel %vm2477, %v2542, %v2541
      %v2544 = vrot.slane %v1534, 5
      %v2545 = vsel %vm2480, %v2544, %v2543
      %v2546 = vrot.slane %v1535, 4
      %v2547 = vsel %vm2483, %v2546, %v2545
      %v2548 = vrot.slane %v1536, 3
      %v2549 = vsel %vm2486, %v2548, %v2547
      %v2550 = vrot.slane %v1537, 2
      %v2551 = vsel %vm2489, %v2550, %v2549
      %v2552 = vrot.slane %v1538, 1
      %v2553 = vsel %vm2492, %v2552, %v2551
      %2554 = vrot.lane.b32.xlu0 %v2539, 96
      %v2555 = vpop.permute.xlu0 %2554
      %2556 = vrot.lane.b32.xlu0 %v2553, 96
      %v2557 = vpop.permute.xlu0 %2556
      %v2576 = vrot.slane %v2442, 7
      %v2577 = vsel %vm2474, %v2576, %v2441
      %v2578 = vrot.slane %v2443, 6
      %v2579 = vsel %vm2477, %v2578, %v2577
      %v2580 = vrot.slane %v2444, 5
      %v2581 = vsel %vm2480, %v2580, %v2579
      %v2582 = vrot.slane %v2445, 4
      %v2583 = vsel %vm2483, %v2582, %v2581
      %v2584 = vrot.slane %v2446, 3
      %v2585 = vsel %vm2486, %v2584, %v2583
      %v2586 = vrot.slane %v2447, 2
      %v2587 = vsel %vm2489, %v2586, %v2585
      %v2588 = vrot.slane %v2448, 1
      %v2589 = vsel %vm2492, %v2588, %v2587
      %v2590 = vrot.slane %v2450, 7
      %v2591 = vsel %vm2474, %v2590, %v2449
      %v2592 = vrot.slane %v2451, 6
      %v2593 = vsel %vm2477, %v2592, %v2591
      %v2594 = vrot.slane %v2452, 5
      %v2595 = vsel %vm2480, %v2594, %v2593
      %v2596 = vrot.slane %v2453, 4
      %v2597 = vsel %vm2483, %v2596, %v2595
      %v2598 = vrot.slane %v2454, 3
      %v2599 = vsel %vm2486, %v2598, %v2597
      %v2600 = vrot.slane %v2455, 2
      %v2601 = vsel %vm2489, %v2600, %v2599
      %v2602 = vrot.slane %v2456, 1
      %v2603 = vsel %vm2492, %v2602, %v2601
      %2604 = vrot.lane.b32.xlu0 %v2589, 48
      %v2605 = vpop.permute.xlu0 %2604
      %2606 = vrot.lane.b32.xlu0 %v2603, 48
      %v2607 = vpop.permute.xlu0 %2606
      %v2610 = vsel %vm996, %v2493, %v2555
      %v2611 = vsel %vm996, %v2507, %v2557
      %v2612 = vsel %vm368, %v2610, %v2605
      %v2613 = vsel %vm368, %v2611, %v2607
      %v2614 = vpack.c.bf16 %v2613, %v2612
      %v2615 = vld [vmem:[%s3] sm:$0xf]
      %v2616 = vld [vmem:[%s3 + $0x4] sm:$0xf]
      %v2617 = vld [vmem:[%s3 + $0x8] sm:$0xf]
      %v2618 = vld [vmem:[%s3 + $0xc] sm:$0xf]
      %v2619 = vld [vmem:[%s3 + $0x10] sm:$0xf]
      %v2620 = vld [vmem:[%s3 + $0x14] sm:$0xf]
      %v2621 = vld [vmem:[%s4] sm:$0x1]
      %v2623 = vlaneseq
      %v2624 = vshrl.u32 %v2623, 7
      %v2625 = vsub.s32 0, %v2624
      %v2626 = vrot.slane %v2621, %v2625
      %v2634 = vunpack.c.l.b16 %v2615
      %v2635 = vunpack.c.l.b16 %v2616
      %v2636 = vunpack.c.l.b16 %v2617
      %v2637 = vunpack.c.l.b16 %v2618
      %v2638 = vunpack.c.l.b16 %v2619
      %v2639 = vunpack.c.l.b16 %v2620
      %v2640 = vpack.c.b16 %v2635, %v2634
      %v2641 = vpack.c.b16 %v2637, %v2636
      %v2642 = vpack.c.b16 %v2639, %v2638
      %vm2646 = vcmask 392192
      %v2648 = vsel %vm2646, %v2614, 0
      %2650 = vmatprep.subr.bf16.mxu0 0
      %2651 = vmatpush1.bf16.msra.mxu0 0
      %2652 = vmatprep.subr.bf16.mxu0 0
      %2653 = vmatpush1.bf16.msra.mxu0 0
      %2654 = vmatprep.subr.bf16.mxu0 0
      %2655 = vmatpush1.bf16.msra.mxu0 0
      %2656 = vmatprep.subr.bf16.mxu0 0
      %2657 = vmatpush1.bf16.msra.mxu0 0
      %2658 = vmatprep.subr.bf16.mxu0 0
      %2659 = vmatpush1.bf16.msra.mxu0 0
      %2660 = vmatprep.subr.bf16.mxu0 0
      %2661 = vmatpush1.bf16.msra.mxu0 %v2642
      %2662 = vmatprep.subr.bf16.mxu0 0
      %2663 = vmatpush1.bf16.msra.mxu0 %v2641
      %2664 = vmatprep.subr.bf16.mxu0 0
      %2665 = vmatpush1.bf16.msra.mxu0 %v2640
      %2666 = vmatprep.subr.bf16.mxu0 0
      %2667 = vmatpush2.bf16.msra.mxu0 0
      %2668 = vmatprep.subr.bf16.mxu0 0
      %2669 = vmatpush2.bf16.msra.mxu0 0
      %2670 = vmatprep.subr.bf16.mxu0 0
      %2671 = vmatpush2.bf16.msra.mxu0 0
      %2672 = vmatprep.subr.bf16.mxu0 0
      %2673 = vmatpush2.bf16.msra.mxu0 0
      %2674 = vmatprep.subr.bf16.mxu0 0
      %2675 = vmatpush2.bf16.msra.mxu0 0
      %2676 = vmatprep.subr.bf16.mxu0 0
      %2677 = vmatpush2.bf16.msra.mxu0 0
      %2678 = vmatprep.subr.bf16.mxu0 0
      %2679 = vmatpush2.bf16.msra.mxu0 0
      %2680 = vmatprep.subr.bf16.mxu0 0
      %2681 = vmatpush2.bf16.msra.mxu0 0
      %2682 = vmatprep.mubr.bf16.mxu0 0
      %2683 = vmatmul.mubr.bf16.gmra.mxu0 %v2648
      %v2684 = vpop.f32.mrf.mxu0
      %v2685 = vadd.f32 %v2626, %v2684
      %v2686 = vpop.f32.mrf.mxu0
      %v2687 = vpop.f32.mrf.mxu0
      %v2688 = vadd.f32 %v2626, %v2687
      %v2689 = vpop.f32.mrf.mxu0
      %2690 = vdwg.mxu0
      %2691 = vst [vmem:[%s229] sm:$0xff] %v2685
      %2692 = vst [vmem:[%s229 + $0x8] sm:$0xff] %v2688
      %s2693 = smul.u32 2, %s16
      %p2694 = scmp.lt.s32.totalorder %s2693, 5
      %s2695 = scalar_select %p2694, %s2693, 5
      %s2696 = smul.addr %s2695, 8
      %s2697 = scalar_lea.vmem %s5, %s2696
      // Predicated region
      $region41: #{_cnn1d_forward_impl.1} parent=39 // pred_check
        %p2698 = pneg %p144
      $region42: #{_cnn1d_forward_impl.1} parent=39 // pred_check_branch
        %2700 = sbr.rel (%p2698) target = $region44
      $region43: #{_cnn1d_forward_impl.1} parent=39 // pred_region
        %s2701 = smul.u32 2, %s16
      $region44: #{_cnn1d_forward_impl.1} parent=39 // pred_fallthru
        _
    $region40: #{_cnn1d_forward_impl.1} parent=5 // pred_fallthru
      _
    %p2702 = scmp.le.s32.totalorder 2, %s11
    // Predicated region
    $region45: #{_cnn1d_forward_impl.1} parent=5 // pred_check
      %p2703 = pneg %p2702
    $region46: #{_cnn1d_forward_impl.1} parent=5 // pred_check_branch
      %2705 = sbr.rel (%p2703) target = $region48
    $region47: #{_cnn1d_forward_impl.1} parent=5 // pred_region
      %s2706 = ssub.s32 %s11, 2
      // Predicated region
      $region49: #{_cnn1d_forward_impl.1} parent=47 // pred_check
        %p2707 = pneg %p150
      $region50: #{_cnn1d_forward_impl.1} parent=47 // pred_check_branch
        %2709 = sbr.rel (%p2707) target = $region52
      $region51: #{_cnn1d_forward_impl.1} parent=47 // pred_region
        %s2710 = smul.u32 2, %s17
        %p2711 = scmp.lt.s32.totalorder %s2710, 5
        %s2712 = scalar_select %p2711, %s2710, 5
        %s2713 = smul.addr %s2712, 8
        %s2714 = scalar_lea.vmem %s5, %s2713
      $region52: #{_cnn1d_forward_impl.1} parent=47 // pred_fallthru
        _
    $region48: #{_cnn1d_forward_impl.1} parent=5 // pred_fallthru
      _
  $region6: #{_cnn1d_forward_impl.1} parent=0 // loop_footer
    %s15 = sadd.s32 1, %s11
  $region7: #{_cnn1d_forward_impl.1} parent=0 // loop_footer_branch
    %10 = sbr.rel target = $region3
  $region8: #{_cnn1d_forward_impl.1} parent=0 // loop_exit
    _

</llo_original>
